<compile_context>
chip_gen: v7x
topology: tpu7x:2x2x1
jax: 0.10.0
libtpu: 0.0.40
codegen_flags: <defaults>
</compile_context>

<pallas_src>
import numpy as np
import jax
import jax.numpy as jnp
from jax.experimental import pallas as pl
from jax.experimental.pallas import tpu as pltpu

# ----------------------------- configuration --------------------------------
B = 16             # batch (batched per review; still a small demo size)
BT = 8             # batch tile per grid step (sublane-aligned output block)
CIN = 4            # input_dim (one-hot nucleotide channels)
L = 64             # input sequence length
K = 5              # filter_length1 (odd -> 'same' padding)
PAD = (K - 1) // 2
HID = 32           # hidden (Parnet output channels)
POOL = 4           # pooling_size
LP = L // POOL     # pooled length (x_mask is given at this resolution)
PL = POOL * LP     # rows per sequence in the im2col matrix (= L)
ATT_DIM = 16       # dim_attention
R = 4              # headnum
FC_DIM = 32        # fc_dim
NB_CLASSES = 9     # nb_classes
SHARP_BETA = 1.0
NEURONS = HID * R  # int(headnum * hidden * 3 * cnn_scaler / 3) with cnn_scaler=1
KC = K * CIN       # raw im2col contraction dim (20)
KCP = 32           # lane-padded contraction dim (zero rows in the weights)
N_TILES = B // BT

# Static im2col gather indices (built once with numpy, constants under jit).
# Row r = p*LP + lp of a sequence corresponds to original conv position
# l = lp*POOL + p, so MaxPool1d(POOL, POOL) becomes a max over the POOL
# contiguous row blocks of each sequence inside the kernel.
_r = np.arange(PL)
_l = (_r % LP) * POOL + (_r // LP)                         # (PL,)
_j = np.arange(KCP)
_PIDX = np.where(_j[None, :] < KC, _l[:, None] + _j[None, :] // CIN, 0).astype(np.int32)
_CIDX = np.where(_j[None, :] < KC, _j[None, :] % CIN, 0).astype(np.int32)   # (1, KCP)

# Advisory cost estimate for XLA scheduling around the custom call.
_FLOPS = 2 * B * (PL * KCP * HID + LP * HID * ATT_DIM + LP * ATT_DIM * R
                  + LP * R * HID + NEURONS * FC_DIM + FC_DIM * NB_CLASSES)
_TRANS = B * (LP * ATT_DIM + LP * R + NB_CLASSES)
_BYTES = (B * PL * KCP * 2 + B * LP * 4 + B * NB_CLASSES * 4
          + KCP * HID * 2 + HID * 4 + HID * ATT_DIM * 4 + ATT_DIM * R * 4
          + NEURONS * FC_DIM * 4 + FC_DIM * 4 + FC_DIM * NB_CLASSES * 4
          + NB_CLASSES * 4)


# ------------------------------ fused kernel ---------------------------------
def dm3loc_kernel(cols_ref, cw_ref, cb_ref, m_ref, w1_ref, w2_ref,
                  f1w_ref, f1b_ref, f2w_ref, f2b_ref, out_ref):
    """Conv1d(im2col) + ReLU + MaxPool + mask + multi-head attention + FC
    for one batch tile of BT sequences."""
    # --- Parnet_block2 stand-in: Conv1d as ONE bf16 matmul, bias, ReLU. -----
    conv = jnp.dot(cols_ref[...], cw_ref[...],
                   preferred_element_type=jnp.float32)         # (BT*PL, HID)
    conv = jnp.maximum(conv + cb_ref[...], 0.0)

    # MaxPool1d(POOL, POOL): rows are ordered (batch, pool_phase, pooled_pos),
    # so pooling is an elementwise max over the POOL leading-dim slabs.
    conv4 = conv.reshape(BT, POOL, LP, HID)
    pooled = conv4[:, 0]
    for p in range(1, POOL):
        pooled = jnp.maximum(pooled, conv4[:, p])              # (BT, LP, HID)
    # dropout1 is identity in eval mode.

    m = m_ref[...]                                             # (BT, LP, 1)
    hm = pooled * m                                            # parnet_output * x_mask

    # --- Attention energies (whole tile at once, weights pre-transposed). ---
    hm2 = hm.reshape(BT * LP, HID)
    e = jnp.tanh(jnp.dot(hm2, w1_ref[...],
                         preferred_element_type=jnp.float32))  # (BT*LP, ATT)
    e = jnp.dot(e, w2_ref[...],
                preferred_element_type=jnp.float32)            # (BT*LP, R)
    if SHARP_BETA != 1.0:
        e = e * SHARP_BETA
    e3 = e.reshape(BT, LP, R)

    # --- Masked softmax over length, vectorized across the batch tile. ------
    # Fully-masked sequences would yield an all-zero attention vector (not
    # NaN); every test sequence has >= 1 unmasked pooled position.
    neg = jnp.where(m > 0.0, e3, -1e9)
    emax = jnp.max(neg, axis=1, keepdims=True)                 # (BT, 1, R)
    pexp = jnp.where(m > 0.0, jnp.exp(neg - emax), 0.0)
    denom = jnp.sum(pexp, axis=1, keepdims=True) + 1e-9        # (BT, 1, R)
    a = pexp / denom                                           # exact divide (parity)

    # --- Attention pooling as ONE batched MXU contraction. ------------------
    # att[b, r, h] = sum_l a[b, l, r] * hm[b, l, h]
    att = jnp.einsum('blr,blh->brh', a, hm,
                     preferred_element_type=jnp.float32)       # (BT, R, HID)

    # --- FC_block: fc1 (head-blocked accumulation) -> ReLU -> fc2 -> Sigmoid.
    # fc1 weight rows are pre-permuted head-major in the wrapper so each head's
    # (HID, FC_DIM) slab is contiguous; no flatten / scatter stores needed.
    h1 = f1b_ref[...]                                          # (1, FC_DIM)
    for r in range(R):
        h1 = h1 + jnp.dot(att[:, r], f1w_ref[r * HID:(r + 1) * HID, :],
                          preferred_element_type=jnp.float32)  # (BT, FC_DIM)
    h1 = jnp.maximum(h1, 0.0)                                  # Actvation('relu')
    # dropout2 is identity in eval mode.
    o = jnp.dot(h1, f2w_ref[...],
                preferred_element_type=jnp.float32) + f2b_ref[...]
    out_ref[...] = jax.nn.sigmoid(o)


# ------------------------------- wrappers ------------------------------------
def prepare_params(params):
    """One-time weight prep (pre-transpose / pre-permute / pad / cast) so the
    per-call jitted graph and the kernel never transpose anything."""
    conv_w = params["conv_w"].reshape(KC, HID)                 # rows j = k*CIN + c
    conv_w = jnp.pad(conv_w, ((0, KCP - KC), (0, 0))).astype(jnp.bfloat16)
    # torch flattens (B, hidden, headnum) -> column n = h*R + r; the kernel
    # consumes head-major contiguous slabs, so permute fc1 rows accordingly.
    fc1_wp = params["fc1_w"].T.reshape(HID, R, FC_DIM).transpose(1, 0, 2)
    fc1_wp = fc1_wp.reshape(NEURONS, FC_DIM)
    return dict(
        conv_w=conv_w,                                         # (KCP, HID) bf16
        conv_b=params["conv_b"].astype(jnp.float32),           # (1, HID)
        att_w1=params["att_w1"].T.astype(jnp.float32),         # (HID, ATT_DIM)
        att_w2=params["att_w2"].T.astype(jnp.float32),         # (ATT_DIM, R)
        fc1_w=fc1_wp.astype(jnp.float32),                      # (NEURONS, FC_DIM)
        fc1_b=params["fc1_b"].astype(jnp.float32),             # (1, FC_DIM)
        fc2_w=params["fc2_w"].T.astype(jnp.float32),           # (FC_DIM, NB_CLASSES)
        fc2_b=params["fc2_b"].astype(jnp.float32),             # (1, NB_CLASSES)
    )


@jax.jit
def dm3loc_forward(x, x_mask, prep):
    """x: (B, CIN, L) float32 (att=True -> embedding_output = x).
       x_mask: (B, LP) float mask at pooled resolution (as Att1 requires)."""
    # im2col collapsed to pad + ONE static gather + reshape (lane-padded to KCP;
    # padded position 0 is a zero so the extra lanes gather zeros).
    x_p = jnp.pad(x, ((0, 0), (0, 0), (PAD, PAD)))             # (B, CIN, L+K-1)
    cols = x_p[:, _CIDX, _PIDX]                                # (B, PL, KCP)
    cols = cols.reshape(B * PL, KCP).astype(jnp.bfloat16)
    m = x_mask.astype(jnp.float32).reshape(B, LP, 1)

    return pl.pallas_call(
        dm3loc_kernel,
        out_shape=jax.ShapeDtypeStruct((B, NB_CLASSES), jnp.float32),
        grid_spec=pltpu.PrefetchScalarGridSpec(
            num_scalar_prefetch=0,
            grid=(N_TILES,),
            in_specs=[
                pl.BlockSpec((BT * PL, KCP), lambda i: (i, 0)),      # im2col tile
                pl.BlockSpec((KCP, HID), lambda i: (0, 0)),          # conv_w
                pl.BlockSpec((1, HID), lambda i: (0, 0)),            # conv_b
                pl.BlockSpec((BT, LP, 1), lambda i: (i, 0, 0)),      # mask tile
                pl.BlockSpec((HID, ATT_DIM), lambda i: (0, 0)),      # att W1^T
                pl.BlockSpec((ATT_DIM, R), lambda i: (0, 0)),        # att W2^T
                pl.BlockSpec((NEURONS, FC_DIM), lambda i: (0, 0)),   # fc1 (permuted)
                pl.BlockSpec((1, FC_DIM), lambda i: (0, 0)),         # fc1 bias
                pl.BlockSpec((FC_DIM, NB_CLASSES), lambda i: (0, 0)),# fc2^T
                pl.BlockSpec((1, NB_CLASSES), lambda i: (0, 0)),     # fc2 bias
            ],
            out_specs=pl.BlockSpec((BT, NB_CLASSES), lambda i: (i, 0)),
        ),
        compiler_params=pltpu.CompilerParams(
            dimension_semantics=("parallel",),      # batch tiles split across TCs (v7x)
            vmem_limit_bytes=32 * 1024 * 1024,      # safe on v5e/v6e/v7x; usage is tiny
        ),
        cost_estimate=pl.CostEstimate(
            flops=_FLOPS, transcendentals=_TRANS, bytes_accessed=_BYTES),
    )(cols, prep["conv_w"], prep["conv_b"], m, prep["att_w1"], prep["att_w2"],
      prep["fc1_w"], prep["fc1_b"], prep["fc2_w"], prep["fc2_b"])


# --------------------------------- main ---------------------------------------
if __name__ == "__main__":
    key = jax.random.PRNGKey(0)
    keys = jax.random.split(key, 8)

    # Deterministic synthetic parameters (shapes follow the module __init__).
    params = {
        "conv_w": 0.1 * jax.random.normal(keys[0], (K, CIN, HID), jnp.float32),
        "conv_b": 0.01 * jax.random.normal(keys[1], (1, HID), jnp.float32),
        "att_w1": 0.1 * jax.random.normal(keys[2], (ATT_DIM, HID), jnp.float32),
        "att_w2": 0.1 * jax.random.normal(keys[3], (R, ATT_DIM), jnp.float32),
        "fc1_w": 0.1 * jax.random.normal(keys[4], (FC_DIM, NEURONS), jnp.float32),
        "fc1_b": jnp.zeros((1, FC_DIM), jnp.float32),
        "fc2_w": 0.1 * jax.random.normal(keys[5], (NB_CLASSES, FC_DIM), jnp.float32),
        "fc2_b": jnp.zeros((1, NB_CLASSES), jnp.float32),
    }
    prepared = prepare_params(params)

    # Inputs: one-hot nucleotide sequence in NCW layout + pooled-length mask.
    tok = jax.random.randint(keys[6], (B, L), 0, CIN)
    x = jnp.transpose(jax.nn.one_hot(tok, CIN, dtype=jnp.float32), (0, 2, 1))
    lens = 1 + (jnp.arange(B) * 5) % LP                        # >= 1 unmasked position
    x_mask = (jnp.arange(LP)[None, :] < lens[:, None]).astype(jnp.float32)

    pred = dm3loc_forward(x, x_mask, prepared)
    pred = jax.block_until_ready(pred)
    assert pred.shape == (B, NB_CLASSES)
    assert bool(jnp.all(jnp.isfinite(pred)))
    assert bool(jnp.all((pred >= 0.0) & (pred <= 1.0)))
    print("KERNEL_OK")
</pallas_src>

<mosaic_0001>
module attributes {stable_mosaic.version = 11 : i64} {
  func.func @dm3loc_kernel(%arg0: i32, %arg1: memref<512x32xbf16, #tpu.memory_space<vmem>>, %arg2: memref<32x32xbf16, #tpu.memory_space<vmem>>, %arg3: memref<1x32xf32, #tpu.memory_space<vmem>>, %arg4: memref<8x16x1xf32, #tpu.memory_space<vmem>>, %arg5: memref<32x16xf32, #tpu.memory_space<vmem>>, %arg6: memref<16x4xf32, #tpu.memory_space<vmem>>, %arg7: memref<128x32xf32, #tpu.memory_space<vmem>>, %arg8: memref<1x32xf32, #tpu.memory_space<vmem>>, %arg9: memref<32x9xf32, #tpu.memory_space<vmem>>, %arg10: memref<1x9xf32, #tpu.memory_space<vmem>>, %arg11: memref<8x9xf32, #tpu.memory_space<vmem>>) attributes {dimension_semantics = [#tpu.dimension_semantics<parallel>], iteration_bounds = array<i64: 2>, scalar_prefetch = 0 : i64, scratch_operands = 0 : i64, tpu.core_type = #tpu.core_type<tc>, window_params = [{transform_indices = @transform_0, window_bounds = array<i64: 512, 32>}, {pipeline_mode = #tpu.pipeline_mode<synchronous>, transform_indices = @transform_1, window_bounds = array<i64: 32, 32>}, {pipeline_mode = #tpu.pipeline_mode<synchronous>, transform_indices = @transform_2, window_bounds = array<i64: 1, 32>}, {transform_indices = @transform_3, window_bounds = array<i64: 8, 16, 1>}, {pipeline_mode = #tpu.pipeline_mode<synchronous>, transform_indices = @transform_4, window_bounds = array<i64: 32, 16>}, {pipeline_mode = #tpu.pipeline_mode<synchronous>, transform_indices = @transform_5, window_bounds = array<i64: 16, 4>}, {pipeline_mode = #tpu.pipeline_mode<synchronous>, transform_indices = @transform_6, window_bounds = array<i64: 128, 32>}, {pipeline_mode = #tpu.pipeline_mode<synchronous>, transform_indices = @transform_7, window_bounds = array<i64: 1, 32>}, {pipeline_mode = #tpu.pipeline_mode<synchronous>, transform_indices = @transform_8, window_bounds = array<i64: 32, 9>}, {pipeline_mode = #tpu.pipeline_mode<synchronous>, transform_indices = @transform_9, window_bounds = array<i64: 1, 9>}, {transform_indices = @transform_10, window_bounds = array<i64: 8, 9>}]} {
    %c0 = arith.constant 0 : index
    %c0_0 = arith.constant 0 : index
    %0 = vector.load %arg1[%c0, %c0_0] : memref<512x32xbf16, #tpu.memory_space<vmem>>, vector<512x32xbf16>
    %c0_1 = arith.constant 0 : index
    %c0_2 = arith.constant 0 : index
    %1 = vector.load %arg2[%c0_1, %c0_2] : memref<32x32xbf16, #tpu.memory_space<vmem>>, vector<32x32xbf16>
    %cst = arith.constant dense<0.000000e+00> : vector<512x32xf32>
    %2 = tpu.matmul %0, %1, %cst {dimension_numbers = #tpu.dot_dimension_numbers<[1], [0], [0], [1], [0, 0, 1, 1], [], []>} : vector<512x32xbf16>, vector<32x32xbf16>, vector<512x32xf32> -> vector<512x32xf32>
    %c0_3 = arith.constant 0 : index
    %c0_4 = arith.constant 0 : index
    %3 = vector.load %arg3[%c0_3, %c0_4] : memref<1x32xf32, #tpu.memory_space<vmem>>, vector<1x32xf32>
    %4 = vector.broadcast %3 : vector<1x32xf32> to vector<512x32xf32>
    %5 = arith.addf %2, %4 : vector<512x32xf32>
    %cst_5 = arith.constant 0.000000e+00 : f32
    %6 = vector.broadcast %cst_5 : f32 to vector<512x32xf32>
    %7 = arith.maximumf %5, %6 : vector<512x32xf32>
    %8 = vector.shape_cast %7 : vector<512x32xf32> to vector<8x4x16x32xf32>
    %9 = vector.extract_strided_slice %8 {offsets = [0, 0, 0, 0], sizes = [8, 1, 16, 32], strides = [1, 1, 1, 1]} : vector<8x4x16x32xf32> to vector<8x1x16x32xf32>
    %10 = vector.shape_cast %9 : vector<8x1x16x32xf32> to vector<8x16x32xf32>
    %11 = vector.extract_strided_slice %8 {offsets = [0, 1, 0, 0], sizes = [8, 1, 16, 32], strides = [1, 1, 1, 1]} : vector<8x4x16x32xf32> to vector<8x1x16x32xf32>
    %12 = vector.shape_cast %11 : vector<8x1x16x32xf32> to vector<8x16x32xf32>
    %13 = arith.maximumf %10, %12 : vector<8x16x32xf32>
    %14 = vector.extract_strided_slice %8 {offsets = [0, 2, 0, 0], sizes = [8, 1, 16, 32], strides = [1, 1, 1, 1]} : vector<8x4x16x32xf32> to vector<8x1x16x32xf32>
    %15 = vector.shape_cast %14 : vector<8x1x16x32xf32> to vector<8x16x32xf32>
    %16 = arith.maximumf %13, %15 : vector<8x16x32xf32>
    %17 = vector.extract_strided_slice %8 {offsets = [0, 3, 0, 0], sizes = [8, 1, 16, 32], strides = [1, 1, 1, 1]} : vector<8x4x16x32xf32> to vector<8x1x16x32xf32>
    %18 = vector.shape_cast %17 : vector<8x1x16x32xf32> to vector<8x16x32xf32>
    %19 = arith.maximumf %16, %18 : vector<8x16x32xf32>
    %c0_6 = arith.constant 0 : index
    %c0_7 = arith.constant 0 : index
    %c0_8 = arith.constant 0 : index
    %20 = vector.load %arg4[%c0_6, %c0_7, %c0_8] : memref<8x16x1xf32, #tpu.memory_space<vmem>>, vector<8x16x1xf32>
    %21 = vector.broadcast %20 : vector<8x16x1xf32> to vector<8x16x32xf32>
    %22 = arith.mulf %19, %21 : vector<8x16x32xf32>
    %23 = vector.shape_cast %22 : vector<8x16x32xf32> to vector<128x32xf32>
    %c0_9 = arith.constant 0 : index
    %c0_10 = arith.constant 0 : index
    %24 = vector.load %arg5[%c0_9, %c0_10] : memref<32x16xf32, #tpu.memory_space<vmem>>, vector<32x16xf32>
    %cst_11 = arith.constant dense<0.000000e+00> : vector<128x16xf32>
    %25 = tpu.matmul %23, %24, %cst_11 {dimension_numbers = #tpu.dot_dimension_numbers<[1], [0], [0], [1], [0, 0, 1, 1], [], []>} : vector<128x32xf32>, vector<32x16xf32>, vector<128x16xf32> -> vector<128x16xf32>
    %26 = math.tanh %25 : vector<128x16xf32>
    %c0_12 = arith.constant 0 : index
    %c0_13 = arith.constant 0 : index
    %27 = vector.load %arg6[%c0_12, %c0_13] : memref<16x4xf32, #tpu.memory_space<vmem>>, vector<16x4xf32>
    %cst_14 = arith.constant dense<0.000000e+00> : vector<128x4xf32>
    %28 = tpu.matmul %26, %27, %cst_14 {dimension_numbers = #tpu.dot_dimension_numbers<[1], [0], [0], [1], [0, 0, 1, 1], [], []>} : vector<128x16xf32>, vector<16x4xf32>, vector<128x4xf32> -> vector<128x4xf32>
    %29 = vector.shape_cast %28 : vector<128x4xf32> to vector<8x16x4xf32>
    %cst_15 = arith.constant 0.000000e+00 : f32
    %30 = vector.broadcast %cst_15 : f32 to vector<8x16x1xf32>
    %31 = arith.cmpf ogt, %20, %30 : vector<8x16x1xf32>
    %cst_16 = arith.constant -1.000000e+09 : f32
    %32 = vector.shape_cast %31 : vector<8x16x1xi1> to vector<8x16x1xi1>
    %33 = vector.broadcast %32 : vector<8x16x1xi1> to vector<8x16x4xi1>
    %34 = vector.broadcast %cst_16 : f32 to vector<8x16x4xf32>
    %35 = arith.select %33, %29, %34 : vector<8x16x4xi1>, vector<8x16x4xf32>
    %cst_17 = arith.constant dense<0xFF800000> : vector<8x4xf32>
    %36 = vector.multi_reduction <maximumf>, %35, %cst_17 [1] : vector<8x16x4xf32> to vector<8x4xf32>
    %37 = vector.shape_cast %36 : vector<8x4xf32> to vector<8x1x4xf32>
    %cst_18 = arith.constant 0.000000e+00 : f32
    %38 = vector.broadcast %cst_18 : f32 to vector<8x16x1xf32>
    %39 = arith.cmpf ogt, %20, %38 : vector<8x16x1xf32>
    %40 = vector.broadcast %37 : vector<8x1x4xf32> to vector<8x16x4xf32>
    %41 = arith.subf %35, %40 : vector<8x16x4xf32>
    %42 = math.exp %41 : vector<8x16x4xf32>
    %cst_19 = arith.constant 0.000000e+00 : f32
    %43 = vector.shape_cast %39 : vector<8x16x1xi1> to vector<8x16x1xi1>
    %44 = vector.broadcast %43 : vector<8x16x1xi1> to vector<8x16x4xi1>
    %45 = vector.broadcast %cst_19 : f32 to vector<8x16x4xf32>
    %46 = arith.select %44, %42, %45 : vector<8x16x4xi1>, vector<8x16x4xf32>
    %cst_20 = arith.constant dense<0.000000e+00> : vector<8x4xf32>
    %47 = vector.multi_reduction <add>, %46, %cst_20 [1] : vector<8x16x4xf32> to vector<8x4xf32>
    %48 = vector.shape_cast %47 : vector<8x4xf32> to vector<8x1x4xf32>
    %cst_21 = arith.constant 9.99999971E-10 : f32
    %49 = vector.broadcast %cst_21 : f32 to vector<8x1x4xf32>
    %50 = arith.addf %48, %49 : vector<8x1x4xf32>
    %51 = vector.broadcast %50 : vector<8x1x4xf32> to vector<8x16x4xf32>
    %52 = arith.divf %46, %51 : vector<8x16x4xf32>
    "tpu.trace_start"() <{level = 10 : i32, message = "blr,blh->brh"}> : () -> ()
    %cst_22 = arith.constant dense<0.000000e+00> : vector<8x4x32xf32>
    %53 = tpu.matmul %52, %22, %cst_22 {dimension_numbers = #tpu.dot_dimension_numbers<[1], [1], [2], [2], [0, 0, 0, 2, 1, 2], [0], [0]>} : vector<8x16x4xf32>, vector<8x16x32xf32>, vector<8x4x32xf32> -> vector<8x4x32xf32>
    "tpu.trace_stop"() : () -> ()
    %c0_23 = arith.constant 0 : index
    %c0_24 = arith.constant 0 : index
    %54 = vector.load %arg8[%c0_23, %c0_24] : memref<1x32xf32, #tpu.memory_space<vmem>>, vector<1x32xf32>
    %55 = vector.extract_strided_slice %53 {offsets = [0, 0, 0], sizes = [8, 1, 32], strides = [1, 1, 1]} : vector<8x4x32xf32> to vector<8x1x32xf32>
    %56 = vector.shape_cast %55 : vector<8x1x32xf32> to vector<8x32xf32>
    %c0_25 = arith.constant 0 : index
    %c0_26 = arith.constant 0 : index
    %57 = vector.load %arg7[%c0_25, %c0_26] : memref<128x32xf32, #tpu.memory_space<vmem>>, vector<32x32xf32>
    %cst_27 = arith.constant dense<0.000000e+00> : vector<8x32xf32>
    %58 = tpu.matmul %56, %57, %cst_27 {dimension_numbers = #tpu.dot_dimension_numbers<[1], [0], [0], [1], [0, 0, 1, 1], [], []>} : vector<8x32xf32>, vector<32x32xf32>, vector<8x32xf32> -> vector<8x32xf32>
    %59 = vector.broadcast %54 : vector<1x32xf32> to vector<8x32xf32>
    %60 = arith.addf %59, %58 : vector<8x32xf32>
    %61 = vector.extract_strided_slice %53 {offsets = [0, 1, 0], sizes = [8, 1, 32], strides = [1, 1, 1]} : vector<8x4x32xf32> to vector<8x1x32xf32>
    %62 = vector.shape_cast %61 : vector<8x1x32xf32> to vector<8x32xf32>
    %c32 = arith.constant 32 : index
    %c0_28 = arith.constant 0 : index
    %63 = vector.load %arg7[%c32, %c0_28] : memref<128x32xf32, #tpu.memory_space<vmem>>, vector<32x32xf32>
    %cst_29 = arith.constant dense<0.000000e+00> : vector<8x32xf32>
    %64 = tpu.matmul %62, %63, %cst_29 {dimension_numbers = #tpu.dot_dimension_numbers<[1], [0], [0], [1], [0, 0, 1, 1], [], []>} : vector<8x32xf32>, vector<32x32xf32>, vector<8x32xf32> -> vector<8x32xf32>
    %65 = arith.addf %60, %64 : vector<8x32xf32>
    %66 = vector.extract_strided_slice %53 {offsets = [0, 2, 0], sizes = [8, 1, 32], strides = [1, 1, 1]} : vector<8x4x32xf32> to vector<8x1x32xf32>
    %67 = vector.shape_cast %66 : vector<8x1x32xf32> to vector<8x32xf32>
    %c64 = arith.constant 64 : index
    %c0_30 = arith.constant 0 : index
    %68 = vector.load %arg7[%c64, %c0_30] : memref<128x32xf32, #tpu.memory_space<vmem>>, vector<32x32xf32>
    %cst_31 = arith.constant dense<0.000000e+00> : vector<8x32xf32>
    %69 = tpu.matmul %67, %68, %cst_31 {dimension_numbers = #tpu.dot_dimension_numbers<[1], [0], [0], [1], [0, 0, 1, 1], [], []>} : vector<8x32xf32>, vector<32x32xf32>, vector<8x32xf32> -> vector<8x32xf32>
    %70 = arith.addf %65, %69 : vector<8x32xf32>
    %71 = vector.extract_strided_slice %53 {offsets = [0, 3, 0], sizes = [8, 1, 32], strides = [1, 1, 1]} : vector<8x4x32xf32> to vector<8x1x32xf32>
    %72 = vector.shape_cast %71 : vector<8x1x32xf32> to vector<8x32xf32>
    %c96 = arith.constant 96 : index
    %c0_32 = arith.constant 0 : index
    %73 = vector.load %arg7[%c96, %c0_32] : memref<128x32xf32, #tpu.memory_space<vmem>>, vector<32x32xf32>
    %cst_33 = arith.constant dense<0.000000e+00> : vector<8x32xf32>
    %74 = tpu.matmul %72, %73, %cst_33 {dimension_numbers = #tpu.dot_dimension_numbers<[1], [0], [0], [1], [0, 0, 1, 1], [], []>} : vector<8x32xf32>, vector<32x32xf32>, vector<8x32xf32> -> vector<8x32xf32>
    %75 = arith.addf %70, %74 : vector<8x32xf32>
    %cst_34 = arith.constant 0.000000e+00 : f32
    %76 = vector.broadcast %cst_34 : f32 to vector<8x32xf32>
    %77 = arith.maximumf %75, %76 : vector<8x32xf32>
    %c0_35 = arith.constant 0 : index
    %c0_36 = arith.constant 0 : index
    %78 = vector.load %arg9[%c0_35, %c0_36] : memref<32x9xf32, #tpu.memory_space<vmem>>, vector<32x9xf32>
    %cst_37 = arith.constant dense<0.000000e+00> : vector<8x9xf32>
    %79 = tpu.matmul %77, %78, %cst_37 {dimension_numbers = #tpu.dot_dimension_numbers<[1], [0], [0], [1], [0, 0, 1, 1], [], []>} : vector<8x32xf32>, vector<32x9xf32>, vector<8x9xf32> -> vector<8x9xf32>
    %c0_38 = arith.constant 0 : index
    %c0_39 = arith.constant 0 : index
    %80 = vector.load %arg10[%c0_38, %c0_39] : memref<1x9xf32, #tpu.memory_space<vmem>>, vector<1x9xf32>
    %81 = vector.broadcast %80 : vector<1x9xf32> to vector<8x9xf32>
    %82 = arith.addf %79, %81 : vector<8x9xf32>
    %83 = arith.negf %82 : vector<8x9xf32>
    %84 = math.exp %83 : vector<8x9xf32>
    %cst_40 = arith.constant 1.000000e+00 : f32
    %85 = vector.broadcast %cst_40 : f32 to vector<8x9xf32>
    %86 = arith.addf %85, %84 : vector<8x9xf32>
    %87 = arith.divf %85, %86 : vector<8x9xf32>
    %c0_41 = arith.constant 0 : index
    %c0_42 = arith.constant 0 : index
    %88 = vector.load %arg11[%c0_41, %c0_42] : memref<8x9xf32, #tpu.memory_space<vmem>>, vector<8x9xf32>
    tpu.vector_store %arg11[%c0_41, %c0_42], %87 {strides = array<i32>} : memref<8x9xf32, #tpu.memory_space<vmem>>, vector<8x9xf32>,
    return
  }
  func.func @transform_0(%arg0: i32) -> (i32, i32) {
    %c0_i32 = arith.constant 0 : i32
    %c0_i32_0 = arith.constant 0 : i32
    return %arg0, %c0_i32 : i32, i32
  }
  func.func @transform_1(%arg0: i32) -> (i32, i32) {
    %c0_i32 = arith.constant 0 : i32
    %c0_i32_0 = arith.constant 0 : i32
    %c0_i32_1 = arith.constant 0 : i32
    return %c0_i32, %c0_i32_0 : i32, i32
  }
  func.func @transform_2(%arg0: i32) -> (i32, i32) {
    %c0_i32 = arith.constant 0 : i32
    %c0_i32_0 = arith.constant 0 : i32
    %c0_i32_1 = arith.constant 0 : i32
    return %c0_i32, %c0_i32_0 : i32, i32
  }
  func.func @transform_3(%arg0: i32) -> (i32, i32, i32) {
    %c0_i32 = arith.constant 0 : i32
    %c0_i32_0 = arith.constant 0 : i32
    %c0_i32_1 = arith.constant 0 : i32
    return %arg0, %c0_i32, %c0_i32_0 : i32, i32, i32
  }
  func.func @transform_4(%arg0: i32) -> (i32, i32) {
    %c0_i32 = arith.constant 0 : i32
    %c0_i32_0 = arith.constant 0 : i32
    %c0_i32_1 = arith.constant 0 : i32
    return %c0_i32, %c0_i32_0 : i32, i32
  }
  func.func @transform_5(%arg0: i32) -> (i32, i32) {
    %c0_i32 = arith.constant 0 : i32
    %c0_i32_0 = arith.constant 0 : i32
    %c0_i32_1 = arith.constant 0 : i32
    return %c0_i32, %c0_i32_0 : i32, i32
  }
  func.func @transform_6(%arg0: i32) -> (i32, i32) {
    %c0_i32 = arith.constant 0 : i32
    %c0_i32_0 = arith.constant 0 : i32
    %c0_i32_1 = arith.constant 0 : i32
    return %c0_i32, %c0_i32_0 : i32, i32
  }
  func.func @transform_7(%arg0: i32) -> (i32, i32) {
    %c0_i32 = arith.constant 0 : i32
    %c0_i32_0 = arith.constant 0 : i32
    %c0_i32_1 = arith.constant 0 : i32
    return %c0_i32, %c0_i32_0 : i32, i32
  }
  func.func @transform_8(%arg0: i32) -> (i32, i32) {
    %c0_i32 = arith.constant 0 : i32
    %c0_i32_0 = arith.constant 0 : i32
    %c0_i32_1 = arith.constant 0 : i32
    return %c0_i32, %c0_i32_0 : i32, i32
  }
  func.func @transform_9(%arg0: i32) -> (i32, i32) {
    %c0_i32 = arith.constant 0 : i32
    %c0_i32_0 = arith.constant 0 : i32
    %c0_i32_1 = arith.constant 0 : i32
    return %c0_i32, %c0_i32_0 : i32, i32
  }
  func.func @transform_10(%arg0: i32) -> (i32, i32) {
    %c0_i32 = arith.constant 0 : i32
    %c0_i32_0 = arith.constant 0 : i32
    return %arg0, %c0_i32 : i32, i32
  }
}

</mosaic_0001>

<llo_original>
// kernel: dm3loc_forward.1
$region0: #{dm3loc_forward.1}
  #allocation0 [shape = 'u32[]', space=smem, size = 0x4, offset = 0x4, fixed_abs, tag = 'smem constant byte address 0x4 - core index']
  #allocation1 [shape = 'u32[144,128]{1,0:T(1,128)}', space=vmem, size = 0x12000, scoped, tag = 'internal scratch']
  %s0 = inlined_call_operand.vmem [shape: bf16[1024,32], index: 0, kind: input, shape index: {}]
  %s1 = inlined_call_operand.vmem [shape: bf16[32,32], index: 1, kind: input, shape index: {}]
  %s2 = inlined_call_operand.vmem [shape: f32[1,32], index: 2, kind: input, shape index: {}]
  %s3 = inlined_call_operand.vmem [shape: f32[16,16,1], index: 3, kind: input, shape index: {}]
  %s4 = inlined_call_operand.vmem [shape: f32[32,16], index: 4, kind: input, shape index: {}]
  %s5 = inlined_call_operand.vmem [shape: f32[16,4], index: 5, kind: input, shape index: {}]
  %s6 = inlined_call_operand.vmem [shape: f32[128,32], index: 6, kind: input, shape index: {}]
  %s7 = inlined_call_operand.vmem [shape: f32[1,32], index: 7, kind: input, shape index: {}]
  %s8 = inlined_call_operand.vmem [shape: f32[32,9], index: 8, kind: input, shape index: {}]
  %s9 = inlined_call_operand.vmem [shape: f32[1,9], index: 9, kind: input, shape index: {}]
  %s10 = inlined_call_operand.hbm [shape: f32[16,9], index: 10, kind: output, shape index: {}]
  %s11 = sld [smem:[#allocation0]]
  $region73: #{dm3loc_forward.1} parent=0
    _
  %s13 = ssub.s32 1, %s11
  %s14 = scalar_select 0, %s13, %s11
  $region1: #{dm3loc_forward.1} parent=0
    #allocation2 [shape = 'u8[8192]{0}', space=vmem, size = 0x2000, scoped, tag = 'output window, operand 0']
    #allocation3 [shape = 's32[2]{0}', space=sflag, size = 0x8, scoped, tag = 'scoped memory for dm3loc_forward.1']
    %15 = vsyncpa [#allocation3], 0
    %s16 = scalar_lea.sflag [#allocation3], 1
    %17 = vsyncpa %s16, 0
    loop: start=0, step=1, limit=4
    $region2: #{dm3loc_forward.1} parent=1 // loop_pre_header
      _
    $region3: #{dm3loc_forward.1} parent=1 // loop_header
      %s19 = sphi 0, %s23
      %p20 = scmp.ge.s32.totalorder %s19, 4
      %s29 = sphi 0, %s31
      %s32 = sphi 0, %s29
      %s33 = sphi 0, %s32
      %s49 = sphi 0, %s33
      %s53 = sphi 0, %s53
      %s55 = sphi 0, %s53
      %s56 = sphi 0, %s55
      %s70 = sphi 0, %s56
      %s74 = sphi 0, %s74
      %s76 = sphi 0, %s74
      %s77 = sphi 0, %s76
      %s91 = sphi 0, %s77
      %s97 = sphi 0, %s99
      %s100 = sphi 0, %s97
      %s101 = sphi 0, %s100
      %s117 = sphi 0, %s101
      %s121 = sphi 0, %s121
      %s123 = sphi 0, %s121
      %s124 = sphi 0, %s123
      %s138 = sphi 0, %s124
      %s142 = sphi 0, %s142
      %s144 = sphi 0, %s142
      %s145 = sphi 0, %s144
      %s159 = sphi 0, %s145
      %s163 = sphi 0, %s163
      %s165 = sphi 0, %s163
      %s166 = sphi 0, %s165
      %s180 = sphi 0, %s166
      %s184 = sphi 0, %s184
      %s186 = sphi 0, %s184
      %s187 = sphi 0, %s186
      %s201 = sphi 0, %s187
      %s205 = sphi 0, %s205
      %s207 = sphi 0, %s205
      %s208 = sphi 0, %s207
      %s222 = sphi 0, %s208
      %s226 = sphi 0, %s226
      %s228 = sphi 0, %s226
      %s229 = sphi 0, %s228
      %s243 = sphi 0, %s229
      %s249 = sphi 0, %s251
      %s252 = sphi 0, %s249
      %s253 = sphi 0, %s252
      %s269 = sphi 0, %s253
    $region4: #{dm3loc_forward.1} parent=1 // loop_header_branch
      %22 = sbr.rel (%p20) target = $region8
    $region5: #{dm3loc_forward.1} parent=1 // loop_body
      %s24 = ssub.s32 %s19, 1
      %s25 = ssub.s32 %s19, 2
      %s26 = sadd.s32 %s19, 1
      %s27 = ssub.s32 %s19, %s26
      %p28 = scmp.eq.s32.totalorder %s27, 0
      %s30 = sadd.s32 %s29, 1
      %s31 = scalar_select %p28, %s29, %s30
      %p34 = pneg %p28
      %p35 = scmp.eq.s32.totalorder %s19, 1
      %p36 = por %p34, %p35
      %p37 = scmp.ne.s32.totalorder %s29, %s32
      %p38 = scmp.eq.s32.totalorder %s19, 0
      %p39 = por %p37, %p38
      %p40 = scmp.ne.s32.totalorder %s29, %s32
      %p41 = scmp.eq.s32.totalorder %s24, 1
      %p42 = por %p40, %p41
      %p43 = scmp.ne.s32.totalorder %s32, %s33
      %p44 = scmp.eq.s32.totalorder %s24, 0
      %p45 = por %p43, %p44
      %p46 = scmp.ne.s32.totalorder %s32, %s33
      %p47 = scmp.eq.s32.totalorder %s25, 1
      %p48 = por %p46, %p47
      %p50 = scmp.ne.s32.totalorder %s33, %s49
      %p51 = scmp.eq.s32.totalorder %s25, 0
      %p52 = por %p50, %p51
      %s54 = sadd.s32 %s53, 1
      %p57 = scmp.eq.s32.totalorder %s19, 1
      %p58 = scmp.ne.s32.totalorder %s53, %s55
      %p59 = scmp.eq.s32.totalorder %s19, 0
      %p60 = por %p58, %p59
      %p61 = scmp.ne.s32.totalorder %s53, %s55
      %p62 = scmp.eq.s32.totalorder %s24, 1
      %p63 = por %p61, %p62
      %p64 = scmp.ne.s32.totalorder %s55, %s56
      %p65 = scmp.eq.s32.totalorder %s24, 0
      %p66 = por %p64, %p65
      %p67 = scmp.ne.s32.totalorder %s55, %s56
      %p68 = scmp.eq.s32.totalorder %s25, 1
      %p69 = por %p67, %p68
      %p71 = scmp.ne.s32.totalorder %s56, %s70
      %p72 = scmp.eq.s32.totalorder %s25, 0
      %p73 = por %p71, %p72
      %s75 = sadd.s32 %s74, 1
      %p78 = scmp.eq.s32.totalorder %s19, 1
      %p79 = scmp.ne.s32.totalorder %s74, %s76
      %p80 = scmp.eq.s32.totalorder %s19, 0
      %p81 = por %p79, %p80
      %p82 = scmp.ne.s32.totalorder %s74, %s76
      %p83 = scmp.eq.s32.totalorder %s24, 1
      %p84 = por %p82, %p83
      %p85 = scmp.ne.s32.totalorder %s76, %s77
      %p86 = scmp.eq.s32.totalorder %s24, 0
      %p87 = por %p85, %p86
      %p88 = scmp.ne.s32.totalorder %s76, %s77
      %p89 = scmp.eq.s32.totalorder %s25, 1
      %p90 = por %p88, %p89
      %p92 = scmp.ne.s32.totalorder %s77, %s91
      %p93 = scmp.eq.s32.totalorder %s25, 0
      %p94 = por %p92, %p93
      %s95 = ssub.s32 %s19, %s26
      %p96 = scmp.eq.s32.totalorder %s95, 0
      %s98 = sadd.s32 %s97, 1
      %s99 = scalar_select %p96, %s97, %s98
      %p102 = pneg %p96
      %p103 = scmp.eq.s32.totalorder %s19, 1
      %p104 = por %p102, %p103
      %p105 = scmp.ne.s32.totalorder %s97, %s100
      %p106 = scmp.eq.s32.totalorder %s19, 0
      %p107 = por %p105, %p106
      %p108 = scmp.ne.s32.totalorder %s97, %s100
      %p109 = scmp.eq.s32.totalorder %s24, 1
      %p110 = por %p108, %p109
      %p111 = scmp.ne.s32.totalorder %s100, %s101
      %p112 = scmp.eq.s32.totalorder %s24, 0
      %p113 = por %p111, %p112
      %p114 = scmp.ne.s32.totalorder %s100, %s101
      %p115 = scmp.eq.s32.totalorder %s25, 1
      %p116 = por %p114, %p115
      %p118 = scmp.ne.s32.totalorder %s101, %s117
      %p119 = scmp.eq.s32.totalorder %s25, 0
      %p120 = por %p118, %p119
      %s122 = sadd.s32 %s121, 1
      %p125 = scmp.eq.s32.totalorder %s19, 1
      %p126 = scmp.ne.s32.totalorder %s121, %s123
      %p127 = scmp.eq.s32.totalorder %s19, 0
      %p128 = por %p126, %p127
      %p129 = scmp.ne.s32.totalorder %s121, %s123
      %p130 = scmp.eq.s32.totalorder %s24, 1
      %p131 = por %p129, %p130
      %p132 = scmp.ne.s32.totalorder %s123, %s124
      %p133 = scmp.eq.s32.totalorder %s24, 0
      %p134 = por %p132, %p133
      %p135 = scmp.ne.s32.totalorder %s123, %s124
      %p136 = scmp.eq.s32.totalorder %s25, 1
      %p137 = por %p135, %p136
      %p139 = scmp.ne.s32.totalorder %s124, %s138
      %p140 = scmp.eq.s32.totalorder %s25, 0
      %p141 = por %p139, %p140
      %s143 = sadd.s32 %s142, 1
      %p146 = scmp.eq.s32.totalorder %s19, 1
      %p147 = scmp.ne.s32.totalorder %s142, %s144
      %p148 = scmp.eq.s32.totalorder %s19, 0
      %p149 = por %p147, %p148
      %p150 = scmp.ne.s32.totalorder %s142, %s144
      %p151 = scmp.eq.s32.totalorder %s24, 1
      %p152 = por %p150, %p151
      %p153 = scmp.ne.s32.totalorder %s144, %s145
      %p154 = scmp.eq.s32.totalorder %s24, 0
      %p155 = por %p153, %p154
      %p156 = scmp.ne.s32.totalorder %s144, %s145
      %p157 = scmp.eq.s32.totalorder %s25, 1
      %p158 = por %p156, %p157
      %p160 = scmp.ne.s32.totalorder %s145, %s159
      %p161 = scmp.eq.s32.totalorder %s25, 0
      %p162 = por %p160, %p161
      %s164 = sadd.s32 %s163, 1
      %p167 = scmp.eq.s32.totalorder %s19, 1
      %p168 = scmp.ne.s32.totalorder %s163, %s165
      %p169 = scmp.eq.s32.totalorder %s19, 0
      %p170 = por %p168, %p169
      %p171 = scmp.ne.s32.totalorder %s163, %s165
      %p172 = scmp.eq.s32.totalorder %s24, 1
      %p173 = por %p171, %p172
      %p174 = scmp.ne.s32.totalorder %s165, %s166
      %p175 = scmp.eq.s32.totalorder %s24, 0
      %p176 = por %p174, %p175
      %p177 = scmp.ne.s32.totalorder %s165, %s166
      %p178 = scmp.eq.s32.totalorder %s25, 1
      %p179 = por %p177, %p178
      %p181 = scmp.ne.s32.totalorder %s166, %s180
      %p182 = scmp.eq.s32.totalorder %s25, 0
      %p183 = por %p181, %p182
      %s185 = sadd.s32 %s184, 1
      %p188 = scmp.eq.s32.totalorder %s19, 1
      %p189 = scmp.ne.s32.totalorder %s184, %s186
      %p190 = scmp.eq.s32.totalorder %s19, 0
      %p191 = por %p189, %p190
      %p192 = scmp.ne.s32.totalorder %s184, %s186
      %p193 = scmp.eq.s32.totalorder %s24, 1
      %p194 = por %p192, %p193
      %p195 = scmp.ne.s32.totalorder %s186, %s187
      %p196 = scmp.eq.s32.totalorder %s24, 0
      %p197 = por %p195, %p196
      %p198 = scmp.ne.s32.totalorder %s186, %s187
      %p199 = scmp.eq.s32.totalorder %s25, 1
      %p200 = por %p198, %p199
      %p202 = scmp.ne.s32.totalorder %s187, %s201
      %p203 = scmp.eq.s32.totalorder %s25, 0
      %p204 = por %p202, %p203
      %s206 = sadd.s32 %s205, 1
      %p209 = scmp.eq.s32.totalorder %s19, 1
      %p210 = scmp.ne.s32.totalorder %s205, %s207
      %p211 = scmp.eq.s32.totalorder %s19, 0
      %p212 = por %p210, %p211
      %p213 = scmp.ne.s32.totalorder %s205, %s207
      %p214 = scmp.eq.s32.totalorder %s24, 1
      %p215 = por %p213, %p214
      %p216 = scmp.ne.s32.totalorder %s207, %s208
      %p217 = scmp.eq.s32.totalorder %s24, 0
      %p218 = por %p216, %p217
      %p219 = scmp.ne.s32.totalorder %s207, %s208
      %p220 = scmp.eq.s32.totalorder %s25, 1
      %p221 = por %p219, %p220
      %p223 = scmp.ne.s32.totalorder %s208, %s222
      %p224 = scmp.eq.s32.totalorder %s25, 0
      %p225 = por %p223, %p224
      %s227 = sadd.s32 %s226, 1
      %p230 = scmp.eq.s32.totalorder %s19, 1
      %p231 = scmp.ne.s32.totalorder %s226, %s228
      %p232 = scmp.eq.s32.totalorder %s19, 0
      %p233 = por %p231, %p232
      %p234 = scmp.ne.s32.totalorder %s226, %s228
      %p235 = scmp.eq.s32.totalorder %s24, 1
      %p236 = por %p234, %p235
      %p237 = scmp.ne.s32.totalorder %s228, %s229
      %p238 = scmp.eq.s32.totalorder %s24, 0
      %p239 = por %p237, %p238
      %p240 = scmp.ne.s32.totalorder %s228, %s229
      %p241 = scmp.eq.s32.totalorder %s25, 1
      %p242 = por %p240, %p241
      %p244 = scmp.ne.s32.totalorder %s229, %s243
      %p245 = scmp.eq.s32.totalorder %s25, 0
      %p246 = por %p244, %p245
      %s247 = ssub.s32 %s19, %s26
      %p248 = scmp.eq.s32.totalorder %s247, 0
      %s250 = sadd.s32 %s249, 1
      %s251 = scalar_select %p248, %s249, %s250
      %p254 = pneg %p248
      %p255 = scmp.eq.s32.totalorder %s19, 1
      %p256 = por %p254, %p255
      %p257 = scmp.ne.s32.totalorder %s249, %s252
      %p258 = scmp.eq.s32.totalorder %s19, 0
      %p259 = por %p257, %p258
      %p260 = scmp.ne.s32.totalorder %s249, %s252
      %p261 = scmp.eq.s32.totalorder %s24, 1
      %p262 = por %p260, %p261
      %p263 = scmp.ne.s32.totalorder %s252, %s253
      %p264 = scmp.eq.s32.totalorder %s24, 0
      %p265 = por %p263, %p264
      %p266 = scmp.ne.s32.totalorder %s252, %s253
      %p267 = scmp.eq.s32.totalorder %s25, 1
      %p268 = por %p266, %p267
      %p270 = scmp.ne.s32.totalorder %s253, %s269
      %p271 = scmp.eq.s32.totalorder %s25, 0
      %p272 = por %p270, %p271
      %p273 = scmp.le.s32.totalorder 1, %s19
      %p274 = scmp.lt.s32.totalorder %s19, 3
      %p275 = pnand %p273, %p274
      %p276 = pneg %p275
      // Predicated region
      $region9: #{dm3loc_forward.1} parent=5 // pred_check
        _
      $region10: #{dm3loc_forward.1} parent=5 // pred_check_branch
        %278 = sbr.rel (%p275) target = $region12
      $region11: #{dm3loc_forward.1} parent=5 // pred_region
        %s279 = ssub.s32 %s19, 1
        // Predicated region
        $region13: #{dm3loc_forward.1} parent=11 // pred_check
          %p280 = pneg %p66
        $region14: #{dm3loc_forward.1} parent=11 // pred_check_branch
          %282 = sbr.rel (%p280) target = $region16
        $region15: #{dm3loc_forward.1} parent=11 // pred_region
          _
        $region16: #{dm3loc_forward.1} parent=11 // pred_fallthru
          _
        // Predicated region
        $region17: #{dm3loc_forward.1} parent=11 // pred_check
          %p283 = pneg %p87
        $region18: #{dm3loc_forward.1} parent=11 // pred_check_branch
          %285 = sbr.rel (%p283) target = $region20
        $region19: #{dm3loc_forward.1} parent=11 // pred_region
          _
        $region20: #{dm3loc_forward.1} parent=11 // pred_fallthru
          _
        // Predicated region
        $region21: #{dm3loc_forward.1} parent=11 // pred_check
          %p286 = pneg %p134
        $region22: #{dm3loc_forward.1} parent=11 // pred_check_branch
          %288 = sbr.rel (%p286) target = $region24
        $region23: #{dm3loc_forward.1} parent=11 // pred_region
          _
        $region24: #{dm3loc_forward.1} parent=11 // pred_fallthru
          _
        // Predicated region
        $region25: #{dm3loc_forward.1} parent=11 // pred_check
          %p289 = pneg %p155
        $region26: #{dm3loc_forward.1} parent=11 // pred_check_branch
          %291 = sbr.rel (%p289) target = $region28
        $region27: #{dm3loc_forward.1} parent=11 // pred_region
          _
        $region28: #{dm3loc_forward.1} parent=11 // pred_fallthru
          _
        // Predicated region
        $region29: #{dm3loc_forward.1} parent=11 // pred_check
          %p292 = pneg %p176
        $region30: #{dm3loc_forward.1} parent=11 // pred_check_branch
          %294 = sbr.rel (%p292) target = $region32
        $region31: #{dm3loc_forward.1} parent=11 // pred_region
          _
        $region32: #{dm3loc_forward.1} parent=11 // pred_fallthru
          _
        // Predicated region
        $region33: #{dm3loc_forward.1} parent=11 // pred_check
          %p295 = pneg %p197
        $region34: #{dm3loc_forward.1} parent=11 // pred_check_branch
          %297 = sbr.rel (%p295) target = $region36
        $region35: #{dm3loc_forward.1} parent=11 // pred_region
          _
        $region36: #{dm3loc_forward.1} parent=11 // pred_fallthru
          _
        // Predicated region
        $region37: #{dm3loc_forward.1} parent=11 // pred_check
          %p298 = pneg %p218
        $region38: #{dm3loc_forward.1} parent=11 // pred_check_branch
          %300 = sbr.rel (%p298) target = $region40
        $region39: #{dm3loc_forward.1} parent=11 // pred_region
          _
        $region40: #{dm3loc_forward.1} parent=11 // pred_fallthru
          _
        // Predicated region
        $region41: #{dm3loc_forward.1} parent=11 // pred_check
          %p301 = pneg %p239
        $region42: #{dm3loc_forward.1} parent=11 // pred_check_branch
          %303 = sbr.rel (%p301) target = $region44
        $region43: #{dm3loc_forward.1} parent=11 // pred_region
          _
        $region44: #{dm3loc_forward.1} parent=11 // pred_fallthru
          _
      $region12: #{dm3loc_forward.1} parent=5 // pred_fallthru
        _
      %p304 = scmp.lt.s32.totalorder %s19, 2
      // Predicated region
      $region45: #{dm3loc_forward.1} parent=5 // pred_check
        %p305 = pneg %p304
      $region46: #{dm3loc_forward.1} parent=5 // pred_check_branch
        %307 = sbr.rel (%p305) target = $region48
      $region47: #{dm3loc_forward.1} parent=5 // pred_region
        // Predicated region
        $region49: #{dm3loc_forward.1} parent=47 // pred_check
          %p308 = pneg %p39
        $region50: #{dm3loc_forward.1} parent=47 // pred_check_branch
          %310 = sbr.rel (%p308) target = $region52
        $region51: #{dm3loc_forward.1} parent=47 // pred_region
          %s311 = smul.u32 64, %s19
          %p312 = scmp.lt.s32.totalorder %s311, 127
          %s313 = scalar_select %p312, %s311, 127
          %s314 = smul.addr %s313, 4
          %s315 = scalar_lea.vmem %s0, %s314
          %s316 = smul.u32 64, %s19
        $region52: #{dm3loc_forward.1} parent=47 // pred_fallthru
          _
        // Predicated region
        $region53: #{dm3loc_forward.1} parent=47 // pred_check
          %p317 = pneg %p107
        $region54: #{dm3loc_forward.1} parent=47 // pred_check_branch
          %319 = sbr.rel (%p317) target = $region56
        $region55: #{dm3loc_forward.1} parent=47 // pred_region
          %s320 = smul.u32 8, %s19
          %p321 = scmp.lt.s32.totalorder %s320, 15
          %s322 = scalar_select %p321, %s320, 15
          %s323 = smul.addr %s322, 2
          %s324 = smul.addr %s323, 8
          %s325 = scalar_lea.vmem %s3, %s324
          %s326 = smul.u32 8, %s19
        $region56: #{dm3loc_forward.1} parent=47 // pred_fallthru
          _
      $region48: #{dm3loc_forward.1} parent=5 // pred_fallthru
        _
      %p327 = scmp.le.s32.totalorder 1, %s19
      %p328 = scmp.lt.s32.totalorder %s19, 3
      %p329 = pnand %p327, %p328
      %p330 = pneg %p329
      // Predicated region
      $region57: #{dm3loc_forward.1} parent=5 // pred_check
        _
      $region58: #{dm3loc_forward.1} parent=5 // pred_check_branch
        %332 = sbr.rel (%p329) target = $region60
      $region59: #{dm3loc_forward.1} parent=5 // pred_region
        %s333 = ssub.s32 %s19, 1
        %s334 = smul.u32 64, %s24
        %p335 = scmp.lt.s32.totalorder %s334, 127
        %s336 = scalar_select %p335, %s334, 127
        %s337 = smul.addr %s336, 4
        %s338 = scalar_lea.vmem %s0, %s337
        %p339 = pneg %p45
        %p340 = pneg %p42
        %p341 = pneg %p66
        %p342 = pneg %p63
        %p343 = pneg %p87
        %p344 = pneg %p84
        %s345 = smul.u32 8, %s24
        %p346 = scmp.lt.s32.totalorder %s345, 15
        %s347 = scalar_select %p346, %s345, 15
        %s348 = smul.addr %s347, 2
        %s349 = smul.addr %s348, 8
        %s350 = scalar_lea.vmem %s3, %s349
        %p351 = pneg %p113
        %p352 = pneg %p110
        %p353 = pneg %p134
        %p354 = pneg %p131
        %p355 = pneg %p155
        %p356 = pneg %p152
        %p357 = pneg %p176
        %p358 = pneg %p173
        %p359 = pneg %p197
        %p360 = pneg %p194
        %p361 = pneg %p218
        %p362 = pneg %p215
        %p363 = pneg %p239
        %p364 = pneg %p236
        %p365 = pneg %p265
        %p366 = pneg %p262
        %s367 = sand.u32 %s252, 1
        %s368 = scalar_lea.sflag [#allocation3], %s367
        %s369 = sand.u32 %s252, 1
        %s370 = smul.addr %s369, 8
        %s371 = scalar_lea.vmem [#allocation2], %s370
        %s372 = smul.u32 64, %s24
        %p373 = scmp.lt.s32.totalorder %s372, 127
        %s374 = scalar_select %p373, %s372, 127
        %s375 = smul.addr %s374, 4
        %s376 = scalar_lea.vmem %s0, %s375
        %s377 = smul.u32 64, %s24
        %s378 = smul.u32 8, %s24
        %p379 = scmp.lt.s32.totalorder %s378, 15
        %s380 = scalar_select %p379, %s378, 15
        %s381 = smul.addr %s380, 2
        %s382 = smul.addr %s381, 8
        %s383 = scalar_lea.vmem %s3, %s382
        %s384 = smul.u32 8, %s24
        %v386 = vld [vmem:[%s376] sm:$0xf]
        %v387 = vld [vmem:[%s376 + $0x4] sm:$0xf]
        %v388 = vld [vmem:[%s376 + $0x8] sm:$0xf]
        %v389 = vld [vmem:[%s376 + $0xc] sm:$0xf]
        %v390 = vld [vmem:[%s376 + $0x10] sm:$0xf]
        %v391 = vld [vmem:[%s376 + $0x14] sm:$0xf]
        %v392 = vld [vmem:[%s376 + $0x18] sm:$0xf]
        %v393 = vld [vmem:[%s376 + $0x1c] sm:$0xf]
        %v394 = vld [vmem:[%s376 + $0x20] sm:$0xf]
        %v395 = vld [vmem:[%s376 + $0x24] sm:$0xf]
        %v396 = vld [vmem:[%s376 + $0x28] sm:$0xf]
        %v397 = vld [vmem:[%s376 + $0x2c] sm:$0xf]
        %v398 = vld [vmem:[%s376 + $0x30] sm:$0xf]
        %v399 = vld [vmem:[%s376 + $0x34] sm:$0xf]
        %v400 = vld [vmem:[%s376 + $0x38] sm:$0xf]
        %v401 = vld [vmem:[%s376 + $0x3c] sm:$0xf]
        %v402 = vld [vmem:[%s376 + $0x40] sm:$0xf]
        %v403 = vld [vmem:[%s376 + $0x44] sm:$0xf]
        %v404 = vld [vmem:[%s376 + $0x48] sm:$0xf]
        %v405 = vld [vmem:[%s376 + $0x4c] sm:$0xf]
        %v406 = vld [vmem:[%s376 + $0x50] sm:$0xf]
        %v407 = vld [vmem:[%s376 + $0x54] sm:$0xf]
        %v408 = vld [vmem:[%s376 + $0x58] sm:$0xf]
        %v409 = vld [vmem:[%s376 + $0x5c] sm:$0xf]
        %v410 = vld [vmem:[%s376 + $0x60] sm:$0xf]
        %v411 = vld [vmem:[%s376 + $0x64] sm:$0xf]
        %v412 = vld [vmem:[%s376 + $0x68] sm:$0xf]
        %v413 = vld [vmem:[%s376 + $0x6c] sm:$0xf]
        %v414 = vld [vmem:[%s376 + $0x70] sm:$0xf]
        %v415 = vld [vmem:[%s376 + $0x74] sm:$0xf]
        %v416 = vld [vmem:[%s376 + $0x78] sm:$0xf]
        %v417 = vld [vmem:[%s376 + $0x7c] sm:$0xf]
        %v418 = vld [vmem:[%s376 + $0x80] sm:$0xf]
        %v419 = vld [vmem:[%s376 + $0x84] sm:$0xf]
        %v420 = vld [vmem:[%s376 + $0x88] sm:$0xf]
        %v421 = vld [vmem:[%s376 + $0x8c] sm:$0xf]
        %v422 = vld [vmem:[%s376 + $0x90] sm:$0xf]
        %v423 = vld [vmem:[%s376 + $0x94] sm:$0xf]
        %v424 = vld [vmem:[%s376 + $0x98] sm:$0xf]
        %v425 = vld [vmem:[%s376 + $0x9c] sm:$0xf]
        %v426 = vld [vmem:[%s376 + $0xa0] sm:$0xf]
        %v427 = vld [vmem:[%s376 + $0xa4] sm:$0xf]
        %v428 = vld [vmem:[%s376 + $0xa8] sm:$0xf]
        %v429 = vld [vmem:[%s376 + $0xac] sm:$0xf]
        %v430 = vld [vmem:[%s376 + $0xb0] sm:$0xf]
        %v431 = vld [vmem:[%s376 + $0xb4] sm:$0xf]
        %v432 = vld [vmem:[%s376 + $0xb8] sm:$0xf]
        %v433 = vld [vmem:[%s376 + $0xbc] sm:$0xf]
        %v434 = vld [vmem:[%s376 + $0xc0] sm:$0xf]
        %v435 = vld [vmem:[%s376 + $0xc4] sm:$0xf]
        %v436 = vld [vmem:[%s376 + $0xc8] sm:$0xf]
        %v437 = vld [vmem:[%s376 + $0xcc] sm:$0xf]
        %v438 = vld [vmem:[%s376 + $0xd0] sm:$0xf]
        %v439 = vld [vmem:[%s376 + $0xd4] sm:$0xf]
        %v440 = vld [vmem:[%s376 + $0xd8] sm:$0xf]
        %v441 = vld [vmem:[%s376 + $0xdc] sm:$0xf]
        %v442 = vld [vmem:[%s376 + $0xe0] sm:$0xf]
        %v443 = vld [vmem:[%s376 + $0xe4] sm:$0xf]
        %v444 = vld [vmem:[%s376 + $0xe8] sm:$0xf]
        %v445 = vld [vmem:[%s376 + $0xec] sm:$0xf]
        %v446 = vld [vmem:[%s376 + $0xf0] sm:$0xf]
        %v447 = vld [vmem:[%s376 + $0xf4] sm:$0xf]
        %v448 = vld [vmem:[%s376 + $0xf8] sm:$0xf]
        %v449 = vld [vmem:[%s376 + $0xfc] sm:$0xf]
        %v450 = vld [vmem:[%s1] sm:$0xf]
        %v451 = vld [vmem:[%s1 + $0x4] sm:$0xf]
        %v452 = vld [vmem:[%s1 + $0x8] sm:$0xf]
        %v453 = vld [vmem:[%s1 + $0xc] sm:$0xf]
        %v454 = vld [vmem:[%s2] sm:$0x1]
        %v456 = vlaneseq
        %v457 = vshrl.u32 %v456, 7
        %v458 = vsub.s32 0, %v457
        %v459 = vrot.slane %v454, %v458
        %v525 = vunpack.c.l.b16 %v386
        %v526 = vunpack.c.l.b16 %v387
        %v527 = vunpack.c.l.b16 %v388
        %v528 = vunpack.c.l.b16 %v389
        %v529 = vunpack.c.l.b16 %v390
        %v530 = vunpack.c.l.b16 %v391
        %v531 = vunpack.c.l.b16 %v392
        %v532 = vunpack.c.l.b16 %v393
        %v533 = vunpack.c.l.b16 %v394
        %v534 = vunpack.c.l.b16 %v395
        %v535 = vunpack.c.l.b16 %v396
        %v536 = vunpack.c.l.b16 %v397
        %v537 = vunpack.c.l.b16 %v398
        %v538 = vunpack.c.l.b16 %v399
        %v539 = vunpack.c.l.b16 %v400
        %v540 = vunpack.c.l.b16 %v401
        %v541 = vunpack.c.l.b16 %v402
        %v542 = vunpack.c.l.b16 %v403
        %v543 = vunpack.c.l.b16 %v404
        %v544 = vunpack.c.l.b16 %v405
        %v545 = vunpack.c.l.b16 %v406
        %v546 = vunpack.c.l.b16 %v407
        %v547 = vunpack.c.l.b16 %v408
        %v548 = vunpack.c.l.b16 %v409
        %v549 = vunpack.c.l.b16 %v410
        %v550 = vunpack.c.l.b16 %v411
        %v551 = vunpack.c.l.b16 %v412
        %v552 = vunpack.c.l.b16 %v413
        %v553 = vunpack.c.l.b16 %v414
        %v554 = vunpack.c.l.b16 %v415
        %v555 = vunpack.c.l.b16 %v416
        %v556 = vunpack.c.l.b16 %v417
        %v557 = vunpack.c.l.b16 %v418
        %v558 = vunpack.c.l.b16 %v419
        %v559 = vunpack.c.l.b16 %v420
        %v560 = vunpack.c.l.b16 %v421
        %v561 = vunpack.c.l.b16 %v422
        %v562 = vunpack.c.l.b16 %v423
        %v563 = vunpack.c.l.b16 %v424
        %v564 = vunpack.c.l.b16 %v425
        %v565 = vunpack.c.l.b16 %v426
        %v566 = vunpack.c.l.b16 %v427
        %v567 = vunpack.c.l.b16 %v428
        %v568 = vunpack.c.l.b16 %v429
        %v569 = vunpack.c.l.b16 %v430
        %v570 = vunpack.c.l.b16 %v431
        %v571 = vunpack.c.l.b16 %v432
        %v572 = vunpack.c.l.b16 %v433
        %v573 = vunpack.c.l.b16 %v434
        %v574 = vunpack.c.l.b16 %v435
        %v575 = vunpack.c.l.b16 %v436
        %v576 = vunpack.c.l.b16 %v437
        %v577 = vunpack.c.l.b16 %v438
        %v578 = vunpack.c.l.b16 %v439
        %v579 = vunpack.c.l.b16 %v440
        %v580 = vunpack.c.l.b16 %v441
        %v581 = vunpack.c.l.b16 %v442
        %v582 = vunpack.c.l.b16 %v443
        %v583 = vunpack.c.l.b16 %v444
        %v584 = vunpack.c.l.b16 %v445
        %v585 = vunpack.c.l.b16 %v446
        %v586 = vunpack.c.l.b16 %v447
        %v587 = vunpack.c.l.b16 %v448
        %v588 = vunpack.c.l.b16 %v449
        %v589 = vpack.c.b16 %v526, %v525
        %v590 = vpack.c.b16 %v528, %v527
        %v591 = vpack.c.b16 %v530, %v529
        %v592 = vpack.c.b16 %v532, %v531
        %v593 = vpack.c.b16 %v534, %v533
        %v594 = vpack.c.b16 %v536, %v535
        %v595 = vpack.c.b16 %v538, %v537
        %v596 = vpack.c.b16 %v540, %v539
        %v597 = vpack.c.b16 %v542, %v541
        %v598 = vpack.c.b16 %v544, %v543
        %v599 = vpack.c.b16 %v546, %v545
        %v600 = vpack.c.b16 %v548, %v547
        %v601 = vpack.c.b16 %v550, %v549
        %v602 = vpack.c.b16 %v552, %v551
        %v603 = vpack.c.b16 %v554, %v553
        %v604 = vpack.c.b16 %v556, %v555
        %v605 = vpack.c.b16 %v558, %v557
        %v606 = vpack.c.b16 %v560, %v559
        %v607 = vpack.c.b16 %v562, %v561
        %v608 = vpack.c.b16 %v564, %v563
        %v609 = vpack.c.b16 %v566, %v565
        %v610 = vpack.c.b16 %v568, %v567
        %v611 = vpack.c.b16 %v570, %v569
        %v612 = vpack.c.b16 %v572, %v571
        %v613 = vpack.c.b16 %v574, %v573
        %v614 = vpack.c.b16 %v576, %v575
        %v615 = vpack.c.b16 %v578, %v577
        %v616 = vpack.c.b16 %v580, %v579
        %v617 = vpack.c.b16 %v582, %v581
        %v618 = vpack.c.b16 %v584, %v583
        %v619 = vpack.c.b16 %v586, %v585
        %v620 = vpack.c.b16 %v588, %v587
        %v625 = vunpack.c.l.b16 %v450
        %v626 = vunpack.c.l.b16 %v451
        %v627 = vunpack.c.l.b16 %v452
        %v628 = vunpack.c.l.b16 %v453
        %v629 = vpack.c.b16 %v626, %v625
        %v630 = vpack.c.b16 %v628, %v627
        %vm633 = vcmask 261120
        %v635 = vsel %vm633, %v589, 0
        %v638 = vsel %vm633, %v590, 0
        %v641 = vsel %vm633, %v591, 0
        %v644 = vsel %vm633, %v592, 0
        %v647 = vsel %vm633, %v593, 0
        %v650 = vsel %vm633, %v594, 0
        %v653 = vsel %vm633, %v595, 0
        %v656 = vsel %vm633, %v596, 0
        %v659 = vsel %vm633, %v597, 0
        %v662 = vsel %vm633, %v598, 0
        %v665 = vsel %vm633, %v599, 0
        %v668 = vsel %vm633, %v600, 0
        %v671 = vsel %vm633, %v601, 0
        %v674 = vsel %vm633, %v602, 0
        %v677 = vsel %vm633, %v603, 0
        %v680 = vsel %vm633, %v604, 0
        %v683 = vsel %vm633, %v605, 0
        %v686 = vsel %vm633, %v606, 0
        %v689 = vsel %vm633, %v607, 0
        %v692 = vsel %vm633, %v608, 0
        %v695 = vsel %vm633, %v609, 0
        %v698 = vsel %vm633, %v610, 0
        %v701 = vsel %vm633, %v611, 0
        %v704 = vsel %vm633, %v612, 0
        %v707 = vsel %vm633, %v613, 0
        %v710 = vsel %vm633, %v614, 0
        %v713 = vsel %vm633, %v615, 0
        %v716 = vsel %vm633, %v616, 0
        %v719 = vsel %vm633, %v617, 0
        %v722 = vsel %vm633, %v618, 0
        %v725 = vsel %vm633, %v619, 0
        %v728 = vsel %vm633, %v620, 0
        %730 = vmatprep.subr.bf16.mxu0 0
        %731 = vmatpush1.bf16.msra.mxu0 %v629
        %732 = vmatprep.subr.bf16.mxu0 0
        %733 = vmatpush1.bf16.msra.mxu0 %v630
        %734 = vmatprep.subr.bf16.mxu0 0
        %735 = vmatpush1.bf16.msra.mxu0 0
        %736 = vmatprep.subr.bf16.mxu0 0
        %737 = vmatpush1.bf16.msra.mxu0 0
        %738 = vmatprep.subr.bf16.mxu0 0
        %739 = vmatpush1.bf16.msra.mxu0 0
        %740 = vmatprep.subr.bf16.mxu0 0
        %741 = vmatpush1.bf16.msra.mxu0 0
        %742 = vmatprep.subr.bf16.mxu0 0
        %743 = vmatpush1.bf16.msra.mxu0 0
        %744 = vmatprep.subr.bf16.mxu0 0
        %745 = vmatpush1.bf16.msra.mxu0 0
        %746 = vmatprep.subr.bf16.mxu0 0
        %747 = vmatpush1.bf16.msra.mxu0 0
        %748 = vmatprep.subr.bf16.mxu0 0
        %749 = vmatpush1.bf16.msra.mxu0 0
        %750 = vmatprep.subr.bf16.mxu0 0
        %751 = vmatpush1.bf16.msra.mxu0 0
        %752 = vmatprep.subr.bf16.mxu0 0
        %753 = vmatpush1.bf16.msra.mxu0 0
        %754 = vmatprep.subr.bf16.mxu0 0
        %755 = vmatpush1.bf16.msra.mxu0 0
        %756 = vmatprep.subr.bf16.mxu0 0
        %757 = vmatpush1.bf16.msra.mxu0 0
        %758 = vmatprep.subr.bf16.mxu0 0
        %759 = vmatpush1.bf16.msra.mxu0 0
        %760 = vmatprep.subr.bf16.mxu0 0
        %761 = vmatpush1.bf16.msra.mxu0 0
        %762 = vmatprep.mubr.bf16.mxu0 0
        %763 = vmatmul.mubr.bf16.gmra.mrb[0].mxu0 %v635
        %v764 = vpop.f32.mrb[0].mxu0
        %v765 = vadd.f32 %v459, %v764
        %v766 = vpop.f32.mrb[0].mxu0
        %v767 = vpop.f32.mrb[0].mxu0
        %v768 = vadd.f32 %v459, %v767
        %v769 = vpop.f32.mrb[0].mxu0
        %770 = vmatprep.mubr.bf16.mxu0 0
        %771 = vmatmul.mubr.bf16.gmra.mrb[0].mxu0 %v638
        %v772 = vpop.f32.mrb[0].mxu0
        %v773 = vadd.f32 %v459, %v772
        %v774 = vpop.f32.mrb[0].mxu0
        %v775 = vpop.f32.mrb[0].mxu0
        %v776 = vadd.f32 %v459, %v775
        %v777 = vpop.f32.mrb[0].mxu0
        %778 = vmatprep.mubr.bf16.mxu0 0
        %779 = vmatmul.mubr.bf16.gmra.mrb[0].mxu0 %v641
        %v780 = vpop.f32.mrb[0].mxu0
        %v781 = vadd.f32 %v459, %v780
        %v782 = vpop.f32.mrb[0].mxu0
        %v783 = vpop.f32.mrb[0].mxu0
        %v784 = vadd.f32 %v459, %v783
        %v785 = vpop.f32.mrb[0].mxu0
        %786 = vmatprep.mubr.bf16.mxu0 0
        %787 = vmatmul.mubr.bf16.gmra.mrb[0].mxu0 %v644
        %v788 = vpop.f32.mrb[0].mxu0
        %v789 = vadd.f32 %v459, %v788
        %v790 = vpop.f32.mrb[0].mxu0
        %v791 = vpop.f32.mrb[0].mxu0
        %v792 = vadd.f32 %v459, %v791
        %v793 = vpop.f32.mrb[0].mxu0
        %794 = vmatprep.mubr.bf16.mxu0 0
        %795 = vmatmul.mubr.bf16.gmra.mrb[0].mxu0 %v647
        %v796 = vpop.f32.mrb[0].mxu0
        %v797 = vadd.f32 %v459, %v796
        %v798 = vpop.f32.mrb[0].mxu0
        %v799 = vpop.f32.mrb[0].mxu0
        %v800 = vadd.f32 %v459, %v799
        %v801 = vpop.f32.mrb[0].mxu0
        %802 = vmatprep.mubr.bf16.mxu0 0
        %803 = vmatmul.mubr.bf16.gmra.mrb[0].mxu0 %v650
        %v804 = vpop.f32.mrb[0].mxu0
        %v805 = vadd.f32 %v459, %v804
        %v806 = vpop.f32.mrb[0].mxu0
        %v807 = vpop.f32.mrb[0].mxu0
        %v808 = vadd.f32 %v459, %v807
        %v809 = vpop.f32.mrb[0].mxu0
        %810 = vmatprep.mubr.bf16.mxu0 0
        %811 = vmatmul.mubr.bf16.gmra.mrb[0].mxu0 %v653
        %v812 = vpop.f32.mrb[0].mxu0
        %v813 = vadd.f32 %v459, %v812
        %v814 = vpop.f32.mrb[0].mxu0
        %v815 = vpop.f32.mrb[0].mxu0
        %v816 = vadd.f32 %v459, %v815
        %v817 = vpop.f32.mrb[0].mxu0
        %818 = vmatprep.mubr.bf16.mxu0 0
        %819 = vmatmul.mubr.bf16.gmra.mrb[0].mxu0 %v656
        %v820 = vpop.f32.mrb[0].mxu0
        %v821 = vadd.f32 %v459, %v820
        %v822 = vpop.f32.mrb[0].mxu0
        %v823 = vpop.f32.mrb[0].mxu0
        %v824 = vadd.f32 %v459, %v823
        %v825 = vpop.f32.mrb[0].mxu0
        %826 = vmatprep.mubr.bf16.mxu0 0
        %827 = vmatmul.mubr.bf16.gmra.mrb[0].mxu0 %v659
        %v828 = vpop.f32.mrb[0].mxu0
        %v829 = vadd.f32 %v459, %v828
        %v830 = vpop.f32.mrb[0].mxu0
        %v831 = vpop.f32.mrb[0].mxu0
        %v832 = vadd.f32 %v459, %v831
        %v833 = vpop.f32.mrb[0].mxu0
        %834 = vmatprep.mubr.bf16.mxu0 0
        %835 = vmatmul.mubr.bf16.gmra.mrb[0].mxu0 %v662
        %v836 = vpop.f32.mrb[0].mxu0
        %v837 = vadd.f32 %v459, %v836
        %v838 = vpop.f32.mrb[0].mxu0
        %v839 = vpop.f32.mrb[0].mxu0
        %v840 = vadd.f32 %v459, %v839
        %v841 = vpop.f32.mrb[0].mxu0
        %842 = vmatprep.mubr.bf16.mxu0 0
        %843 = vmatmul.mubr.bf16.gmra.mrb[0].mxu0 %v665
        %v844 = vpop.f32.mrb[0].mxu0
        %v845 = vadd.f32 %v459, %v844
        %v846 = vpop.f32.mrb[0].mxu0
        %v847 = vpop.f32.mrb[0].mxu0
        %v848 = vadd.f32 %v459, %v847
        %v849 = vpop.f32.mrb[0].mxu0
        %850 = vmatprep.mubr.bf16.mxu0 0
        %851 = vmatmul.mubr.bf16.gmra.mrb[0].mxu0 %v668
        %v852 = vpop.f32.mrb[0].mxu0
        %v853 = vadd.f32 %v459, %v852
        %v854 = vpop.f32.mrb[0].mxu0
        %v855 = vpop.f32.mrb[0].mxu0
        %v856 = vadd.f32 %v459, %v855
        %v857 = vpop.f32.mrb[0].mxu0
        %858 = vmatprep.mubr.bf16.mxu0 0
        %859 = vmatmul.mubr.bf16.gmra.mrb[0].mxu0 %v671
        %v860 = vpop.f32.mrb[0].mxu0
        %v861 = vadd.f32 %v459, %v860
        %v862 = vpop.f32.mrb[0].mxu0
        %v863 = vpop.f32.mrb[0].mxu0
        %v864 = vadd.f32 %v459, %v863
        %v865 = vpop.f32.mrb[0].mxu0
        %866 = vmatprep.mubr.bf16.mxu0 0
        %867 = vmatmul.mubr.bf16.gmra.mrb[0].mxu0 %v674
        %v868 = vpop.f32.mrb[0].mxu0
        %v869 = vadd.f32 %v459, %v868
        %v870 = vpop.f32.mrb[0].mxu0
        %v871 = vpop.f32.mrb[0].mxu0
        %v872 = vadd.f32 %v459, %v871
        %v873 = vpop.f32.mrb[0].mxu0
        %874 = vmatprep.mubr.bf16.mxu0 0
        %875 = vmatmul.mubr.bf16.gmra.mrb[0].mxu0 %v677
        %v876 = vpop.f32.mrb[0].mxu0
        %v877 = vadd.f32 %v459, %v876
        %v878 = vpop.f32.mrb[0].mxu0
        %v879 = vpop.f32.mrb[0].mxu0
        %v880 = vadd.f32 %v459, %v879
        %v881 = vpop.f32.mrb[0].mxu0
        %882 = vmatprep.mubr.bf16.mxu0 0
        %883 = vmatmul.mubr.bf16.gmra.mrb[0].mxu0 %v680
        %v884 = vpop.f32.mrb[0].mxu0
        %v885 = vadd.f32 %v459, %v884
        %v886 = vpop.f32.mrb[0].mxu0
        %v887 = vpop.f32.mrb[0].mxu0
        %v888 = vadd.f32 %v459, %v887
        %v889 = vpop.f32.mrb[0].mxu0
        %890 = vmatprep.mubr.bf16.mxu0 0
        %891 = vmatmul.mubr.bf16.gmra.mrb[0].mxu0 %v683
        %v892 = vpop.f32.mrb[0].mxu0
        %v893 = vadd.f32 %v459, %v892
        %v894 = vpop.f32.mrb[0].mxu0
        %v895 = vpop.f32.mrb[0].mxu0
        %v896 = vadd.f32 %v459, %v895
        %v897 = vpop.f32.mrb[0].mxu0
        %898 = vmatprep.mubr.bf16.mxu0 0
        %899 = vmatmul.mubr.bf16.gmra.mrb[0].mxu0 %v686
        %v900 = vpop.f32.mrb[0].mxu0
        %v901 = vadd.f32 %v459, %v900
        %v902 = vpop.f32.mrb[0].mxu0
        %v903 = vpop.f32.mrb[0].mxu0
        %v904 = vadd.f32 %v459, %v903
        %v905 = vpop.f32.mrb[0].mxu0
        %906 = vmatprep.mubr.bf16.mxu0 0
        %907 = vmatmul.mubr.bf16.gmra.mrb[0].mxu0 %v689
        %v908 = vpop.f32.mrb[0].mxu0
        %v909 = vadd.f32 %v459, %v908
        %v910 = vpop.f32.mrb[0].mxu0
        %v911 = vpop.f32.mrb[0].mxu0
        %v912 = vadd.f32 %v459, %v911
        %v913 = vpop.f32.mrb[0].mxu0
        %914 = vmatprep.mubr.bf16.mxu0 0
        %915 = vmatmul.mubr.bf16.gmra.mrb[0].mxu0 %v692
        %v916 = vpop.f32.mrb[0].mxu0
        %v917 = vadd.f32 %v459, %v916
        %v918 = vpop.f32.mrb[0].mxu0
        %v919 = vpop.f32.mrb[0].mxu0
        %v920 = vadd.f32 %v459, %v919
        %v921 = vpop.f32.mrb[0].mxu0
        %922 = vmatprep.mubr.bf16.mxu0 0
        %923 = vmatmul.mubr.bf16.gmra.mrb[0].mxu0 %v695
        %v924 = vpop.f32.mrb[0].mxu0
        %v925 = vadd.f32 %v459, %v924
        %v926 = vpop.f32.mrb[0].mxu0
        %v927 = vpop.f32.mrb[0].mxu0
        %v928 = vadd.f32 %v459, %v927
        %v929 = vpop.f32.mrb[0].mxu0
        %930 = vmatprep.mubr.bf16.mxu0 0
        %931 = vmatmul.mubr.bf16.gmra.mrb[0].mxu0 %v698
        %v932 = vpop.f32.mrb[0].mxu0
        %v933 = vadd.f32 %v459, %v932
        %v934 = vpop.f32.mrb[0].mxu0
        %v935 = vpop.f32.mrb[0].mxu0
        %v936 = vadd.f32 %v459, %v935
        %v937 = vpop.f32.mrb[0].mxu0
        %938 = vmatprep.mubr.bf16.mxu0 0
        %939 = vmatmul.mubr.bf16.gmra.mrb[0].mxu0 %v701
        %v940 = vpop.f32.mrb[0].mxu0
        %v941 = vadd.f32 %v459, %v940
        %v942 = vpop.f32.mrb[0].mxu0
        %v943 = vpop.f32.mrb[0].mxu0
        %v944 = vadd.f32 %v459, %v943
        %v945 = vpop.f32.mrb[0].mxu0
        %946 = vmatprep.mubr.bf16.mxu0 0
        %947 = vmatmul.mubr.bf16.gmra.mrb[0].mxu0 %v704
        %v948 = vpop.f32.mrb[0].mxu0
        %v949 = vadd.f32 %v459, %v948
        %v950 = vpop.f32.mrb[0].mxu0
        %v951 = vpop.f32.mrb[0].mxu0
        %v952 = vadd.f32 %v459, %v951
        %v953 = vpop.f32.mrb[0].mxu0
        %954 = vmatprep.mubr.bf16.mxu0 0
        %955 = vmatmul.mubr.bf16.gmra.mrb[0].mxu0 %v707
        %v956 = vpop.f32.mrb[0].mxu0
        %v957 = vadd.f32 %v459, %v956
        %v958 = vpop.f32.mrb[0].mxu0
        %v959 = vpop.f32.mrb[0].mxu0
        %v960 = vadd.f32 %v459, %v959
        %v961 = vpop.f32.mrb[0].mxu0
        %962 = vmatprep.mubr.bf16.mxu0 0
        %963 = vmatmul.mubr.bf16.gmra.mrb[0].mxu0 %v710
        %v964 = vpop.f32.mrb[0].mxu0
        %v965 = vadd.f32 %v459, %v964
        %v966 = vpop.f32.mrb[0].mxu0
        %v967 = vpop.f32.mrb[0].mxu0
        %v968 = vadd.f32 %v459, %v967
        %v969 = vpop.f32.mrb[0].mxu0
        %970 = vmatprep.mubr.bf16.mxu0 0
        %971 = vmatmul.mubr.bf16.gmra.mrb[0].mxu0 %v713
        %v972 = vpop.f32.mrb[0].mxu0
        %v973 = vadd.f32 %v459, %v972
        %v974 = vpop.f32.mrb[0].mxu0
        %v975 = vpop.f32.mrb[0].mxu0
        %v976 = vadd.f32 %v459, %v975
        %v977 = vpop.f32.mrb[0].mxu0
        %978 = vmatprep.mubr.bf16.mxu0 0
        %979 = vmatmul.mubr.bf16.gmra.mrb[0].mxu0 %v716
        %v980 = vpop.f32.mrb[0].mxu0
        %v981 = vadd.f32 %v459, %v980
        %v982 = vpop.f32.mrb[0].mxu0
        %v983 = vpop.f32.mrb[0].mxu0
        %v984 = vadd.f32 %v459, %v983
        %v985 = vpop.f32.mrb[0].mxu0
        %986 = vmatprep.mubr.bf16.mxu0 0
        %987 = vmatmul.mubr.bf16.gmra.mrb[0].mxu0 %v719
        %v988 = vpop.f32.mrb[0].mxu0
        %v989 = vadd.f32 %v459, %v988
        %v990 = vpop.f32.mrb[0].mxu0
        %v991 = vpop.f32.mrb[0].mxu0
        %v992 = vadd.f32 %v459, %v991
        %v993 = vpop.f32.mrb[0].mxu0
        %994 = vmatprep.mubr.bf16.mxu0 0
        %995 = vmatmul.mubr.bf16.gmra.mrb[0].mxu0 %v722
        %v996 = vpop.f32.mrb[0].mxu0
        %v997 = vadd.f32 %v459, %v996
        %v998 = vpop.f32.mrb[0].mxu0
        %v999 = vpop.f32.mrb[0].mxu0
        %v1000 = vadd.f32 %v459, %v999
        %v1001 = vpop.f32.mrb[0].mxu0
        %1002 = vmatprep.mubr.bf16.mxu0 0
        %1003 = vmatmul.mubr.bf16.gmra.mrb[0].mxu0 %v725
        %v1004 = vpop.f32.mrb[0].mxu0
        %v1005 = vadd.f32 %v459, %v1004
        %v1006 = vpop.f32.mrb[0].mxu0
        %v1007 = vpop.f32.mrb[0].mxu0
        %v1008 = vadd.f32 %v459, %v1007
        %v1009 = vpop.f32.mrb[0].mxu0
        %1010 = vmatprep.mubr.bf16.mxu0 0
        %1011 = vmatmul.mubr.bf16.gmra.mrb[0].mxu0 %v728
        %v1012 = vpop.f32.mrb[0].mxu0
        %v1013 = vadd.f32 %v459, %v1012
        %v1014 = vpop.f32.mrb[0].mxu0
        %v1015 = vpop.f32.mrb[0].mxu0
        %v1016 = vadd.f32 %v459, %v1015
        %v1017 = vpop.f32.mrb[0].mxu0
        %1018 = vdwg.mxu0
        %v1019 = vmax.f32 %v765, 0.0
        %v1020 = vmax.f32 %v768, 0.0
        %v1021 = vmax.f32 %v773, 0.0
        %v1022 = vmax.f32 %v776, 0.0
        %v1023 = vmax.f32 %v781, 0.0
        %v1024 = vmax.f32 %v784, 0.0
        %v1025 = vmax.f32 %v789, 0.0
        %v1026 = vmax.f32 %v792, 0.0
        %v1027 = vmax.f32 %v797, 0.0
        %v1028 = vmax.f32 %v800, 0.0
        %v1029 = vmax.f32 %v805, 0.0
        %v1030 = vmax.f32 %v808, 0.0
        %v1031 = vmax.f32 %v813, 0.0
        %v1032 = vmax.f32 %v816, 0.0
        %v1033 = vmax.f32 %v821, 0.0
        %v1034 = vmax.f32 %v824, 0.0
        %v1035 = vmax.f32 %v829, 0.0
        %v1036 = vmax.f32 %v832, 0.0
        %v1037 = vmax.f32 %v837, 0.0
        %v1038 = vmax.f32 %v840, 0.0
        %v1039 = vmax.f32 %v845, 0.0
        %v1040 = vmax.f32 %v848, 0.0
        %v1041 = vmax.f32 %v853, 0.0
        %v1042 = vmax.f32 %v856, 0.0
        %v1043 = vmax.f32 %v861, 0.0
        %v1044 = vmax.f32 %v864, 0.0
        %v1045 = vmax.f32 %v869, 0.0
        %v1046 = vmax.f32 %v872, 0.0
        %v1047 = vmax.f32 %v877, 0.0
        %v1048 = vmax.f32 %v880, 0.0
        %v1049 = vmax.f32 %v885, 0.0
        %v1050 = vmax.f32 %v888, 0.0
        %v1051 = vmax.f32 %v893, 0.0
        %v1052 = vmax.f32 %v896, 0.0
        %v1053 = vmax.f32 %v901, 0.0
        %v1054 = vmax.f32 %v904, 0.0
        %v1055 = vmax.f32 %v909, 0.0
        %v1056 = vmax.f32 %v912, 0.0
        %v1057 = vmax.f32 %v917, 0.0
        %v1058 = vmax.f32 %v920, 0.0
        %v1059 = vmax.f32 %v925, 0.0
        %v1060 = vmax.f32 %v928, 0.0
        %v1061 = vmax.f32 %v933, 0.0
        %v1062 = vmax.f32 %v936, 0.0
        %v1063 = vmax.f32 %v941, 0.0
        %v1064 = vmax.f32 %v944, 0.0
        %v1065 = vmax.f32 %v949, 0.0
        %v1066 = vmax.f32 %v952, 0.0
        %v1067 = vmax.f32 %v957, 0.0
        %v1068 = vmax.f32 %v960, 0.0
        %v1069 = vmax.f32 %v965, 0.0
        %v1070 = vmax.f32 %v968, 0.0
        %v1071 = vmax.f32 %v973, 0.0
        %v1072 = vmax.f32 %v976, 0.0
        %v1073 = vmax.f32 %v981, 0.0
        %v1074 = vmax.f32 %v984, 0.0
        %v1075 = vmax.f32 %v989, 0.0
        %v1076 = vmax.f32 %v992, 0.0
        %v1077 = vmax.f32 %v997, 0.0
        %v1078 = vmax.f32 %v1000, 0.0
        %v1079 = vmax.f32 %v1005, 0.0
        %v1080 = vmax.f32 %v1008, 0.0
        %v1081 = vmax.f32 %v1013, 0.0
        %v1082 = vmax.f32 %v1016, 0.0
        %v1083 = vmax.f32 %v1019, %v1021
        %v1084 = vmax.f32 %v1020, %v1022
        %v1085 = vmax.f32 %v1027, %v1029
        %v1086 = vmax.f32 %v1028, %v1030
        %v1087 = vmax.f32 %v1035, %v1037
        %v1088 = vmax.f32 %v1036, %v1038
        %v1089 = vmax.f32 %v1043, %v1045
        %v1090 = vmax.f32 %v1044, %v1046
        %v1091 = vmax.f32 %v1051, %v1053
        %v1092 = vmax.f32 %v1052, %v1054
        %v1093 = vmax.f32 %v1059, %v1061
        %v1094 = vmax.f32 %v1060, %v1062
        %v1095 = vmax.f32 %v1067, %v1069
        %v1096 = vmax.f32 %v1068, %v1070
        %v1097 = vmax.f32 %v1075, %v1077
        %v1098 = vmax.f32 %v1076, %v1078
        %v1099 = vmax.f32 %v1083, %v1023
        %v1100 = vmax.f32 %v1084, %v1024
        %v1101 = vmax.f32 %v1085, %v1031
        %v1102 = vmax.f32 %v1086, %v1032
        %v1103 = vmax.f32 %v1087, %v1039
        %v1104 = vmax.f32 %v1088, %v1040
        %v1105 = vmax.f32 %v1089, %v1047
        %v1106 = vmax.f32 %v1090, %v1048
        %v1107 = vmax.f32 %v1091, %v1055
        %v1108 = vmax.f32 %v1092, %v1056
        %v1109 = vmax.f32 %v1093, %v1063
        %v1110 = vmax.f32 %v1094, %v1064
        %v1111 = vmax.f32 %v1095, %v1071
        %v1112 = vmax.f32 %v1096, %v1072
        %v1113 = vmax.f32 %v1097, %v1079
        %v1114 = vmax.f32 %v1098, %v1080
        %v1115 = vmax.f32 %v1099, %v1025
        %v1116 = vmax.f32 %v1100, %v1026
        %v1117 = vmax.f32 %v1101, %v1033
        %v1118 = vmax.f32 %v1102, %v1034
        %v1119 = vmax.f32 %v1103, %v1041
        %v1120 = vmax.f32 %v1104, %v1042
        %v1121 = vmax.f32 %v1105, %v1049
        %v1122 = vmax.f32 %v1106, %v1050
        %v1123 = vmax.f32 %v1107, %v1057
        %v1124 = vmax.f32 %v1108, %v1058
        %v1125 = vmax.f32 %v1109, %v1065
        %v1126 = vmax.f32 %v1110, %v1066
        %v1127 = vmax.f32 %v1111, %v1073
        %v1128 = vmax.f32 %v1112, %v1074
        %v1129 = vmax.f32 %v1113, %v1081
        %v1130 = vmax.f32 %v1114, %v1082
        %v1131 = vld [vmem:[%s383] sm:$0xff]
        %v1132 = vld [vmem:[%s383 + $0x8] sm:$0xff]
        %v1133 = vld [vmem:[%s383 + $0x10] sm:$0xff]
        %v1134 = vld [vmem:[%s383 + $0x18] sm:$0xff]
        %v1135 = vld [vmem:[%s383 + $0x20] sm:$0xff]
        %v1136 = vld [vmem:[%s383 + $0x28] sm:$0xff]
        %v1137 = vld [vmem:[%s383 + $0x30] sm:$0xff]
        %v1138 = vld [vmem:[%s383 + $0x38] sm:$0xff]
        %v1139 = vld [vmem:[%s383 + $0x40] sm:$0xff]
        %v1140 = vld [vmem:[%s383 + $0x48] sm:$0xff]
        %v1141 = vld [vmem:[%s383 + $0x50] sm:$0xff]
        %v1142 = vld [vmem:[%s383 + $0x58] sm:$0xff]
        %v1143 = vld [vmem:[%s383 + $0x60] sm:$0xff]
        %v1144 = vld [vmem:[%s383 + $0x68] sm:$0xff]
        %v1145 = vld [vmem:[%s383 + $0x70] sm:$0xff]
        %v1146 = vld [vmem:[%s383 + $0x78] sm:$0xff]
        %1148 = vset.pattern.permute.xlu0 0
        %1149 = vperm.xlu0 %1148, %v1131
        %v1150 = vpop.permute.xlu0 %1149
        %1153 = vset.pattern.permute.xlu0 0
        %1154 = vperm.xlu0 %1153, %v1132
        %v1155 = vpop.permute.xlu0 %1154
        %1158 = vset.pattern.permute.xlu0 0
        %1159 = vperm.xlu0 %1158, %v1133
        %v1160 = vpop.permute.xlu0 %1159
        %1163 = vset.pattern.permute.xlu0 0
        %1164 = vperm.xlu0 %1163, %v1134
        %v1165 = vpop.permute.xlu0 %1164
        %1168 = vset.pattern.permute.xlu0 0
        %1169 = vperm.xlu0 %1168, %v1135
        %v1170 = vpop.permute.xlu0 %1169
        %1173 = vset.pattern.permute.xlu0 0
        %1174 = vperm.xlu0 %1173, %v1136
        %v1175 = vpop.permute.xlu0 %1174
        %1178 = vset.pattern.permute.xlu0 0
        %1179 = vperm.xlu0 %1178, %v1137
        %v1180 = vpop.permute.xlu0 %1179
        %1183 = vset.pattern.permute.xlu0 0
        %1184 = vperm.xlu0 %1183, %v1138
        %v1185 = vpop.permute.xlu0 %1184
        %1188 = vset.pattern.permute.xlu0 0
        %1189 = vperm.xlu0 %1188, %v1139
        %v1190 = vpop.permute.xlu0 %1189
        %1193 = vset.pattern.permute.xlu0 0
        %1194 = vperm.xlu0 %1193, %v1140
        %v1195 = vpop.permute.xlu0 %1194
        %1198 = vset.pattern.permute.xlu0 0
        %1199 = vperm.xlu0 %1198, %v1141
        %v1200 = vpop.permute.xlu0 %1199
        %1203 = vset.pattern.permute.xlu0 0
        %1204 = vperm.xlu0 %1203, %v1142
        %v1205 = vpop.permute.xlu0 %1204
        %1208 = vset.pattern.permute.xlu0 0
        %1209 = vperm.xlu0 %1208, %v1143
        %v1210 = vpop.permute.xlu0 %1209
        %1213 = vset.pattern.permute.xlu0 0
        %1214 = vperm.xlu0 %1213, %v1144
        %v1215 = vpop.permute.xlu0 %1214
        %1218 = vset.pattern.permute.xlu0 0
        %1219 = vperm.xlu0 %1218, %v1145
        %v1220 = vpop.permute.xlu0 %1219
        %1223 = vset.pattern.permute.xlu0 0
        %1224 = vperm.xlu0 %1223, %v1146
        %v1225 = vpop.permute.xlu0 %1224
        %v1227 = vmul.f32 %v1115, %v1150
        %v1228 = vmul.f32 %v1116, %v1155
        %v1229 = vmul.f32 %v1117, %v1160
        %v1230 = vmul.f32 %v1118, %v1165
        %v1231 = vmul.f32 %v1119, %v1170
        %v1232 = vmul.f32 %v1120, %v1175
        %v1233 = vmul.f32 %v1121, %v1180
        %v1234 = vmul.f32 %v1122, %v1185
        %v1235 = vmul.f32 %v1123, %v1190
        %v1236 = vmul.f32 %v1124, %v1195
        %v1237 = vmul.f32 %v1125, %v1200
        %v1238 = vmul.f32 %v1126, %v1205
        %v1239 = vmul.f32 %v1127, %v1210
        %v1240 = vmul.f32 %v1128, %v1215
        %v1241 = vmul.f32 %v1129, %v1220
        %v1242 = vmul.f32 %v1130, %v1225
        %v1243 = vld [vmem:[%s4] sm:$0xff]
        %v1244 = vld [vmem:[%s4 + $0x8] sm:$0xff]
        %v1245 = vld [vmem:[%s4 + $0x10] sm:$0xff]
        %v1246 = vld [vmem:[%s4 + $0x18] sm:$0xff]
        %v1248 = vsel %vm633, %v1227, 0
        %v1251 = vsel %vm633, %v1228, 0
        %v1254 = vsel %vm633, %v1229, 0
        %v1257 = vsel %vm633, %v1230, 0
        %v1260 = vsel %vm633, %v1231, 0
        %v1263 = vsel %vm633, %v1232, 0
        %v1266 = vsel %vm633, %v1233, 0
        %v1269 = vsel %vm633, %v1234, 0
        %v1272 = vsel %vm633, %v1235, 0
        %v1275 = vsel %vm633, %v1236, 0
        %v1278 = vsel %vm633, %v1237, 0
        %v1281 = vsel %vm633, %v1238, 0
        %v1284 = vsel %vm633, %v1239, 0
        %v1287 = vsel %vm633, %v1240, 0
        %v1290 = vsel %vm633, %v1241, 0
        %v1293 = vsel %vm633, %v1242, 0
        %1295 = vmatprep.subr.mxu0 0.0
        %1296 = vmatpush1.msra.mxu0 %v1243
        %1297 = vmatprep.subr.mxu0 0.0
        %1298 = vmatpush1.msra.mxu0 %v1244
        %1299 = vmatprep.subr.mxu0 0.0
        %1300 = vmatpush1.msra.mxu0 %v1245
        %1301 = vmatprep.subr.mxu0 0.0
        %1302 = vmatpush1.msra.mxu0 %v1246
        %1303 = vmatprep.subr.mxu0 0.0
        %1304 = vmatpush1.msra.mxu0 0.0
        %1305 = vmatprep.subr.mxu0 0.0
        %1306 = vmatpush1.msra.mxu0 0.0
        %1307 = vmatprep.subr.mxu0 0.0
        %1308 = vmatpush1.msra.mxu0 0.0
        %1309 = vmatprep.subr.mxu0 0.0
        %1310 = vmatpush1.msra.mxu0 0.0
        %1311 = vmatprep.subr.mxu0 0.0
        %1312 = vmatpush1.msra.mxu0 0.0
        %1313 = vmatprep.subr.mxu0 0.0
        %1314 = vmatpush1.msra.mxu0 0.0
        %1315 = vmatprep.subr.mxu0 0.0
        %1316 = vmatpush1.msra.mxu0 0.0
        %1317 = vmatprep.subr.mxu0 0.0
        %1318 = vmatpush1.msra.mxu0 0.0
        %1319 = vmatprep.subr.mxu0 0.0
        %1320 = vmatpush1.msra.mxu0 0.0
        %1321 = vmatprep.subr.mxu0 0.0
        %1322 = vmatpush1.msra.mxu0 0.0
        %1323 = vmatprep.subr.mxu0 0.0
        %1324 = vmatpush1.msra.mxu0 0.0
        %1325 = vmatprep.subr.mxu0 0.0
        %1326 = vmatpush1.msra.mxu0 0.0
        %1327 = vmatprep.subr.mxu0 0.0
        %1328 = vmatpush1.msra.mxu0 0.0
        %1329 = vmatprep.subr.mxu0 0.0
        %1330 = vmatpush1.msra.mxu0 0.0
        %1331 = vmatprep.subr.mxu0 0.0
        %1332 = vmatpush1.msra.mxu0 0.0
        %1333 = vmatprep.subr.mxu0 0.0
        %1334 = vmatpush1.msra.mxu0 0.0
        %1335 = vmatprep.subr.mxu0 0.0
        %1336 = vmatpush1.msra.mxu0 0.0
        %1337 = vmatprep.subr.mxu0 0.0
        %1338 = vmatpush1.msra.mxu0 0.0
        %1339 = vmatprep.subr.mxu0 0.0
        %1340 = vmatpush1.msra.mxu0 0.0
        %1341 = vmatprep.subr.mxu0 0.0
        %1342 = vmatpush1.msra.mxu0 0.0
        %1343 = vmatprep.subr.mxu0 0.0
        %1344 = vmatpush1.msra.mxu0 0.0
        %1345 = vmatprep.subr.mxu0 0.0
        %1346 = vmatpush1.msra.mxu0 0.0
        %1347 = vmatprep.subr.mxu0 0.0
        %1348 = vmatpush1.msra.mxu0 0.0
        %1349 = vmatprep.subr.mxu0 0.0
        %1350 = vmatpush1.msra.mxu0 0.0
        %1351 = vmatprep.subr.mxu0 0.0
        %1352 = vmatpush1.msra.mxu0 0.0
        %1353 = vmatprep.subr.mxu0 0.0
        %1354 = vmatpush1.msra.mxu0 0.0
        %1355 = vmatprep.subr.mxu0 0.0
        %1356 = vmatpush1.msra.mxu0 0.0
        %1357 = vmatprep.subr.mxu0 0.0
        %1358 = vmatpush1.msra.mxu0 0.0
        %1359 = vmatprep.mubr.f32.mxu0 0.0
        %1360 = vmatmul.mubr.f32.gmra.mrb[0].mxu0 %v1248
        %v1361 = vpop.f32.mrb[0].mxu0
        %v1362 = vadd.f32 0.0, %v1361
        %v1363 = vpop.f32.mrb[0].mxu0
        %1364 = vmatprep.mubr.f32.mxu0 0.0
        %1365 = vmatmul.mubr.f32.gmra.mrb[0].mxu0 %v1251
        %v1366 = vpop.f32.mrb[0].mxu0
        %v1367 = vadd.f32 0.0, %v1366
        %v1368 = vpop.f32.mrb[0].mxu0
        %1369 = vmatprep.mubr.f32.mxu0 0.0
        %1370 = vmatmul.mubr.f32.gmra.mrb[0].mxu0 %v1254
        %v1371 = vpop.f32.mrb[0].mxu0
        %v1372 = vadd.f32 0.0, %v1371
        %v1373 = vpop.f32.mrb[0].mxu0
        %1374 = vmatprep.mubr.f32.mxu0 0.0
        %1375 = vmatmul.mubr.f32.gmra.mrb[0].mxu0 %v1257
        %v1376 = vpop.f32.mrb[0].mxu0
        %v1377 = vadd.f32 0.0, %v1376
        %v1378 = vpop.f32.mrb[0].mxu0
        %1379 = vmatprep.mubr.f32.mxu0 0.0
        %1380 = vmatmul.mubr.f32.gmra.mrb[0].mxu0 %v1260
        %v1381 = vpop.f32.mrb[0].mxu0
        %v1382 = vadd.f32 0.0, %v1381
        %v1383 = vpop.f32.mrb[0].mxu0
        %1384 = vmatprep.mubr.f32.mxu0 0.0
        %1385 = vmatmul.mubr.f32.gmra.mrb[0].mxu0 %v1263
        %v1386 = vpop.f32.mrb[0].mxu0
        %v1387 = vadd.f32 0.0, %v1386
        %v1388 = vpop.f32.mrb[0].mxu0
        %1389 = vmatprep.mubr.f32.mxu0 0.0
        %1390 = vmatmul.mubr.f32.gmra.mrb[0].mxu0 %v1266
        %v1391 = vpop.f32.mrb[0].mxu0
        %v1392 = vadd.f32 0.0, %v1391
        %v1393 = vpop.f32.mrb[0].mxu0
        %1394 = vmatprep.mubr.f32.mxu0 0.0
        %1395 = vmatmul.mubr.f32.gmra.mrb[0].mxu0 %v1269
        %v1396 = vpop.f32.mrb[0].mxu0
        %v1397 = vadd.f32 0.0, %v1396
        %v1398 = vpop.f32.mrb[0].mxu0
        %1399 = vmatprep.mubr.f32.mxu0 0.0
        %1400 = vmatmul.mubr.f32.gmra.mrb[0].mxu0 %v1272
        %v1401 = vpop.f32.mrb[0].mxu0
        %v1402 = vadd.f32 0.0, %v1401
        %v1403 = vpop.f32.mrb[0].mxu0
        %1404 = vmatprep.mubr.f32.mxu0 0.0
        %1405 = vmatmul.mubr.f32.gmra.mrb[0].mxu0 %v1275
        %v1406 = vpop.f32.mrb[0].mxu0
        %v1407 = vadd.f32 0.0, %v1406
        %v1408 = vpop.f32.mrb[0].mxu0
        %1409 = vmatprep.mubr.f32.mxu0 0.0
        %1410 = vmatmul.mubr.f32.gmra.mrb[0].mxu0 %v1278
        %v1411 = vpop.f32.mrb[0].mxu0
        %v1412 = vadd.f32 0.0, %v1411
        %v1413 = vpop.f32.mrb[0].mxu0
        %1414 = vmatprep.mubr.f32.mxu0 0.0
        %1415 = vmatmul.mubr.f32.gmra.mrb[0].mxu0 %v1281
        %v1416 = vpop.f32.mrb[0].mxu0
        %v1417 = vadd.f32 0.0, %v1416
        %v1418 = vpop.f32.mrb[0].mxu0
        %1419 = vmatprep.mubr.f32.mxu0 0.0
        %1420 = vmatmul.mubr.f32.gmra.mrb[0].mxu0 %v1284
        %v1421 = vpop.f32.mrb[0].mxu0
        %v1422 = vadd.f32 0.0, %v1421
        %v1423 = vpop.f32.mrb[0].mxu0
        %1424 = vmatprep.mubr.f32.mxu0 0.0
        %1425 = vmatmul.mubr.f32.gmra.mrb[0].mxu0 %v1287
        %v1426 = vpop.f32.mrb[0].mxu0
        %v1427 = vadd.f32 0.0, %v1426
        %v1428 = vpop.f32.mrb[0].mxu0
        %1429 = vmatprep.mubr.f32.mxu0 0.0
        %1430 = vmatmul.mubr.f32.gmra.mrb[0].mxu0 %v1290
        %v1431 = vpop.f32.mrb[0].mxu0
        %v1432 = vadd.f32 0.0, %v1431
        %v1433 = vpop.f32.mrb[0].mxu0
        %1434 = vmatprep.mubr.f32.mxu0 0.0
        %1435 = vmatmul.mubr.f32.gmra.mrb[0].mxu0 %v1293
        %v1436 = vpop.f32.mrb[0].mxu0
        %v1437 = vadd.f32 0.0, %v1436
        %v1438 = vpop.f32.mrb[0].mxu0
        %1439 = vdwg.mxu0
        %v1440 = vtanh.pop %v1362
        %v1441 = vtanh.pop %v1367
        %v1442 = vtanh.pop %v1372
        %v1443 = vtanh.pop %v1377
        %v1444 = vtanh.pop %v1382
        %v1445 = vtanh.pop %v1387
        %v1446 = vtanh.pop %v1392
        %v1447 = vtanh.pop %v1397
        %v1448 = vtanh.pop %v1402
        %v1449 = vtanh.pop %v1407
        %v1450 = vtanh.pop %v1412
        %v1451 = vtanh.pop %v1417
        %v1452 = vtanh.pop %v1422
        %v1453 = vtanh.pop %v1427
        %v1454 = vtanh.pop %v1432
        %v1455 = vtanh.pop %v1437
        %v1456 = vld [vmem:[%s5] sm:$0xff]
        %v1457 = vld [vmem:[%s5 + $0x8] sm:$0xff]
        %vm1458 = vcmask 130048
        %v1460 = vsel %vm1458, %v1440, 0
        %v1463 = vsel %vm1458, %v1441, 0
        %v1466 = vsel %vm1458, %v1442, 0
        %v1469 = vsel %vm1458, %v1443, 0
        %v1472 = vsel %vm1458, %v1444, 0
        %v1475 = vsel %vm1458, %v1445, 0
        %v1478 = vsel %vm1458, %v1446, 0
        %v1481 = vsel %vm1458, %v1447, 0
        %v1484 = vsel %vm1458, %v1448, 0
        %v1487 = vsel %vm1458, %v1449, 0
        %v1490 = vsel %vm1458, %v1450, 0
        %v1493 = vsel %vm1458, %v1451, 0
        %v1496 = vsel %vm1458, %v1452, 0
        %v1499 = vsel %vm1458, %v1453, 0
        %v1502 = vsel %vm1458, %v1454, 0
        %v1505 = vsel %vm1458, %v1455, 0
        %1507 = vmatprep.subr.mxu0 0.0
        %1508 = vmatpush1.msra.mxu0 %v1456
        %1509 = vmatprep.subr.mxu0 0.0
        %1510 = vmatpush1.msra.mxu0 %v1457
        %1511 = vmatprep.subr.mxu0 0.0
        %1512 = vmatpush1.msra.mxu0 0.0
        %1513 = vmatprep.subr.mxu0 0.0
        %1514 = vmatpush1.msra.mxu0 0.0
        %1515 = vmatprep.subr.mxu0 0.0
        %1516 = vmatpush1.msra.mxu0 0.0
        %1517 = vmatprep.subr.mxu0 0.0
        %1518 = vmatpush1.msra.mxu0 0.0
        %1519 = vmatprep.subr.mxu0 0.0
        %1520 = vmatpush1.msra.mxu0 0.0
        %1521 = vmatprep.subr.mxu0 0.0
        %1522 = vmatpush1.msra.mxu0 0.0
        %1523 = vmatprep.subr.mxu0 0.0
        %1524 = vmatpush1.msra.mxu0 0.0
        %1525 = vmatprep.subr.mxu0 0.0
        %1526 = vmatpush1.msra.mxu0 0.0
        %1527 = vmatprep.subr.mxu0 0.0
        %1528 = vmatpush1.msra.mxu0 0.0
        %1529 = vmatprep.subr.mxu0 0.0
        %1530 = vmatpush1.msra.mxu0 0.0
        %1531 = vmatprep.subr.mxu0 0.0
        %1532 = vmatpush1.msra.mxu0 0.0
        %1533 = vmatprep.subr.mxu0 0.0
        %1534 = vmatpush1.msra.mxu0 0.0
        %1535 = vmatprep.subr.mxu0 0.0
        %1536 = vmatpush1.msra.mxu0 0.0
        %1537 = vmatprep.subr.mxu0 0.0
        %1538 = vmatpush1.msra.mxu0 0.0
        %1539 = vmatprep.subr.mxu0 0.0
        %1540 = vmatpush1.msra.mxu0 0.0
        %1541 = vmatprep.subr.mxu0 0.0
        %1542 = vmatpush1.msra.mxu0 0.0
        %1543 = vmatprep.subr.mxu0 0.0
        %1544 = vmatpush1.msra.mxu0 0.0
        %1545 = vmatprep.subr.mxu0 0.0
        %1546 = vmatpush1.msra.mxu0 0.0
        %1547 = vmatprep.subr.mxu0 0.0
        %1548 = vmatpush1.msra.mxu0 0.0
        %1549 = vmatprep.subr.mxu0 0.0
        %1550 = vmatpush1.msra.mxu0 0.0
        %1551 = vmatprep.subr.mxu0 0.0
        %1552 = vmatpush1.msra.mxu0 0.0
        %1553 = vmatprep.subr.mxu0 0.0
        %1554 = vmatpush1.msra.mxu0 0.0
        %1555 = vmatprep.subr.mxu0 0.0
        %1556 = vmatpush1.msra.mxu0 0.0
        %1557 = vmatprep.subr.mxu0 0.0
        %1558 = vmatpush1.msra.mxu0 0.0
        %1559 = vmatprep.subr.mxu0 0.0
        %1560 = vmatpush1.msra.mxu0 0.0
        %1561 = vmatprep.subr.mxu0 0.0
        %1562 = vmatpush1.msra.mxu0 0.0
        %1563 = vmatprep.subr.mxu0 0.0
        %1564 = vmatpush1.msra.mxu0 0.0
        %1565 = vmatprep.subr.mxu0 0.0
        %1566 = vmatpush1.msra.mxu0 0.0
        %1567 = vmatprep.subr.mxu0 0.0
        %1568 = vmatpush1.msra.mxu0 0.0
        %1569 = vmatprep.subr.mxu0 0.0
        %1570 = vmatpush1.msra.mxu0 0.0
        %1571 = vmatprep.mubr.f32.mxu0 0.0
        %1572 = vmatmul.mubr.f32.gmra.mrb[0].mxu0 %v1460
        %v1573 = vpop.f32.mrb[0].mxu0
        %v1574 = vadd.f32 0.0, %v1573
        %v1575 = vpop.f32.mrb[0].mxu0
        %1576 = vmatprep.mubr.f32.mxu0 0.0
        %1577 = vmatmul.mubr.f32.gmra.mrb[0].mxu0 %v1463
        %v1578 = vpop.f32.mrb[0].mxu0
        %v1579 = vadd.f32 0.0, %v1578
        %v1580 = vpop.f32.mrb[0].mxu0
        %1581 = vmatprep.mubr.f32.mxu0 0.0
        %1582 = vmatmul.mubr.f32.gmra.mrb[0].mxu0 %v1466
        %v1583 = vpop.f32.mrb[0].mxu0
        %v1584 = vadd.f32 0.0, %v1583
        %v1585 = vpop.f32.mrb[0].mxu0
        %1586 = vmatprep.mubr.f32.mxu0 0.0
        %1587 = vmatmul.mubr.f32.gmra.mrb[0].mxu0 %v1469
        %v1588 = vpop.f32.mrb[0].mxu0
        %v1589 = vadd.f32 0.0, %v1588
        %v1590 = vpop.f32.mrb[0].mxu0
        %1591 = vmatprep.mubr.f32.mxu0 0.0
        %1592 = vmatmul.mubr.f32.gmra.mrb[0].mxu0 %v1472
        %v1593 = vpop.f32.mrb[0].mxu0
        %v1594 = vadd.f32 0.0, %v1593
        %v1595 = vpop.f32.mrb[0].mxu0
        %1596 = vmatprep.mubr.f32.mxu0 0.0
        %1597 = vmatmul.mubr.f32.gmra.mrb[0].mxu0 %v1475
        %v1598 = vpop.f32.mrb[0].mxu0
        %v1599 = vadd.f32 0.0, %v1598
        %v1600 = vpop.f32.mrb[0].mxu0
        %1601 = vmatprep.mubr.f32.mxu0 0.0
        %1602 = vmatmul.mubr.f32.gmra.mrb[0].mxu0 %v1478
        %v1603 = vpop.f32.mrb[0].mxu0
        %v1604 = vadd.f32 0.0, %v1603
        %v1605 = vpop.f32.mrb[0].mxu0
        %1606 = vmatprep.mubr.f32.mxu0 0.0
        %1607 = vmatmul.mubr.f32.gmra.mrb[0].mxu0 %v1481
        %v1608 = vpop.f32.mrb[0].mxu0
        %v1609 = vadd.f32 0.0, %v1608
        %v1610 = vpop.f32.mrb[0].mxu0
        %1611 = vmatprep.mubr.f32.mxu0 0.0
        %1612 = vmatmul.mubr.f32.gmra.mrb[0].mxu0 %v1484
        %v1613 = vpop.f32.mrb[0].mxu0
        %v1614 = vadd.f32 0.0, %v1613
        %v1615 = vpop.f32.mrb[0].mxu0
        %1616 = vmatprep.mubr.f32.mxu0 0.0
        %1617 = vmatmul.mubr.f32.gmra.mrb[0].mxu0 %v1487
        %v1618 = vpop.f32.mrb[0].mxu0
        %v1619 = vadd.f32 0.0, %v1618
        %v1620 = vpop.f32.mrb[0].mxu0
        %1621 = vmatprep.mubr.f32.mxu0 0.0
        %1622 = vmatmul.mubr.f32.gmra.mrb[0].mxu0 %v1490
        %v1623 = vpop.f32.mrb[0].mxu0
        %v1624 = vadd.f32 0.0, %v1623
        %v1625 = vpop.f32.mrb[0].mxu0
        %1626 = vmatprep.mubr.f32.mxu0 0.0
        %1627 = vmatmul.mubr.f32.gmra.mrb[0].mxu0 %v1493
        %v1628 = vpop.f32.mrb[0].mxu0
        %v1629 = vadd.f32 0.0, %v1628
        %v1630 = vpop.f32.mrb[0].mxu0
        %1631 = vmatprep.mubr.f32.mxu0 0.0
        %1632 = vmatmul.mubr.f32.gmra.mrb[0].mxu0 %v1496
        %v1633 = vpop.f32.mrb[0].mxu0
        %v1634 = vadd.f32 0.0, %v1633
        %v1635 = vpop.f32.mrb[0].mxu0
        %1636 = vmatprep.mubr.f32.mxu0 0.0
        %1637 = vmatmul.mubr.f32.gmra.mrb[0].mxu0 %v1499
        %v1638 = vpop.f32.mrb[0].mxu0
        %v1639 = vadd.f32 0.0, %v1638
        %v1640 = vpop.f32.mrb[0].mxu0
        %1641 = vmatprep.mubr.f32.mxu0 0.0
        %1642 = vmatmul.mubr.f32.gmra.mrb[0].mxu0 %v1502
        %v1643 = vpop.f32.mrb[0].mxu0
        %v1644 = vadd.f32 0.0, %v1643
        %v1645 = vpop.f32.mrb[0].mxu0
        %1646 = vmatprep.mubr.f32.mxu0 0.0
        %1647 = vmatmul.mubr.f32.gmra.mrb[0].mxu0 %v1505
        %v1648 = vpop.f32.mrb[0].mxu0
        %v1649 = vadd.f32 0.0, %v1648
        %v1650 = vpop.f32.mrb[0].mxu0
        %1651 = vdwg.mxu0
        %vm1652 = vcmp.gt.f32.partialorder %v1131, 0.0
        %vm1653 = vcmp.gt.f32.partialorder %v1132, 0.0
        %vm1654 = vcmp.gt.f32.partialorder %v1133, 0.0
        %vm1655 = vcmp.gt.f32.partialorder %v1134, 0.0
        %vm1656 = vcmp.gt.f32.partialorder %v1135, 0.0
        %vm1657 = vcmp.gt.f32.partialorder %v1136, 0.0
        %vm1658 = vcmp.gt.f32.partialorder %v1137, 0.0
        %vm1659 = vcmp.gt.f32.partialorder %v1138, 0.0
        %vm1660 = vcmp.gt.f32.partialorder %v1139, 0.0
        %vm1661 = vcmp.gt.f32.partialorder %v1140, 0.0
        %vm1662 = vcmp.gt.f32.partialorder %v1141, 0.0
        %vm1663 = vcmp.gt.f32.partialorder %v1142, 0.0
        %vm1664 = vcmp.gt.f32.partialorder %v1143, 0.0
        %vm1665 = vcmp.gt.f32.partialorder %v1144, 0.0
        %vm1666 = vcmp.gt.f32.partialorder %v1145, 0.0
        %vm1667 = vcmp.gt.f32.partialorder %v1146, 0.0
        %v1668 = vsel %vm1652, 1, 0
        %v1669 = vsel %vm1653, 1, 0
        %v1670 = vsel %vm1654, 1, 0
        %v1671 = vsel %vm1655, 1, 0
        %v1672 = vsel %vm1656, 1, 0
        %v1673 = vsel %vm1657, 1, 0
        %v1674 = vsel %vm1658, 1, 0
        %v1675 = vsel %vm1659, 1, 0
        %v1676 = vsel %vm1660, 1, 0
        %v1677 = vsel %vm1661, 1, 0
        %v1678 = vsel %vm1662, 1, 0
        %v1679 = vsel %vm1663, 1, 0
        %v1680 = vsel %vm1664, 1, 0
        %v1681 = vsel %vm1665, 1, 0
        %v1682 = vsel %vm1666, 1, 0
        %v1683 = vsel %vm1667, 1, 0
        %1684 = vset.pattern.permute.xlu0 0
        %1685 = vperm.xlu0 %1684, %v1668
        %v1686 = vpop.permute.xlu0 %1685
        %1687 = vset.pattern.permute.xlu0 0
        %1688 = vperm.xlu0 %1687, %v1669
        %v1689 = vpop.permute.xlu0 %1688
        %1690 = vset.pattern.permute.xlu0 0
        %1691 = vperm.xlu0 %1690, %v1670
        %v1692 = vpop.permute.xlu0 %1691
        %1693 = vset.pattern.permute.xlu0 0
        %1694 = vperm.xlu0 %1693, %v1671
        %v1695 = vpop.permute.xlu0 %1694
        %1696 = vset.pattern.permute.xlu0 0
        %1697 = vperm.xlu0 %1696, %v1672
        %v1698 = vpop.permute.xlu0 %1697
        %1699 = vset.pattern.permute.xlu0 0
        %1700 = vperm.xlu0 %1699, %v1673
        %v1701 = vpop.permute.xlu0 %1700
        %1702 = vset.pattern.permute.xlu0 0
        %1703 = vperm.xlu0 %1702, %v1674
        %v1704 = vpop.permute.xlu0 %1703
        %1705 = vset.pattern.permute.xlu0 0
        %1706 = vperm.xlu0 %1705, %v1675
        %v1707 = vpop.permute.xlu0 %1706
        %1708 = vset.pattern.permute.xlu0 0
        %1709 = vperm.xlu0 %1708, %v1676
        %v1710 = vpop.permute.xlu0 %1709
        %1711 = vset.pattern.permute.xlu0 0
        %1712 = vperm.xlu0 %1711, %v1677
        %v1713 = vpop.permute.xlu0 %1712
        %1714 = vset.pattern.permute.xlu0 0
        %1715 = vperm.xlu0 %1714, %v1678
        %v1716 = vpop.permute.xlu0 %1715
        %1717 = vset.pattern.permute.xlu0 0
        %1718 = vperm.xlu0 %1717, %v1679
        %v1719 = vpop.permute.xlu0 %1718
        %1720 = vset.pattern.permute.xlu0 0
        %1721 = vperm.xlu0 %1720, %v1680
        %v1722 = vpop.permute.xlu0 %1721
        %1723 = vset.pattern.permute.xlu0 0
        %1724 = vperm.xlu0 %1723, %v1681
        %v1725 = vpop.permute.xlu0 %1724
        %1726 = vset.pattern.permute.xlu0 0
        %1727 = vperm.xlu0 %1726, %v1682
        %v1728 = vpop.permute.xlu0 %1727
        %1729 = vset.pattern.permute.xlu0 0
        %1730 = vperm.xlu0 %1729, %v1683
        %v1731 = vpop.permute.xlu0 %1730
        %vm1732 = vcmp.eq.s32.totalorder %v1686, 1
        %vm1733 = vcmp.eq.s32.totalorder %v1689, 1
        %vm1734 = vcmp.eq.s32.totalorder %v1692, 1
        %vm1735 = vcmp.eq.s32.totalorder %v1695, 1
        %vm1736 = vcmp.eq.s32.totalorder %v1698, 1
        %vm1737 = vcmp.eq.s32.totalorder %v1701, 1
        %vm1738 = vcmp.eq.s32.totalorder %v1704, 1
        %vm1739 = vcmp.eq.s32.totalorder %v1707, 1
        %vm1740 = vcmp.eq.s32.totalorder %v1710, 1
        %vm1741 = vcmp.eq.s32.totalorder %v1713, 1
        %vm1742 = vcmp.eq.s32.totalorder %v1716, 1
        %vm1743 = vcmp.eq.s32.totalorder %v1719, 1
        %vm1744 = vcmp.eq.s32.totalorder %v1722, 1
        %vm1745 = vcmp.eq.s32.totalorder %v1725, 1
        %vm1746 = vcmp.eq.s32.totalorder %v1728, 1
        %vm1747 = vcmp.eq.s32.totalorder %v1731, 1
        %v1748 = vsel %vm1732, %v1574, -1e+09
        %v1749 = vsel %vm1733, %v1579, -1e+09
        %v1750 = vsel %vm1734, %v1584, -1e+09
        %v1751 = vsel %vm1735, %v1589, -1e+09
        %v1752 = vsel %vm1736, %v1594, -1e+09
        %v1753 = vsel %vm1737, %v1599, -1e+09
        %v1754 = vsel %vm1738, %v1604, -1e+09
        %v1755 = vsel %vm1739, %v1609, -1e+09
        %v1756 = vsel %vm1740, %v1614, -1e+09
        %v1757 = vsel %vm1741, %v1619, -1e+09
        %v1758 = vsel %vm1742, %v1624, -1e+09
        %v1759 = vsel %vm1743, %v1629, -1e+09
        %v1760 = vsel %vm1744, %v1634, -1e+09
        %v1761 = vsel %vm1745, %v1639, -1e+09
        %v1762 = vsel %vm1746, %v1644, -1e+09
        %v1763 = vsel %vm1747, %v1649, -1e+09
        %vm1764 = vcmask 31744
        %v1765 = vsel %vm1764, %v1748, -inf
        %v1766 = vsel %vm1764, %v1749, -inf
        %v1767 = vmax.f32 %v1765, %v1766
        %v1768 = vrot.slane %v1767, 4
        %v1769 = vmax.f32 %v1767, %v1768
        %v1770 = vrot.slane %v1769, 2
        %v1771 = vmax.f32 %v1769, %v1770
        %v1772 = vrot.slane %v1771, 1
        %v1773 = vmax.f32 %v1771, %v1772
        %v1774 = vsel %vm1764, %v1750, -inf
        %v1775 = vsel %vm1764, %v1751, -inf
        %v1776 = vmax.f32 %v1774, %v1775
        %v1777 = vrot.slane %v1776, 4
        %v1778 = vmax.f32 %v1776, %v1777
        %v1779 = vrot.slane %v1778, 2
        %v1780 = vmax.f32 %v1778, %v1779
        %v1781 = vrot.slane %v1780, 1
        %v1782 = vmax.f32 %v1780, %v1781
        %v1783 = vsel %vm1764, %v1752, -inf
        %v1784 = vsel %vm1764, %v1753, -inf
        %v1785 = vmax.f32 %v1783, %v1784
        %v1786 = vrot.slane %v1785, 4
        %v1787 = vmax.f32 %v1785, %v1786
        %v1788 = vrot.slane %v1787, 2
        %v1789 = vmax.f32 %v1787, %v1788
        %v1790 = vrot.slane %v1789, 1
        %v1791 = vmax.f32 %v1789, %v1790
        %v1792 = vsel %vm1764, %v1754, -inf
        %v1793 = vsel %vm1764, %v1755, -inf
        %v1794 = vmax.f32 %v1792, %v1793
        %v1795 = vrot.slane %v1794, 4
        %v1796 = vmax.f32 %v1794, %v1795
        %v1797 = vrot.slane %v1796, 2
        %v1798 = vmax.f32 %v1796, %v1797
        %v1799 = vrot.slane %v1798, 1
        %v1800 = vmax.f32 %v1798, %v1799
        %v1801 = vsel %vm1764, %v1756, -inf
        %v1802 = vsel %vm1764, %v1757, -inf
        %v1803 = vmax.f32 %v1801, %v1802
        %v1804 = vrot.slane %v1803, 4
        %v1805 = vmax.f32 %v1803, %v1804
        %v1806 = vrot.slane %v1805, 2
        %v1807 = vmax.f32 %v1805, %v1806
        %v1808 = vrot.slane %v1807, 1
        %v1809 = vmax.f32 %v1807, %v1808
        %v1810 = vsel %vm1764, %v1758, -inf
        %v1811 = vsel %vm1764, %v1759, -inf
        %v1812 = vmax.f32 %v1810, %v1811
        %v1813 = vrot.slane %v1812, 4
        %v1814 = vmax.f32 %v1812, %v1813
        %v1815 = vrot.slane %v1814, 2
        %v1816 = vmax.f32 %v1814, %v1815
        %v1817 = vrot.slane %v1816, 1
        %v1818 = vmax.f32 %v1816, %v1817
        %v1819 = vsel %vm1764, %v1760, -inf
        %v1820 = vsel %vm1764, %v1761, -inf
        %v1821 = vmax.f32 %v1819, %v1820
        %v1822 = vrot.slane %v1821, 4
        %v1823 = vmax.f32 %v1821, %v1822
        %v1824 = vrot.slane %v1823, 2
        %v1825 = vmax.f32 %v1823, %v1824
        %v1826 = vrot.slane %v1825, 1
        %v1827 = vmax.f32 %v1825, %v1826
        %v1828 = vsel %vm1764, %v1762, -inf
        %v1829 = vsel %vm1764, %v1763, -inf
        %v1830 = vmax.f32 %v1828, %v1829
        %v1831 = vrot.slane %v1830, 4
        %v1832 = vmax.f32 %v1830, %v1831
        %v1833 = vrot.slane %v1832, 2
        %v1834 = vmax.f32 %v1832, %v1833
        %v1835 = vrot.slane %v1834, 1
        %v1836 = vmax.f32 %v1834, %v1835
        %v1837 = vsub.f32 %v1748, %v1773
        %v1838 = vsub.f32 %v1749, %v1773
        %v1839 = vsub.f32 %v1750, %v1782
        %v1840 = vsub.f32 %v1751, %v1782
        %v1841 = vsub.f32 %v1752, %v1791
        %v1842 = vsub.f32 %v1753, %v1791
        %v1843 = vsub.f32 %v1754, %v1800
        %v1844 = vsub.f32 %v1755, %v1800
        %v1845 = vsub.f32 %v1756, %v1809
        %v1846 = vsub.f32 %v1757, %v1809
        %v1847 = vsub.f32 %v1758, %v1818
        %v1848 = vsub.f32 %v1759, %v1818
        %v1849 = vsub.f32 %v1760, %v1827
        %v1850 = vsub.f32 %v1761, %v1827
        %v1851 = vsub.f32 %v1762, %v1836
        %v1852 = vsub.f32 %v1763, %v1836
        %v1853 = vmul.f32 %v1837, 1.442695
        %v1854 = vpow.pop %v1853
        %v1855 = vmul.f32 %v1838, 1.442695
        %v1856 = vpow.pop %v1855
        %v1857 = vmul.f32 %v1839, 1.442695
        %v1858 = vpow.pop %v1857
        %v1859 = vmul.f32 %v1840, 1.442695
        %v1860 = vpow.pop %v1859
        %v1861 = vmul.f32 %v1841, 1.442695
        %v1862 = vpow.pop %v1861
        %v1863 = vmul.f32 %v1842, 1.442695
        %v1864 = vpow.pop %v1863
        %v1865 = vmul.f32 %v1843, 1.442695
        %v1866 = vpow.pop %v1865
        %v1867 = vmul.f32 %v1844, 1.442695
        %v1868 = vpow.pop %v1867
        %v1869 = vmul.f32 %v1845, 1.442695
        %v1870 = vpow.pop %v1869
        %v1871 = vmul.f32 %v1846, 1.442695
        %v1872 = vpow.pop %v1871
        %v1873 = vmul.f32 %v1847, 1.442695
        %v1874 = vpow.pop %v1873
        %v1875 = vmul.f32 %v1848, 1.442695
        %v1876 = vpow.pop %v1875
        %v1877 = vmul.f32 %v1849, 1.442695
        %v1878 = vpow.pop %v1877
        %v1879 = vmul.f32 %v1850, 1.442695
        %v1880 = vpow.pop %v1879
        %v1881 = vmul.f32 %v1851, 1.442695
        %v1882 = vpow.pop %v1881
        %v1883 = vmul.f32 %v1852, 1.442695
        %v1884 = vpow.pop %v1883
        %v1885 = vsel %vm1732, %v1854, 0.0
        %v1886 = vsel %vm1733, %v1856, 0.0
        %v1887 = vsel %vm1734, %v1858, 0.0
        %v1888 = vsel %vm1735, %v1860, 0.0
        %v1889 = vsel %vm1736, %v1862, 0.0
        %v1890 = vsel %vm1737, %v1864, 0.0
        %v1891 = vsel %vm1738, %v1866, 0.0
        %v1892 = vsel %vm1739, %v1868, 0.0
        %v1893 = vsel %vm1740, %v1870, 0.0
        %v1894 = vsel %vm1741, %v1872, 0.0
        %v1895 = vsel %vm1742, %v1874, 0.0
        %v1896 = vsel %vm1743, %v1876, 0.0
        %v1897 = vsel %vm1744, %v1878, 0.0
        %v1898 = vsel %vm1745, %v1880, 0.0
        %v1899 = vsel %vm1746, %v1882, 0.0
        %v1900 = vsel %vm1747, %v1884, 0.0
        %v1901 = vsel %vm1764, %v1885, 0.0
        %v1902 = vsel %vm1764, %v1886, 0.0
        %v1903 = vadd.f32 %v1901, %v1902
        %v1904 = vrot.slane %v1903, 4
        %v1905 = vadd.f32 %v1903, %v1904
        %v1906 = vrot.slane %v1905, 2
        %v1907 = vadd.f32 %v1905, %v1906
        %v1908 = vrot.slane %v1907, 1
        %v1909 = vadd.f32 %v1907, %v1908
        %v1910 = vsel %vm1764, %v1887, 0.0
        %v1911 = vsel %vm1764, %v1888, 0.0
        %v1912 = vadd.f32 %v1910, %v1911
        %v1913 = vrot.slane %v1912, 4
        %v1914 = vadd.f32 %v1912, %v1913
        %v1915 = vrot.slane %v1914, 2
        %v1916 = vadd.f32 %v1914, %v1915
        %v1917 = vrot.slane %v1916, 1
        %v1918 = vadd.f32 %v1916, %v1917
        %v1919 = vsel %vm1764, %v1889, 0.0
        %v1920 = vsel %vm1764, %v1890, 0.0
        %v1921 = vadd.f32 %v1919, %v1920
        %v1922 = vrot.slane %v1921, 4
        %v1923 = vadd.f32 %v1921, %v1922
        %v1924 = vrot.slane %v1923, 2
        %v1925 = vadd.f32 %v1923, %v1924
        %v1926 = vrot.slane %v1925, 1
        %v1927 = vadd.f32 %v1925, %v1926
        %v1928 = vsel %vm1764, %v1891, 0.0
        %v1929 = vsel %vm1764, %v1892, 0.0
        %v1930 = vadd.f32 %v1928, %v1929
        %v1931 = vrot.slane %v1930, 4
        %v1932 = vadd.f32 %v1930, %v1931
        %v1933 = vrot.slane %v1932, 2
        %v1934 = vadd.f32 %v1932, %v1933
        %v1935 = vrot.slane %v1934, 1
        %v1936 = vadd.f32 %v1934, %v1935
        %v1937 = vsel %vm1764, %v1893, 0.0
        %v1938 = vsel %vm1764, %v1894, 0.0
        %v1939 = vadd.f32 %v1937, %v1938
        %v1940 = vrot.slane %v1939, 4
        %v1941 = vadd.f32 %v1939, %v1940
        %v1942 = vrot.slane %v1941, 2
        %v1943 = vadd.f32 %v1941, %v1942
        %v1944 = vrot.slane %v1943, 1
        %v1945 = vadd.f32 %v1943, %v1944
        %v1946 = vsel %vm1764, %v1895, 0.0
        %v1947 = vsel %vm1764, %v1896, 0.0
        %v1948 = vadd.f32 %v1946, %v1947
        %v1949 = vrot.slane %v1948, 4
        %v1950 = vadd.f32 %v1948, %v1949
        %v1951 = vrot.slane %v1950, 2
        %v1952 = vadd.f32 %v1950, %v1951
        %v1953 = vrot.slane %v1952, 1
        %v1954 = vadd.f32 %v1952, %v1953
        %v1955 = vsel %vm1764, %v1897, 0.0
        %v1956 = vsel %vm1764, %v1898, 0.0
        %v1957 = vadd.f32 %v1955, %v1956
        %v1958 = vrot.slane %v1957, 4
        %v1959 = vadd.f32 %v1957, %v1958
        %v1960 = vrot.slane %v1959, 2
        %v1961 = vadd.f32 %v1959, %v1960
        %v1962 = vrot.slane %v1961, 1
        %v1963 = vadd.f32 %v1961, %v1962
        %v1964 = vsel %vm1764, %v1899, 0.0
        %v1965 = vsel %vm1764, %v1900, 0.0
        %v1966 = vadd.f32 %v1964, %v1965
        %v1967 = vrot.slane %v1966, 4
        %v1968 = vadd.f32 %v1966, %v1967
        %v1969 = vrot.slane %v1968, 2
        %v1970 = vadd.f32 %v1968, %v1969
        %v1971 = vrot.slane %v1970, 1
        %v1972 = vadd.f32 %v1970, %v1971
        %v1973 = vadd.f32 %v1909, 1e-09
        %v1974 = vadd.f32 %v1918, 1e-09
        %v1975 = vadd.f32 %v1927, 1e-09
        %v1976 = vadd.f32 %v1936, 1e-09
        %v1977 = vadd.f32 %v1945, 1e-09
        %v1978 = vadd.f32 %v1954, 1e-09
        %v1979 = vadd.f32 %v1963, 1e-09
        %v1980 = vadd.f32 %v1972, 1e-09
        %v1981 = vrcp.pop %v1973
        %v1982 = vmul.f32 %v1885, %v1981
        %v1983 = vmul.f32 %v1886, %v1981
        %v1984 = vrcp.pop %v1974
        %v1985 = vmul.f32 %v1887, %v1984
        %v1986 = vmul.f32 %v1888, %v1984
        %v1987 = vrcp.pop %v1975
        %v1988 = vmul.f32 %v1889, %v1987
        %v1989 = vmul.f32 %v1890, %v1987
        %v1990 = vrcp.pop %v1976
        %v1991 = vmul.f32 %v1891, %v1990
        %v1992 = vmul.f32 %v1892, %v1990
        %v1993 = vrcp.pop %v1977
        %v1994 = vmul.f32 %v1893, %v1993
        %v1995 = vmul.f32 %v1894, %v1993
        %v1996 = vrcp.pop %v1978
        %v1997 = vmul.f32 %v1895, %v1996
        %v1998 = vmul.f32 %v1896, %v1996
        %v1999 = vrcp.pop %v1979
        %v2000 = vmul.f32 %v1897, %v1999
        %v2001 = vmul.f32 %v1898, %v1999
        %v2002 = vrcp.pop %v1980
        %v2003 = vmul.f32 %v1899, %v2002
        %v2004 = vmul.f32 %v1900, %v2002
        %2005 = vxpose.xlu0.b32.start [1/16] %v1982, 128
        %2006 = vxpose.xlu0.b32.cont [2/16] %v1983, 128
        %2007 = vxpose.xlu0.b32.cont [3/16] 0.0, 128
        %2008 = vxpose.xlu0.b32.cont [4/16] 0.0, 128
        %2009 = vxpose.xlu0.b32.cont [5/16] 0.0, 128
        %2010 = vxpose.xlu0.b32.cont [6/16] 0.0, 128
        %2011 = vxpose.xlu0.b32.cont [7/16] 0.0, 128
        %2012 = vxpose.xlu0.b32.cont [8/16] 0.0, 128
        %2013 = vxpose.xlu0.b32.cont [9/16] 0.0, 128
        %2014 = vxpose.xlu0.b32.cont [10/16] 0.0, 128
        %2015 = vxpose.xlu0.b32.cont [11/16] 0.0, 128
        %2016 = vxpose.xlu0.b32.cont [12/16] 0.0, 128
        %2017 = vxpose.xlu0.b32.cont [13/16] 0.0, 128
        %2018 = vxpose.xlu0.b32.cont [14/16] 0.0, 128
        %2019 = vxpose.xlu0.b32.cont [15/16] 0.0, 128
        %2020 = vxpose.xlu0.b32.end [16/16] 0.0, 128
        %v2021 = vpop.trf.xlu0
        %v2022 = vpop.trf.xlu0
        %v2023 = vpop.trf.xlu0
        %v2024 = vpop.trf.xlu0
        %v2025 = vpop.trf.xlu0
        %v2026 = vpop.trf.xlu0
        %v2027 = vpop.trf.xlu0
        %v2028 = vpop.trf.xlu0
        %v2029 = vpop.trf.xlu0
        %v2030 = vpop.trf.xlu0
        %v2031 = vpop.trf.xlu0
        %v2032 = vpop.trf.xlu0
        %v2033 = vpop.trf.xlu0
        %v2034 = vpop.trf.xlu0
        %v2035 = vpop.trf.xlu0
        %v2036 = vpop.trf.xlu0
        %v2038 = vsel %vm1458, %v2021, 0
        %2040 = vmatprep.subr.mxu0 0.0
        %2041 = vmatpush1.msra.mxu0 %v1227
        %2042 = vmatprep.subr.mxu0 0.0
        %2043 = vmatpush1.msra.mxu0 %v1228
        %2044 = vmatprep.subr.mxu0 0.0
        %2045 = vmatpush1.msra.mxu0 0.0
        %2046 = vmatprep.subr.mxu0 0.0
        %2047 = vmatpush1.msra.mxu0 0.0
        %2048 = vmatprep.subr.mxu0 0.0
        %2049 = vmatpush1.msra.mxu0 0.0
        %2050 = vmatprep.subr.mxu0 0.0
        %2051 = vmatpush1.msra.mxu0 0.0
        %2052 = vmatprep.subr.mxu0 0.0
        %2053 = vmatpush1.msra.mxu0 0.0
        %2054 = vmatprep.subr.mxu0 0.0
        %2055 = vmatpush1.msra.mxu0 0.0
        %2056 = vmatprep.subr.mxu0 0.0
        %2057 = vmatpush1.msra.mxu0 0.0
        %2058 = vmatprep.subr.mxu0 0.0
        %2059 = vmatpush1.msra.mxu0 0.0
        %2060 = vmatprep.subr.mxu0 0.0
        %2061 = vmatpush1.msra.mxu0 0.0
        %2062 = vmatprep.subr.mxu0 0.0
        %2063 = vmatpush1.msra.mxu0 0.0
        %2064 = vmatprep.subr.mxu0 0.0
        %2065 = vmatpush1.msra.mxu0 0.0
        %2066 = vmatprep.subr.mxu0 0.0
        %2067 = vmatpush1.msra.mxu0 0.0
        %2068 = vmatprep.subr.mxu0 0.0
        %2069 = vmatpush1.msra.mxu0 0.0
        %2070 = vmatprep.subr.mxu0 0.0
        %2071 = vmatpush1.msra.mxu0 0.0
        %2072 = vmatprep.subr.mxu0 0.0
        %2073 = vmatpush1.msra.mxu0 0.0
        %2074 = vmatprep.subr.mxu0 0.0
        %2075 = vmatpush1.msra.mxu0 0.0
        %2076 = vmatprep.subr.mxu0 0.0
        %2077 = vmatpush1.msra.mxu0 0.0
        %2078 = vmatprep.subr.mxu0 0.0
        %2079 = vmatpush1.msra.mxu0 0.0
        %2080 = vmatprep.subr.mxu0 0.0
        %2081 = vmatpush1.msra.mxu0 0.0
        %2082 = vmatprep.subr.mxu0 0.0
        %2083 = vmatpush1.msra.mxu0 0.0
        %2084 = vmatprep.subr.mxu0 0.0
        %2085 = vmatpush1.msra.mxu0 0.0
        %2086 = vmatprep.subr.mxu0 0.0
        %2087 = vmatpush1.msra.mxu0 0.0
        %2088 = vmatprep.subr.mxu0 0.0
        %2089 = vmatpush1.msra.mxu0 0.0
        %2090 = vmatprep.subr.mxu0 0.0
        %2091 = vmatpush1.msra.mxu0 0.0
        %2092 = vmatprep.subr.mxu0 0.0
        %2093 = vmatpush1.msra.mxu0 0.0
        %2094 = vmatprep.subr.mxu0 0.0
        %2095 = vmatpush1.msra.mxu0 0.0
        %2096 = vmatprep.subr.mxu0 0.0
        %2097 = vmatpush1.msra.mxu0 0.0
        %2098 = vmatprep.subr.mxu0 0.0
        %2099 = vmatpush1.msra.mxu0 0.0
        %2100 = vmatprep.subr.mxu0 0.0
        %2101 = vmatpush1.msra.mxu0 0.0
        %2102 = vmatprep.subr.mxu0 0.0
        %2103 = vmatpush1.msra.mxu0 0.0
        %2104 = vmatprep.mubr.f32.mxu0 0.0
        %2105 = vmatmul.mubr.f32.gmra.mrb[0].mxu0 %v2038
        %v2106 = vpop.f32.mrb[0].mxu0
        %v2107 = vadd.f32 0.0, %v2106
        %v2108 = vpop.f32.mrb[0].mxu0
        %2109 = vdwg.mxu0
        %2110 = vxpose.xlu0.b32.start [1/16] %v1985, 128
        %2111 = vxpose.xlu0.b32.cont [2/16] %v1986, 128
        %2112 = vxpose.xlu0.b32.cont [3/16] 0.0, 128
        %2113 = vxpose.xlu0.b32.cont [4/16] 0.0, 128
        %2114 = vxpose.xlu0.b32.cont [5/16] 0.0, 128
        %2115 = vxpose.xlu0.b32.cont [6/16] 0.0, 128
        %2116 = vxpose.xlu0.b32.cont [7/16] 0.0, 128
        %2117 = vxpose.xlu0.b32.cont [8/16] 0.0, 128
        %2118 = vxpose.xlu0.b32.cont [9/16] 0.0, 128
        %2119 = vxpose.xlu0.b32.cont [10/16] 0.0, 128
        %2120 = vxpose.xlu0.b32.cont [11/16] 0.0, 128
        %2121 = vxpose.xlu0.b32.cont [12/16] 0.0, 128
        %2122 = vxpose.xlu0.b32.cont [13/16] 0.0, 128
        %2123 = vxpose.xlu0.b32.cont [14/16] 0.0, 128
        %2124 = vxpose.xlu0.b32.cont [15/16] 0.0, 128
        %2125 = vxpose.xlu0.b32.end [16/16] 0.0, 128
        %v2126 = vpop.trf.xlu0
        %v2127 = vpop.trf.xlu0
        %v2128 = vpop.trf.xlu0
        %v2129 = vpop.trf.xlu0
        %v2130 = vpop.trf.xlu0
        %v2131 = vpop.trf.xlu0
        %v2132 = vpop.trf.xlu0
        %v2133 = vpop.trf.xlu0
        %v2134 = vpop.trf.xlu0
        %v2135 = vpop.trf.xlu0
        %v2136 = vpop.trf.xlu0
        %v2137 = vpop.trf.xlu0
        %v2138 = vpop.trf.xlu0
        %v2139 = vpop.trf.xlu0
        %v2140 = vpop.trf.xlu0
        %v2141 = vpop.trf.xlu0
        %v2143 = vsel %vm1458, %v2126, 0
        %2145 = vmatprep.subr.mxu0 0.0
        %2146 = vmatpush1.msra.mxu0 %v1229
        %2147 = vmatprep.subr.mxu0 0.0
        %2148 = vmatpush1.msra.mxu0 %v1230
        %2149 = vmatprep.subr.mxu0 0.0
        %2150 = vmatpush1.msra.mxu0 0.0
        %2151 = vmatprep.subr.mxu0 0.0
        %2152 = vmatpush1.msra.mxu0 0.0
        %2153 = vmatprep.subr.mxu0 0.0
        %2154 = vmatpush1.msra.mxu0 0.0
        %2155 = vmatprep.subr.mxu0 0.0
        %2156 = vmatpush1.msra.mxu0 0.0
        %2157 = vmatprep.subr.mxu0 0.0
        %2158 = vmatpush1.msra.mxu0 0.0
        %2159 = vmatprep.subr.mxu0 0.0
        %2160 = vmatpush1.msra.mxu0 0.0
        %2161 = vmatprep.subr.mxu0 0.0
        %2162 = vmatpush1.msra.mxu0 0.0
        %2163 = vmatprep.subr.mxu0 0.0
        %2164 = vmatpush1.msra.mxu0 0.0
        %2165 = vmatprep.subr.mxu0 0.0
        %2166 = vmatpush1.msra.mxu0 0.0
        %2167 = vmatprep.subr.mxu0 0.0
        %2168 = vmatpush1.msra.mxu0 0.0
        %2169 = vmatprep.subr.mxu0 0.0
        %2170 = vmatpush1.msra.mxu0 0.0
        %2171 = vmatprep.subr.mxu0 0.0
        %2172 = vmatpush1.msra.mxu0 0.0
        %2173 = vmatprep.subr.mxu0 0.0
        %2174 = vmatpush1.msra.mxu0 0.0
        %2175 = vmatprep.subr.mxu0 0.0
        %2176 = vmatpush1.msra.mxu0 0.0
        %2177 = vmatprep.subr.mxu0 0.0
        %2178 = vmatpush1.msra.mxu0 0.0
        %2179 = vmatprep.subr.mxu0 0.0
        %2180 = vmatpush1.msra.mxu0 0.0
        %2181 = vmatprep.subr.mxu0 0.0
        %2182 = vmatpush1.msra.mxu0 0.0
        %2183 = vmatprep.subr.mxu0 0.0
        %2184 = vmatpush1.msra.mxu0 0.0
        %2185 = vmatprep.subr.mxu0 0.0
        %2186 = vmatpush1.msra.mxu0 0.0
        %2187 = vmatprep.subr.mxu0 0.0
        %2188 = vmatpush1.msra.mxu0 0.0
        %2189 = vmatprep.subr.mxu0 0.0
        %2190 = vmatpush1.msra.mxu0 0.0
        %2191 = vmatprep.subr.mxu0 0.0
        %2192 = vmatpush1.msra.mxu0 0.0
        %2193 = vmatprep.subr.mxu0 0.0
        %2194 = vmatpush1.msra.mxu0 0.0
        %2195 = vmatprep.subr.mxu0 0.0
        %2196 = vmatpush1.msra.mxu0 0.0
        %2197 = vmatprep.subr.mxu0 0.0
        %2198 = vmatpush1.msra.mxu0 0.0
        %2199 = vmatprep.subr.mxu0 0.0
        %2200 = vmatpush1.msra.mxu0 0.0
        %2201 = vmatprep.subr.mxu0 0.0
        %2202 = vmatpush1.msra.mxu0 0.0
        %2203 = vmatprep.subr.mxu0 0.0
        %2204 = vmatpush1.msra.mxu0 0.0
        %2205 = vmatprep.subr.mxu0 0.0
        %2206 = vmatpush1.msra.mxu0 0.0
        %2207 = vmatprep.subr.mxu0 0.0
        %2208 = vmatpush1.msra.mxu0 0.0
        %2209 = vmatprep.mubr.f32.mxu0 0.0
        %2210 = vmatmul.mubr.f32.gmra.mrb[0].mxu0 %v2143
        %v2211 = vpop.f32.mrb[0].mxu0
        %v2212 = vadd.f32 0.0, %v2211
        %v2213 = vpop.f32.mrb[0].mxu0
        %2214 = vdwg.mxu0
        %2215 = vxpose.xlu0.b32.start [1/16] %v1988, 128
        %2216 = vxpose.xlu0.b32.cont [2/16] %v1989, 128
        %2217 = vxpose.xlu0.b32.cont [3/16] 0.0, 128
        %2218 = vxpose.xlu0.b32.cont [4/16] 0.0, 128
        %2219 = vxpose.xlu0.b32.cont [5/16] 0.0, 128
        %2220 = vxpose.xlu0.b32.cont [6/16] 0.0, 128
        %2221 = vxpose.xlu0.b32.cont [7/16] 0.0, 128
        %2222 = vxpose.xlu0.b32.cont [8/16] 0.0, 128
        %2223 = vxpose.xlu0.b32.cont [9/16] 0.0, 128
        %2224 = vxpose.xlu0.b32.cont [10/16] 0.0, 128
        %2225 = vxpose.xlu0.b32.cont [11/16] 0.0, 128
        %2226 = vxpose.xlu0.b32.cont [12/16] 0.0, 128
        %2227 = vxpose.xlu0.b32.cont [13/16] 0.0, 128
        %2228 = vxpose.xlu0.b32.cont [14/16] 0.0, 128
        %2229 = vxpose.xlu0.b32.cont [15/16] 0.0, 128
        %2230 = vxpose.xlu0.b32.end [16/16] 0.0, 128
        %v2231 = vpop.trf.xlu0
        %v2232 = vpop.trf.xlu0
        %v2233 = vpop.trf.xlu0
        %v2234 = vpop.trf.xlu0
        %v2235 = vpop.trf.xlu0
        %v2236 = vpop.trf.xlu0
        %v2237 = vpop.trf.xlu0
        %v2238 = vpop.trf.xlu0
        %v2239 = vpop.trf.xlu0
        %v2240 = vpop.trf.xlu0
        %v2241 = vpop.trf.xlu0
        %v2242 = vpop.trf.xlu0
        %v2243 = vpop.trf.xlu0
        %v2244 = vpop.trf.xlu0
        %v2245 = vpop.trf.xlu0
        %v2246 = vpop.trf.xlu0
        %v2248 = vsel %vm1458, %v2231, 0
        %2250 = vmatprep.subr.mxu0 0.0
        %2251 = vmatpush1.msra.mxu0 %v1231
        %2252 = vmatprep.subr.mxu0 0.0
        %2253 = vmatpush1.msra.mxu0 %v1232
        %2254 = vmatprep.subr.mxu0 0.0
        %2255 = vmatpush1.msra.mxu0 0.0
        %2256 = vmatprep.subr.mxu0 0.0
        %2257 = vmatpush1.msra.mxu0 0.0
        %2258 = vmatprep.subr.mxu0 0.0
        %2259 = vmatpush1.msra.mxu0 0.0
        %2260 = vmatprep.subr.mxu0 0.0
        %2261 = vmatpush1.msra.mxu0 0.0
        %2262 = vmatprep.subr.mxu0 0.0
        %2263 = vmatpush1.msra.mxu0 0.0
        %2264 = vmatprep.subr.mxu0 0.0
        %2265 = vmatpush1.msra.mxu0 0.0
        %2266 = vmatprep.subr.mxu0 0.0
        %2267 = vmatpush1.msra.mxu0 0.0
        %2268 = vmatprep.subr.mxu0 0.0
        %2269 = vmatpush1.msra.mxu0 0.0
        %2270 = vmatprep.subr.mxu0 0.0
        %2271 = vmatpush1.msra.mxu0 0.0
        %2272 = vmatprep.subr.mxu0 0.0
        %2273 = vmatpush1.msra.mxu0 0.0
        %2274 = vmatprep.subr.mxu0 0.0
        %2275 = vmatpush1.msra.mxu0 0.0
        %2276 = vmatprep.subr.mxu0 0.0
        %2277 = vmatpush1.msra.mxu0 0.0
        %2278 = vmatprep.subr.mxu0 0.0
        %2279 = vmatpush1.msra.mxu0 0.0
        %2280 = vmatprep.subr.mxu0 0.0
        %2281 = vmatpush1.msra.mxu0 0.0
        %2282 = vmatprep.subr.mxu0 0.0
        %2283 = vmatpush1.msra.mxu0 0.0
        %2284 = vmatprep.subr.mxu0 0.0
        %2285 = vmatpush1.msra.mxu0 0.0
        %2286 = vmatprep.subr.mxu0 0.0
        %2287 = vmatpush1.msra.mxu0 0.0
        %2288 = vmatprep.subr.mxu0 0.0
        %2289 = vmatpush1.msra.mxu0 0.0
        %2290 = vmatprep.subr.mxu0 0.0
        %2291 = vmatpush1.msra.mxu0 0.0
        %2292 = vmatprep.subr.mxu0 0.0
        %2293 = vmatpush1.msra.mxu0 0.0
        %2294 = vmatprep.subr.mxu0 0.0
        %2295 = vmatpush1.msra.mxu0 0.0
        %2296 = vmatprep.subr.mxu0 0.0
        %2297 = vmatpush1.msra.mxu0 0.0
        %2298 = vmatprep.subr.mxu0 0.0
        %2299 = vmatpush1.msra.mxu0 0.0
        %2300 = vmatprep.subr.mxu0 0.0
        %2301 = vmatpush1.msra.mxu0 0.0
        %2302 = vmatprep.subr.mxu0 0.0
        %2303 = vmatpush1.msra.mxu0 0.0
        %2304 = vmatprep.subr.mxu0 0.0
        %2305 = vmatpush1.msra.mxu0 0.0
        %2306 = vmatprep.subr.mxu0 0.0
        %2307 = vmatpush1.msra.mxu0 0.0
        %2308 = vmatprep.subr.mxu0 0.0
        %2309 = vmatpush1.msra.mxu0 0.0
        %2310 = vmatprep.subr.mxu0 0.0
        %2311 = vmatpush1.msra.mxu0 0.0
        %2312 = vmatprep.subr.mxu0 0.0
        %2313 = vmatpush1.msra.mxu0 0.0
        %2314 = vmatprep.mubr.f32.mxu0 0.0
        %2315 = vmatmul.mubr.f32.gmra.mrb[0].mxu0 %v2248
        %v2316 = vpop.f32.mrb[0].mxu0
        %v2317 = vadd.f32 0.0, %v2316
        %v2318 = vpop.f32.mrb[0].mxu0
        %2319 = vdwg.mxu0
        %2320 = vxpose.xlu0.b32.start [1/16] %v1991, 128
        %2321 = vxpose.xlu0.b32.cont [2/16] %v1992, 128
        %2322 = vxpose.xlu0.b32.cont [3/16] 0.0, 128
        %2323 = vxpose.xlu0.b32.cont [4/16] 0.0, 128
        %2324 = vxpose.xlu0.b32.cont [5/16] 0.0, 128
        %2325 = vxpose.xlu0.b32.cont [6/16] 0.0, 128
        %2326 = vxpose.xlu0.b32.cont [7/16] 0.0, 128
        %2327 = vxpose.xlu0.b32.cont [8/16] 0.0, 128
        %2328 = vxpose.xlu0.b32.cont [9/16] 0.0, 128
        %2329 = vxpose.xlu0.b32.cont [10/16] 0.0, 128
        %2330 = vxpose.xlu0.b32.cont [11/16] 0.0, 128
        %2331 = vxpose.xlu0.b32.cont [12/16] 0.0, 128
        %2332 = vxpose.xlu0.b32.cont [13/16] 0.0, 128
        %2333 = vxpose.xlu0.b32.cont [14/16] 0.0, 128
        %2334 = vxpose.xlu0.b32.cont [15/16] 0.0, 128
        %2335 = vxpose.xlu0.b32.end [16/16] 0.0, 128
        %v2336 = vpop.trf.xlu0
        %v2337 = vpop.trf.xlu0
        %v2338 = vpop.trf.xlu0
        %v2339 = vpop.trf.xlu0
        %v2340 = vpop.trf.xlu0
        %v2341 = vpop.trf.xlu0
        %v2342 = vpop.trf.xlu0
        %v2343 = vpop.trf.xlu0
        %v2344 = vpop.trf.xlu0
        %v2345 = vpop.trf.xlu0
        %v2346 = vpop.trf.xlu0
        %v2347 = vpop.trf.xlu0
        %v2348 = vpop.trf.xlu0
        %v2349 = vpop.trf.xlu0
        %v2350 = vpop.trf.xlu0
        %v2351 = vpop.trf.xlu0
        %v2353 = vsel %vm1458, %v2336, 0
        %2355 = vmatprep.subr.mxu0 0.0
        %2356 = vmatpush1.msra.mxu0 %v1233
        %2357 = vmatprep.subr.mxu0 0.0
        %2358 = vmatpush1.msra.mxu0 %v1234
        %2359 = vmatprep.subr.mxu0 0.0
        %2360 = vmatpush1.msra.mxu0 0.0
        %2361 = vmatprep.subr.mxu0 0.0
        %2362 = vmatpush1.msra.mxu0 0.0
        %2363 = vmatprep.subr.mxu0 0.0
        %2364 = vmatpush1.msra.mxu0 0.0
        %2365 = vmatprep.subr.mxu0 0.0
        %2366 = vmatpush1.msra.mxu0 0.0
        %2367 = vmatprep.subr.mxu0 0.0
        %2368 = vmatpush1.msra.mxu0 0.0
        %2369 = vmatprep.subr.mxu0 0.0
        %2370 = vmatpush1.msra.mxu0 0.0
        %2371 = vmatprep.subr.mxu0 0.0
        %2372 = vmatpush1.msra.mxu0 0.0
        %2373 = vmatprep.subr.mxu0 0.0
        %2374 = vmatpush1.msra.mxu0 0.0
        %2375 = vmatprep.subr.mxu0 0.0
        %2376 = vmatpush1.msra.mxu0 0.0
        %2377 = vmatprep.subr.mxu0 0.0
        %2378 = vmatpush1.msra.mxu0 0.0
        %2379 = vmatprep.subr.mxu0 0.0
        %2380 = vmatpush1.msra.mxu0 0.0
        %2381 = vmatprep.subr.mxu0 0.0
        %2382 = vmatpush1.msra.mxu0 0.0
        %2383 = vmatprep.subr.mxu0 0.0
        %2384 = vmatpush1.msra.mxu0 0.0
        %2385 = vmatprep.subr.mxu0 0.0
        %2386 = vmatpush1.msra.mxu0 0.0
        %2387 = vmatprep.subr.mxu0 0.0
        %2388 = vmatpush1.msra.mxu0 0.0
        %2389 = vmatprep.subr.mxu0 0.0
        %2390 = vmatpush1.msra.mxu0 0.0
        %2391 = vmatprep.subr.mxu0 0.0
        %2392 = vmatpush1.msra.mxu0 0.0
        %2393 = vmatprep.subr.mxu0 0.0
        %2394 = vmatpush1.msra.mxu0 0.0
        %2395 = vmatprep.subr.mxu0 0.0
        %2396 = vmatpush1.msra.mxu0 0.0
        %2397 = vmatprep.subr.mxu0 0.0
        %2398 = vmatpush1.msra.mxu0 0.0
        %2399 = vmatprep.subr.mxu0 0.0
        %2400 = vmatpush1.msra.mxu0 0.0
        %2401 = vmatprep.subr.mxu0 0.0
        %2402 = vmatpush1.msra.mxu0 0.0
        %2403 = vmatprep.subr.mxu0 0.0
        %2404 = vmatpush1.msra.mxu0 0.0
        %2405 = vmatprep.subr.mxu0 0.0
        %2406 = vmatpush1.msra.mxu0 0.0
        %2407 = vmatprep.subr.mxu0 0.0
        %2408 = vmatpush1.msra.mxu0 0.0
        %2409 = vmatprep.subr.mxu0 0.0
        %2410 = vmatpush1.msra.mxu0 0.0
        %2411 = vmatprep.subr.mxu0 0.0
        %2412 = vmatpush1.msra.mxu0 0.0
        %2413 = vmatprep.subr.mxu0 0.0
        %2414 = vmatpush1.msra.mxu0 0.0
        %2415 = vmatprep.subr.mxu0 0.0
        %2416 = vmatpush1.msra.mxu0 0.0
        %2417 = vmatprep.subr.mxu0 0.0
        %2418 = vmatpush1.msra.mxu0 0.0
        %2419 = vmatprep.mubr.f32.mxu0 0.0
        %2420 = vmatmul.mubr.f32.gmra.mrb[0].mxu0 %v2353
        %v2421 = vpop.f32.mrb[0].mxu0
        %v2422 = vadd.f32 0.0, %v2421
        %v2423 = vpop.f32.mrb[0].mxu0
        %2424 = vdwg.mxu0
        %2425 = vxpose.xlu0.b32.start [1/16] %v1994, 128
        %2426 = vxpose.xlu0.b32.cont [2/16] %v1995, 128
        %2427 = vxpose.xlu0.b32.cont [3/16] 0.0, 128
        %2428 = vxpose.xlu0.b32.cont [4/16] 0.0, 128
        %2429 = vxpose.xlu0.b32.cont [5/16] 0.0, 128
        %2430 = vxpose.xlu0.b32.cont [6/16] 0.0, 128
        %2431 = vxpose.xlu0.b32.cont [7/16] 0.0, 128
        %2432 = vxpose.xlu0.b32.cont [8/16] 0.0, 128
        %2433 = vxpose.xlu0.b32.cont [9/16] 0.0, 128
        %2434 = vxpose.xlu0.b32.cont [10/16] 0.0, 128
        %2435 = vxpose.xlu0.b32.cont [11/16] 0.0, 128
        %2436 = vxpose.xlu0.b32.cont [12/16] 0.0, 128
        %2437 = vxpose.xlu0.b32.cont [13/16] 0.0, 128
        %2438 = vxpose.xlu0.b32.cont [14/16] 0.0, 128
        %2439 = vxpose.xlu0.b32.cont [15/16] 0.0, 128
        %2440 = vxpose.xlu0.b32.end [16/16] 0.0, 128
        %v2441 = vpop.trf.xlu0
        %v2442 = vpop.trf.xlu0
        %v2443 = vpop.trf.xlu0
        %v2444 = vpop.trf.xlu0
        %v2445 = vpop.trf.xlu0
        %v2446 = vpop.trf.xlu0
        %v2447 = vpop.trf.xlu0
        %v2448 = vpop.trf.xlu0
        %v2449 = vpop.trf.xlu0
        %v2450 = vpop.trf.xlu0
        %v2451 = vpop.trf.xlu0
        %v2452 = vpop.trf.xlu0
        %v2453 = vpop.trf.xlu0
        %v2454 = vpop.trf.xlu0
        %v2455 = vpop.trf.xlu0
        %v2456 = vpop.trf.xlu0
        %v2458 = vsel %vm1458, %v2441, 0
        %2460 = vmatprep.subr.mxu0 0.0
        %2461 = vmatpush1.msra.mxu0 %v1235
        %2462 = vmatprep.subr.mxu0 0.0
        %2463 = vmatpush1.msra.mxu0 %v1236
        %2464 = vmatprep.subr.mxu0 0.0
        %2465 = vmatpush1.msra.mxu0 0.0
        %2466 = vmatprep.subr.mxu0 0.0
        %2467 = vmatpush1.msra.mxu0 0.0
        %2468 = vmatprep.subr.mxu0 0.0
        %2469 = vmatpush1.msra.mxu0 0.0
        %2470 = vmatprep.subr.mxu0 0.0
        %2471 = vmatpush1.msra.mxu0 0.0
        %2472 = vmatprep.subr.mxu0 0.0
        %2473 = vmatpush1.msra.mxu0 0.0
        %2474 = vmatprep.subr.mxu0 0.0
        %2475 = vmatpush1.msra.mxu0 0.0
        %2476 = vmatprep.subr.mxu0 0.0
        %2477 = vmatpush1.msra.mxu0 0.0
        %2478 = vmatprep.subr.mxu0 0.0
        %2479 = vmatpush1.msra.mxu0 0.0
        %2480 = vmatprep.subr.mxu0 0.0
        %2481 = vmatpush1.msra.mxu0 0.0
        %2482 = vmatprep.subr.mxu0 0.0
        %2483 = vmatpush1.msra.mxu0 0.0
        %2484 = vmatprep.subr.mxu0 0.0
        %2485 = vmatpush1.msra.mxu0 0.0
        %2486 = vmatprep.subr.mxu0 0.0
        %2487 = vmatpush1.msra.mxu0 0.0
        %2488 = vmatprep.subr.mxu0 0.0
        %2489 = vmatpush1.msra.mxu0 0.0
        %2490 = vmatprep.subr.mxu0 0.0
        %2491 = vmatpush1.msra.mxu0 0.0
        %2492 = vmatprep.subr.mxu0 0.0
        %2493 = vmatpush1.msra.mxu0 0.0
        %2494 = vmatprep.subr.mxu0 0.0
        %2495 = vmatpush1.msra.mxu0 0.0
        %2496 = vmatprep.subr.mxu0 0.0
        %2497 = vmatpush1.msra.mxu0 0.0
        %2498 = vmatprep.subr.mxu0 0.0
        %2499 = vmatpush1.msra.mxu0 0.0
        %2500 = vmatprep.subr.mxu0 0.0
        %2501 = vmatpush1.msra.mxu0 0.0
        %2502 = vmatprep.subr.mxu0 0.0
        %2503 = vmatpush1.msra.mxu0 0.0
        %2504 = vmatprep.subr.mxu0 0.0
        %2505 = vmatpush1.msra.mxu0 0.0
        %2506 = vmatprep.subr.mxu0 0.0
        %2507 = vmatpush1.msra.mxu0 0.0
        %2508 = vmatprep.subr.mxu0 0.0
        %2509 = vmatpush1.msra.mxu0 0.0
        %2510 = vmatprep.subr.mxu0 0.0
        %2511 = vmatpush1.msra.mxu0 0.0
        %2512 = vmatprep.subr.mxu0 0.0
        %2513 = vmatpush1.msra.mxu0 0.0
        %2514 = vmatprep.subr.mxu0 0.0
        %2515 = vmatpush1.msra.mxu0 0.0
        %2516 = vmatprep.subr.mxu0 0.0
        %2517 = vmatpush1.msra.mxu0 0.0
        %2518 = vmatprep.subr.mxu0 0.0
        %2519 = vmatpush1.msra.mxu0 0.0
        %2520 = vmatprep.subr.mxu0 0.0
        %2521 = vmatpush1.msra.mxu0 0.0
        %2522 = vmatprep.subr.mxu0 0.0
        %2523 = vmatpush1.msra.mxu0 0.0
        %2524 = vmatprep.mubr.f32.mxu0 0.0
        %2525 = vmatmul.mubr.f32.gmra.mrb[0].mxu0 %v2458
        %v2526 = vpop.f32.mrb[0].mxu0
        %v2527 = vadd.f32 0.0, %v2526
        %v2528 = vpop.f32.mrb[0].mxu0
        %2529 = vdwg.mxu0
        %2530 = vxpose.xlu0.b32.start [1/16] %v1997, 128
        %2531 = vxpose.xlu0.b32.cont [2/16] %v1998, 128
        %2532 = vxpose.xlu0.b32.cont [3/16] 0.0, 128
        %2533 = vxpose.xlu0.b32.cont [4/16] 0.0, 128
        %2534 = vxpose.xlu0.b32.cont [5/16] 0.0, 128
        %2535 = vxpose.xlu0.b32.cont [6/16] 0.0, 128
        %2536 = vxpose.xlu0.b32.cont [7/16] 0.0, 128
        %2537 = vxpose.xlu0.b32.cont [8/16] 0.0, 128
        %2538 = vxpose.xlu0.b32.cont [9/16] 0.0, 128
        %2539 = vxpose.xlu0.b32.cont [10/16] 0.0, 128
        %2540 = vxpose.xlu0.b32.cont [11/16] 0.0, 128
        %2541 = vxpose.xlu0.b32.cont [12/16] 0.0, 128
        %2542 = vxpose.xlu0.b32.cont [13/16] 0.0, 128
        %2543 = vxpose.xlu0.b32.cont [14/16] 0.0, 128
        %2544 = vxpose.xlu0.b32.cont [15/16] 0.0, 128
        %2545 = vxpose.xlu0.b32.end [16/16] 0.0, 128
        %v2546 = vpop.trf.xlu0
        %v2547 = vpop.trf.xlu0
        %v2548 = vpop.trf.xlu0
        %v2549 = vpop.trf.xlu0
        %v2550 = vpop.trf.xlu0
        %v2551 = vpop.trf.xlu0
        %v2552 = vpop.trf.xlu0
        %v2553 = vpop.trf.xlu0
        %v2554 = vpop.trf.xlu0
        %v2555 = vpop.trf.xlu0
        %v2556 = vpop.trf.xlu0
        %v2557 = vpop.trf.xlu0
        %v2558 = vpop.trf.xlu0
        %v2559 = vpop.trf.xlu0
        %v2560 = vpop.trf.xlu0
        %v2561 = vpop.trf.xlu0
        %v2563 = vsel %vm1458, %v2546, 0
        %2565 = vmatprep.subr.mxu0 0.0
        %2566 = vmatpush1.msra.mxu0 %v1237
        %2567 = vmatprep.subr.mxu0 0.0
        %2568 = vmatpush1.msra.mxu0 %v1238
        %2569 = vmatprep.subr.mxu0 0.0
        %2570 = vmatpush1.msra.mxu0 0.0
        %2571 = vmatprep.subr.mxu0 0.0
        %2572 = vmatpush1.msra.mxu0 0.0
        %2573 = vmatprep.subr.mxu0 0.0
        %2574 = vmatpush1.msra.mxu0 0.0
        %2575 = vmatprep.subr.mxu0 0.0
        %2576 = vmatpush1.msra.mxu0 0.0
        %2577 = vmatprep.subr.mxu0 0.0
        %2578 = vmatpush1.msra.mxu0 0.0
        %2579 = vmatprep.subr.mxu0 0.0
        %2580 = vmatpush1.msra.mxu0 0.0
        %2581 = vmatprep.subr.mxu0 0.0
        %2582 = vmatpush1.msra.mxu0 0.0
        %2583 = vmatprep.subr.mxu0 0.0
        %2584 = vmatpush1.msra.mxu0 0.0
        %2585 = vmatprep.subr.mxu0 0.0
        %2586 = vmatpush1.msra.mxu0 0.0
        %2587 = vmatprep.subr.mxu0 0.0
        %2588 = vmatpush1.msra.mxu0 0.0
        %2589 = vmatprep.subr.mxu0 0.0
        %2590 = vmatpush1.msra.mxu0 0.0
        %2591 = vmatprep.subr.mxu0 0.0
        %2592 = vmatpush1.msra.mxu0 0.0
        %2593 = vmatprep.subr.mxu0 0.0
        %2594 = vmatpush1.msra.mxu0 0.0
        %2595 = vmatprep.subr.mxu0 0.0
        %2596 = vmatpush1.msra.mxu0 0.0
        %2597 = vmatprep.subr.mxu0 0.0
        %2598 = vmatpush1.msra.mxu0 0.0
        %2599 = vmatprep.subr.mxu0 0.0
        %2600 = vmatpush1.msra.mxu0 0.0
        %2601 = vmatprep.subr.mxu0 0.0
        %2602 = vmatpush1.msra.mxu0 0.0
        %2603 = vmatprep.subr.mxu0 0.0
        %2604 = vmatpush1.msra.mxu0 0.0
        %2605 = vmatprep.subr.mxu0 0.0
        %2606 = vmatpush1.msra.mxu0 0.0
        %2607 = vmatprep.subr.mxu0 0.0
        %2608 = vmatpush1.msra.mxu0 0.0
        %2609 = vmatprep.subr.mxu0 0.0
        %2610 = vmatpush1.msra.mxu0 0.0
        %2611 = vmatprep.subr.mxu0 0.0
        %2612 = vmatpush1.msra.mxu0 0.0
        %2613 = vmatprep.subr.mxu0 0.0
        %2614 = vmatpush1.msra.mxu0 0.0
        %2615 = vmatprep.subr.mxu0 0.0
        %2616 = vmatpush1.msra.mxu0 0.0
        %2617 = vmatprep.subr.mxu0 0.0
        %2618 = vmatpush1.msra.mxu0 0.0
        %2619 = vmatprep.subr.mxu0 0.0
        %2620 = vmatpush1.msra.mxu0 0.0
        %2621 = vmatprep.subr.mxu0 0.0
        %2622 = vmatpush1.msra.mxu0 0.0
        %2623 = vmatprep.subr.mxu0 0.0
        %2624 = vmatpush1.msra.mxu0 0.0
        %2625 = vmatprep.subr.mxu0 0.0
        %2626 = vmatpush1.msra.mxu0 0.0
        %2627 = vmatprep.subr.mxu0 0.0
        %2628 = vmatpush1.msra.mxu0 0.0
        %2629 = vmatprep.mubr.f32.mxu0 0.0
        %2630 = vmatmul.mubr.f32.gmra.mrb[0].mxu0 %v2563
        %v2631 = vpop.f32.mrb[0].mxu0
        %v2632 = vadd.f32 0.0, %v2631
        %v2633 = vpop.f32.mrb[0].mxu0
        %2634 = vdwg.mxu0
        %2635 = vxpose.xlu0.b32.start [1/16] %v2000, 128
        %2636 = vxpose.xlu0.b32.cont [2/16] %v2001, 128
        %2637 = vxpose.xlu0.b32.cont [3/16] 0.0, 128
        %2638 = vxpose.xlu0.b32.cont [4/16] 0.0, 128
        %2639 = vxpose.xlu0.b32.cont [5/16] 0.0, 128
        %2640 = vxpose.xlu0.b32.cont [6/16] 0.0, 128
        %2641 = vxpose.xlu0.b32.cont [7/16] 0.0, 128
        %2642 = vxpose.xlu0.b32.cont [8/16] 0.0, 128
        %2643 = vxpose.xlu0.b32.cont [9/16] 0.0, 128
        %2644 = vxpose.xlu0.b32.cont [10/16] 0.0, 128
        %2645 = vxpose.xlu0.b32.cont [11/16] 0.0, 128
        %2646 = vxpose.xlu0.b32.cont [12/16] 0.0, 128
        %2647 = vxpose.xlu0.b32.cont [13/16] 0.0, 128
        %2648 = vxpose.xlu0.b32.cont [14/16] 0.0, 128
        %2649 = vxpose.xlu0.b32.cont [15/16] 0.0, 128
        %2650 = vxpose.xlu0.b32.end [16/16] 0.0, 128
        %v2651 = vpop.trf.xlu0
        %v2652 = vpop.trf.xlu0
        %v2653 = vpop.trf.xlu0
        %v2654 = vpop.trf.xlu0
        %v2655 = vpop.trf.xlu0
        %v2656 = vpop.trf.xlu0
        %v2657 = vpop.trf.xlu0
        %v2658 = vpop.trf.xlu0
        %v2659 = vpop.trf.xlu0
        %v2660 = vpop.trf.xlu0
        %v2661 = vpop.trf.xlu0
        %v2662 = vpop.trf.xlu0
        %v2663 = vpop.trf.xlu0
        %v2664 = vpop.trf.xlu0
        %v2665 = vpop.trf.xlu0
        %v2666 = vpop.trf.xlu0
        %v2668 = vsel %vm1458, %v2651, 0
        %2670 = vmatprep.subr.mxu0 0.0
        %2671 = vmatpush1.msra.mxu0 %v1239
        %2672 = vmatprep.subr.mxu0 0.0
        %2673 = vmatpush1.msra.mxu0 %v1240
        %2674 = vmatprep.subr.mxu0 0.0
        %2675 = vmatpush1.msra.mxu0 0.0
        %2676 = vmatprep.subr.mxu0 0.0
        %2677 = vmatpush1.msra.mxu0 0.0
        %2678 = vmatprep.subr.mxu0 0.0
        %2679 = vmatpush1.msra.mxu0 0.0
        %2680 = vmatprep.subr.mxu0 0.0
        %2681 = vmatpush1.msra.mxu0 0.0
        %2682 = vmatprep.subr.mxu0 0.0
        %2683 = vmatpush1.msra.mxu0 0.0
        %2684 = vmatprep.subr.mxu0 0.0
        %2685 = vmatpush1.msra.mxu0 0.0
        %2686 = vmatprep.subr.mxu0 0.0
        %2687 = vmatpush1.msra.mxu0 0.0
        %2688 = vmatprep.subr.mxu0 0.0
        %2689 = vmatpush1.msra.mxu0 0.0
        %2690 = vmatprep.subr.mxu0 0.0
        %2691 = vmatpush1.msra.mxu0 0.0
        %2692 = vmatprep.subr.mxu0 0.0
        %2693 = vmatpush1.msra.mxu0 0.0
        %2694 = vmatprep.subr.mxu0 0.0
        %2695 = vmatpush1.msra.mxu0 0.0
        %2696 = vmatprep.subr.mxu0 0.0
        %2697 = vmatpush1.msra.mxu0 0.0
        %2698 = vmatprep.subr.mxu0 0.0
        %2699 = vmatpush1.msra.mxu0 0.0
        %2700 = vmatprep.subr.mxu0 0.0
        %2701 = vmatpush1.msra.mxu0 0.0
        %2702 = vmatprep.subr.mxu0 0.0
        %2703 = vmatpush1.msra.mxu0 0.0
        %2704 = vmatprep.subr.mxu0 0.0
        %2705 = vmatpush1.msra.mxu0 0.0
        %2706 = vmatprep.subr.mxu0 0.0
        %2707 = vmatpush1.msra.mxu0 0.0
        %2708 = vmatprep.subr.mxu0 0.0
        %2709 = vmatpush1.msra.mxu0 0.0
        %2710 = vmatprep.subr.mxu0 0.0
        %2711 = vmatpush1.msra.mxu0 0.0
        %2712 = vmatprep.subr.mxu0 0.0
        %2713 = vmatpush1.msra.mxu0 0.0
        %2714 = vmatprep.subr.mxu0 0.0
        %2715 = vmatpush1.msra.mxu0 0.0
        %2716 = vmatprep.subr.mxu0 0.0
        %2717 = vmatpush1.msra.mxu0 0.0
        %2718 = vmatprep.subr.mxu0 0.0
        %2719 = vmatpush1.msra.mxu0 0.0
        %2720 = vmatprep.subr.mxu0 0.0
        %2721 = vmatpush1.msra.mxu0 0.0
        %2722 = vmatprep.subr.mxu0 0.0
        %2723 = vmatpush1.msra.mxu0 0.0
        %2724 = vmatprep.subr.mxu0 0.0
        %2725 = vmatpush1.msra.mxu0 0.0
        %2726 = vmatprep.subr.mxu0 0.0
        %2727 = vmatpush1.msra.mxu0 0.0
        %2728 = vmatprep.subr.mxu0 0.0
        %2729 = vmatpush1.msra.mxu0 0.0
        %2730 = vmatprep.subr.mxu0 0.0
        %2731 = vmatpush1.msra.mxu0 0.0
        %2732 = vmatprep.subr.mxu0 0.0
        %2733 = vmatpush1.msra.mxu0 0.0
        %2734 = vmatprep.mubr.f32.mxu0 0.0
        %2735 = vmatmul.mubr.f32.gmra.mrb[0].mxu0 %v2668
        %v2736 = vpop.f32.mrb[0].mxu0
        %v2737 = vadd.f32 0.0, %v2736
        %v2738 = vpop.f32.mrb[0].mxu0
        %2739 = vdwg.mxu0
        %2740 = vxpose.xlu0.b32.start [1/16] %v2003, 128
        %2741 = vxpose.xlu0.b32.cont [2/16] %v2004, 128
        %2742 = vxpose.xlu0.b32.cont [3/16] 0.0, 128
        %2743 = vxpose.xlu0.b32.cont [4/16] 0.0, 128
        %2744 = vxpose.xlu0.b32.cont [5/16] 0.0, 128
        %2745 = vxpose.xlu0.b32.cont [6/16] 0.0, 128
        %2746 = vxpose.xlu0.b32.cont [7/16] 0.0, 128
        %2747 = vxpose.xlu0.b32.cont [8/16] 0.0, 128
        %2748 = vxpose.xlu0.b32.cont [9/16] 0.0, 128
        %2749 = vxpose.xlu0.b32.cont [10/16] 0.0, 128
        %2750 = vxpose.xlu0.b32.cont [11/16] 0.0, 128
        %2751 = vxpose.xlu0.b32.cont [12/16] 0.0, 128
        %2752 = vxpose.xlu0.b32.cont [13/16] 0.0, 128
        %2753 = vxpose.xlu0.b32.cont [14/16] 0.0, 128
        %2754 = vxpose.xlu0.b32.cont [15/16] 0.0, 128
        %2755 = vxpose.xlu0.b32.end [16/16] 0.0, 128
        %v2756 = vpop.trf.xlu0
        %v2757 = vpop.trf.xlu0
        %v2758 = vpop.trf.xlu0
        %v2759 = vpop.trf.xlu0
        %v2760 = vpop.trf.xlu0
        %v2761 = vpop.trf.xlu0
        %v2762 = vpop.trf.xlu0
        %v2763 = vpop.trf.xlu0
        %v2764 = vpop.trf.xlu0
        %v2765 = vpop.trf.xlu0
        %v2766 = vpop.trf.xlu0
        %v2767 = vpop.trf.xlu0
        %v2768 = vpop.trf.xlu0
        %v2769 = vpop.trf.xlu0
        %v2770 = vpop.trf.xlu0
        %v2771 = vpop.trf.xlu0
        %v2773 = vsel %vm1458, %v2756, 0
        %2775 = vmatprep.subr.mxu0 0.0
        %2776 = vmatpush1.msra.mxu0 %v1241
        %2777 = vmatprep.subr.mxu0 0.0
        %2778 = vmatpush1.msra.mxu0 %v1242
        %2779 = vmatprep.subr.mxu0 0.0
        %2780 = vmatpush1.msra.mxu0 0.0
        %2781 = vmatprep.subr.mxu0 0.0
        %2782 = vmatpush1.msra.mxu0 0.0
        %2783 = vmatprep.subr.mxu0 0.0
        %2784 = vmatpush1.msra.mxu0 0.0
        %2785 = vmatprep.subr.mxu0 0.0
        %2786 = vmatpush1.msra.mxu0 0.0
        %2787 = vmatprep.subr.mxu0 0.0
        %2788 = vmatpush1.msra.mxu0 0.0
        %2789 = vmatprep.subr.mxu0 0.0
        %2790 = vmatpush1.msra.mxu0 0.0
        %2791 = vmatprep.subr.mxu0 0.0
        %2792 = vmatpush1.msra.mxu0 0.0
        %2793 = vmatprep.subr.mxu0 0.0
        %2794 = vmatpush1.msra.mxu0 0.0
        %2795 = vmatprep.subr.mxu0 0.0
        %2796 = vmatpush1.msra.mxu0 0.0
        %2797 = vmatprep.subr.mxu0 0.0
        %2798 = vmatpush1.msra.mxu0 0.0
        %2799 = vmatprep.subr.mxu0 0.0
        %2800 = vmatpush1.msra.mxu0 0.0
        %2801 = vmatprep.subr.mxu0 0.0
        %2802 = vmatpush1.msra.mxu0 0.0
        %2803 = vmatprep.subr.mxu0 0.0
        %2804 = vmatpush1.msra.mxu0 0.0
        %2805 = vmatprep.subr.mxu0 0.0
        %2806 = vmatpush1.msra.mxu0 0.0
        %2807 = vmatprep.subr.mxu0 0.0
        %2808 = vmatpush1.msra.mxu0 0.0
        %2809 = vmatprep.subr.mxu0 0.0
        %2810 = vmatpush1.msra.mxu0 0.0
        %2811 = vmatprep.subr.mxu0 0.0
        %2812 = vmatpush1.msra.mxu0 0.0
        %2813 = vmatprep.subr.mxu0 0.0
        %2814 = vmatpush1.msra.mxu0 0.0
        %2815 = vmatprep.subr.mxu0 0.0
        %2816 = vmatpush1.msra.mxu0 0.0
        %2817 = vmatprep.subr.mxu0 0.0
        %2818 = vmatpush1.msra.mxu0 0.0
        %2819 = vmatprep.subr.mxu0 0.0
        %2820 = vmatpush1.msra.mxu0 0.0
        %2821 = vmatprep.subr.mxu0 0.0
        %2822 = vmatpush1.msra.mxu0 0.0
        %2823 = vmatprep.subr.mxu0 0.0
        %2824 = vmatpush1.msra.mxu0 0.0
        %2825 = vmatprep.subr.mxu0 0.0
        %2826 = vmatpush1.msra.mxu0 0.0
        %2827 = vmatprep.subr.mxu0 0.0
        %2828 = vmatpush1.msra.mxu0 0.0
        %2829 = vmatprep.subr.mxu0 0.0
        %2830 = vmatpush1.msra.mxu0 0.0
        %2831 = vmatprep.subr.mxu0 0.0
        %2832 = vmatpush1.msra.mxu0 0.0
        %2833 = vmatprep.subr.mxu0 0.0
        %2834 = vmatpush1.msra.mxu0 0.0
        %2835 = vmatprep.subr.mxu0 0.0
        %2836 = vmatpush1.msra.mxu0 0.0
        %2837 = vmatprep.subr.mxu0 0.0
        %2838 = vmatpush1.msra.mxu0 0.0
        %2839 = vmatprep.mubr.f32.mxu0 0.0
        %2840 = vmatmul.mubr.f32.gmra.mrb[0].mxu0 %v2773
        %v2841 = vpop.f32.mrb[0].mxu0
        %v2842 = vadd.f32 0.0, %v2841
        %v2843 = vpop.f32.mrb[0].mxu0
        %2844 = vdwg.mxu0
        %v2845 = vld [vmem:[%s7] sm:$0x1]
        %v2846 = vld [vmem:[%s6] sm:$0xff]
        %v2847 = vld [vmem:[%s6 + $0x8] sm:$0xff]
        %v2848 = vld [vmem:[%s6 + $0x10] sm:$0xff]
        %v2849 = vld [vmem:[%s6 + $0x18] sm:$0xff]
        %v2858 = vrot.slane %v2212, 7
        %vm2859 = vcmask 1041409
        %v2860 = vsel %vm2859, %v2858, %v2107
        %v2861 = vrot.slane %v2317, 6
        %vm2862 = vcmask 1042434
        %v2863 = vsel %vm2862, %v2861, %v2860
        %v2864 = vrot.slane %v2422, 5
        %vm2865 = vcmask 1043459
        %v2866 = vsel %vm2865, %v2864, %v2863
        %v2867 = vrot.slane %v2527, 4
        %vm2868 = vcmask 1044484
        %v2869 = vsel %vm2868, %v2867, %v2866
        %v2870 = vrot.slane %v2632, 3
        %vm2871 = vcmask 1045509
        %v2872 = vsel %vm2871, %v2870, %v2869
        %v2873 = vrot.slane %v2737, 2
        %vm2874 = vcmask 1046534
        %v2875 = vsel %vm2874, %v2873, %v2872
        %v2876 = vrot.slane %v2842, 1
        %vm2877 = vcmask 1047559
        %v2878 = vsel %vm2877, %v2876, %v2875
        %v2879 = vsel %vm633, %v2878, 0
        %2881 = vmatprep.subr.mxu0 0.0
        %2882 = vmatpush1.msra.mxu0 %v2846
        %2883 = vmatprep.subr.mxu0 0.0
        %2884 = vmatpush1.msra.mxu0 %v2847
        %2885 = vmatprep.subr.mxu0 0.0
        %2886 = vmatpush1.msra.mxu0 %v2848
        %2887 = vmatprep.subr.mxu0 0.0
        %2888 = vmatpush1.msra.mxu0 %v2849
        %2889 = vmatprep.subr.mxu0 0.0
        %2890 = vmatpush1.msra.mxu0 0.0
        %2891 = vmatprep.subr.mxu0 0.0
        %2892 = vmatpush1.msra.mxu0 0.0
        %2893 = vmatprep.subr.mxu0 0.0
        %2894 = vmatpush1.msra.mxu0 0.0
        %2895 = vmatprep.subr.mxu0 0.0
        %2896 = vmatpush1.msra.mxu0 0.0
        %2897 = vmatprep.subr.mxu0 0.0
        %2898 = vmatpush1.msra.mxu0 0.0
        %2899 = vmatprep.subr.mxu0 0.0
        %2900 = vmatpush1.msra.mxu0 0.0
        %2901 = vmatprep.subr.mxu0 0.0
        %2902 = vmatpush1.msra.mxu0 0.0
        %2903 = vmatprep.subr.mxu0 0.0
        %2904 = vmatpush1.msra.mxu0 0.0
        %2905 = vmatprep.subr.mxu0 0.0
        %2906 = vmatpush1.msra.mxu0 0.0
        %2907 = vmatprep.subr.mxu0 0.0
        %2908 = vmatpush1.msra.mxu0 0.0
        %2909 = vmatprep.subr.mxu0 0.0
        %2910 = vmatpush1.msra.mxu0 0.0
        %2911 = vmatprep.subr.mxu0 0.0
        %2912 = vmatpush1.msra.mxu0 0.0
        %2913 = vmatprep.subr.mxu0 0.0
        %2914 = vmatpush1.msra.mxu0 0.0
        %2915 = vmatprep.subr.mxu0 0.0
        %2916 = vmatpush1.msra.mxu0 0.0
        %2917 = vmatprep.subr.mxu0 0.0
        %2918 = vmatpush1.msra.mxu0 0.0
        %2919 = vmatprep.subr.mxu0 0.0
        %2920 = vmatpush1.msra.mxu0 0.0
        %2921 = vmatprep.subr.mxu0 0.0
        %2922 = vmatpush1.msra.mxu0 0.0
        %2923 = vmatprep.subr.mxu0 0.0
        %2924 = vmatpush1.msra.mxu0 0.0
        %2925 = vmatprep.subr.mxu0 0.0
        %2926 = vmatpush1.msra.mxu0 0.0
        %2927 = vmatprep.subr.mxu0 0.0
        %2928 = vmatpush1.msra.mxu0 0.0
        %2929 = vmatprep.subr.mxu0 0.0
        %2930 = vmatpush1.msra.mxu0 0.0
        %2931 = vmatprep.subr.mxu0 0.0
        %2932 = vmatpush1.msra.mxu0 0.0
        %2933 = vmatprep.subr.mxu0 0.0
        %2934 = vmatpush1.msra.mxu0 0.0
        %2935 = vmatprep.subr.mxu0 0.0
        %2936 = vmatpush1.msra.mxu0 0.0
        %2937 = vmatprep.subr.mxu0 0.0
        %2938 = vmatpush1.msra.mxu0 0.0
        %2939 = vmatprep.subr.mxu0 0.0
        %2940 = vmatpush1.msra.mxu0 0.0
        %2941 = vmatprep.subr.mxu0 0.0
        %2942 = vmatpush1.msra.mxu0 0.0
        %2943 = vmatprep.subr.mxu0 0.0
        %2944 = vmatpush1.msra.mxu0 0.0
        %2945 = vmatprep.mubr.f32.mxu0 0.0
        %2946 = vmatmul.mubr.f32.gmra.mrb[0].mxu0 %v2879
        %v2947 = vpop.f32.mrb[0].mxu0
        %v2948 = vadd.f32 0.0, %v2947
        %v2949 = vpop.f32.mrb[0].mxu0
        %2950 = vdwg.mxu0
        %v2952 = vlaneseq
        %v2953 = vshrl.u32 %v2952, 7
        %v2954 = vsub.s32 0, %v2953
        %v2955 = vrot.slane %v2845, %v2954
        %v2957 = vadd.f32 %v2955, %v2948
        %v2958 = vld [vmem:[%s6 + $0x20] sm:$0xff]
        %v2959 = vld [vmem:[%s6 + $0x28] sm:$0xff]
        %v2960 = vld [vmem:[%s6 + $0x30] sm:$0xff]
        %v2961 = vld [vmem:[%s6 + $0x38] sm:$0xff]
        %v2962 = vrot.slane %v2107, 1
        %v2963 = vsel %vm2859, %v2212, %v2962
        %v2964 = vrot.slane %v2317, 7
        %v2965 = vsel %vm2862, %v2964, %v2963
        %v2966 = vrot.slane %v2422, 6
        %v2967 = vsel %vm2865, %v2966, %v2965
        %v2968 = vrot.slane %v2527, 5
        %v2969 = vsel %vm2868, %v2968, %v2967
        %v2970 = vrot.slane %v2632, 4
        %v2971 = vsel %vm2871, %v2970, %v2969
        %v2972 = vrot.slane %v2737, 3
        %v2973 = vsel %vm2874, %v2972, %v2971
        %v2974 = vrot.slane %v2842, 2
        %v2975 = vsel %vm2877, %v2974, %v2973
        %v2976 = vsel %vm633, %v2975, 0
        %2978 = vmatprep.subr.mxu0 0.0
        %2979 = vmatpush1.msra.mxu0 %v2958
        %2980 = vmatprep.subr.mxu0 0.0
        %2981 = vmatpush1.msra.mxu0 %v2959
        %2982 = vmatprep.subr.mxu0 0.0
        %2983 = vmatpush1.msra.mxu0 %v2960
        %2984 = vmatprep.subr.mxu0 0.0
        %2985 = vmatpush1.msra.mxu0 %v2961
        %2986 = vmatprep.subr.mxu0 0.0
        %2987 = vmatpush1.msra.mxu0 0.0
        %2988 = vmatprep.subr.mxu0 0.0
        %2989 = vmatpush1.msra.mxu0 0.0
        %2990 = vmatprep.subr.mxu0 0.0
        %2991 = vmatpush1.msra.mxu0 0.0
        %2992 = vmatprep.subr.mxu0 0.0
        %2993 = vmatpush1.msra.mxu0 0.0
        %2994 = vmatprep.subr.mxu0 0.0
        %2995 = vmatpush1.msra.mxu0 0.0
        %2996 = vmatprep.subr.mxu0 0.0
        %2997 = vmatpush1.msra.mxu0 0.0
        %2998 = vmatprep.subr.mxu0 0.0
        %2999 = vmatpush1.msra.mxu0 0.0
        %3000 = vmatprep.subr.mxu0 0.0
        %3001 = vmatpush1.msra.mxu0 0.0
        %3002 = vmatprep.subr.mxu0 0.0
        %3003 = vmatpush1.msra.mxu0 0.0
        %3004 = vmatprep.subr.mxu0 0.0
        %3005 = vmatpush1.msra.mxu0 0.0
        %3006 = vmatprep.subr.mxu0 0.0
        %3007 = vmatpush1.msra.mxu0 0.0
        %3008 = vmatprep.subr.mxu0 0.0
        %3009 = vmatpush1.msra.mxu0 0.0
        %3010 = vmatprep.subr.mxu0 0.0
        %3011 = vmatpush1.msra.mxu0 0.0
        %3012 = vmatprep.subr.mxu0 0.0
        %3013 = vmatpush1.msra.mxu0 0.0
        %3014 = vmatprep.subr.mxu0 0.0
        %3015 = vmatpush1.msra.mxu0 0.0
        %3016 = vmatprep.subr.mxu0 0.0
        %3017 = vmatpush1.msra.mxu0 0.0
        %3018 = vmatprep.subr.mxu0 0.0
        %3019 = vmatpush1.msra.mxu0 0.0
        %3020 = vmatprep.subr.mxu0 0.0
        %3021 = vmatpush1.msra.mxu0 0.0
        %3022 = vmatprep.subr.mxu0 0.0
        %3023 = vmatpush1.msra.mxu0 0.0
        %3024 = vmatprep.subr.mxu0 0.0
        %3025 = vmatpush1.msra.mxu0 0.0
        %3026 = vmatprep.subr.mxu0 0.0
        %3027 = vmatpush1.msra.mxu0 0.0
        %3028 = vmatprep.subr.mxu0 0.0
        %3029 = vmatpush1.msra.mxu0 0.0
        %3030 = vmatprep.subr.mxu0 0.0
        %3031 = vmatpush1.msra.mxu0 0.0
        %3032 = vmatprep.subr.mxu0 0.0
        %3033 = vmatpush1.msra.mxu0 0.0
        %3034 = vmatprep.subr.mxu0 0.0
        %3035 = vmatpush1.msra.mxu0 0.0
        %3036 = vmatprep.subr.mxu0 0.0
        %3037 = vmatpush1.msra.mxu0 0.0
        %3038 = vmatprep.subr.mxu0 0.0
        %3039 = vmatpush1.msra.mxu0 0.0
        %3040 = vmatprep.subr.mxu0 0.0
        %3041 = vmatpush1.msra.mxu0 0.0
        %3042 = vmatprep.mubr.f32.mxu0 0.0
        %3043 = vmatmul.mubr.f32.gmra.mrb[0].mxu0 %v2976
        %v3044 = vpop.f32.mrb[0].mxu0
        %v3045 = vadd.f32 0.0, %v3044
        %v3046 = vpop.f32.mrb[0].mxu0
        %3047 = vdwg.mxu0
        %v3048 = vadd.f32 %v2957, %v3045
        %v3049 = vld [vmem:[%s6 + $0x40] sm:$0xff]
        %v3050 = vld [vmem:[%s6 + $0x48] sm:$0xff]
        %v3051 = vld [vmem:[%s6 + $0x50] sm:$0xff]
        %v3052 = vld [vmem:[%s6 + $0x58] sm:$0xff]
        %v3053 = vrot.slane %v2107, 2
        %v3054 = vrot.slane %v2212, 1
        %v3055 = vsel %vm2859, %v3054, %v3053
        %v3056 = vsel %vm2862, %v2317, %v3055
        %v3057 = vrot.slane %v2422, 7
        %v3058 = vsel %vm2865, %v3057, %v3056
        %v3059 = vrot.slane %v2527, 6
        %v3060 = vsel %vm2868, %v3059, %v3058
        %v3061 = vrot.slane %v2632, 5
        %v3062 = vsel %vm2871, %v3061, %v3060
        %v3063 = vrot.slane %v2737, 4
        %v3064 = vsel %vm2874, %v3063, %v3062
        %v3065 = vrot.slane %v2842, 3
        %v3066 = vsel %vm2877, %v3065, %v3064
        %v3067 = vsel %vm633, %v3066, 0
        %3069 = vmatprep.subr.mxu0 0.0
        %3070 = vmatpush1.msra.mxu0 %v3049
        %3071 = vmatprep.subr.mxu0 0.0
        %3072 = vmatpush1.msra.mxu0 %v3050
        %3073 = vmatprep.subr.mxu0 0.0
        %3074 = vmatpush1.msra.mxu0 %v3051
        %3075 = vmatprep.subr.mxu0 0.0
        %3076 = vmatpush1.msra.mxu0 %v3052
        %3077 = vmatprep.subr.mxu0 0.0
        %3078 = vmatpush1.msra.mxu0 0.0
        %3079 = vmatprep.subr.mxu0 0.0
        %3080 = vmatpush1.msra.mxu0 0.0
        %3081 = vmatprep.subr.mxu0 0.0
        %3082 = vmatpush1.msra.mxu0 0.0
        %3083 = vmatprep.subr.mxu0 0.0
        %3084 = vmatpush1.msra.mxu0 0.0
        %3085 = vmatprep.subr.mxu0 0.0
        %3086 = vmatpush1.msra.mxu0 0.0
        %3087 = vmatprep.subr.mxu0 0.0
        %3088 = vmatpush1.msra.mxu0 0.0
        %3089 = vmatprep.subr.mxu0 0.0
        %3090 = vmatpush1.msra.mxu0 0.0
        %3091 = vmatprep.subr.mxu0 0.0
        %3092 = vmatpush1.msra.mxu0 0.0
        %3093 = vmatprep.subr.mxu0 0.0
        %3094 = vmatpush1.msra.mxu0 0.0
        %3095 = vmatprep.subr.mxu0 0.0
        %3096 = vmatpush1.msra.mxu0 0.0
        %3097 = vmatprep.subr.mxu0 0.0
        %3098 = vmatpush1.msra.mxu0 0.0
        %3099 = vmatprep.subr.mxu0 0.0
        %3100 = vmatpush1.msra.mxu0 0.0
        %3101 = vmatprep.subr.mxu0 0.0
        %3102 = vmatpush1.msra.mxu0 0.0
        %3103 = vmatprep.subr.mxu0 0.0
        %3104 = vmatpush1.msra.mxu0 0.0
        %3105 = vmatprep.subr.mxu0 0.0
        %3106 = vmatpush1.msra.mxu0 0.0
        %3107 = vmatprep.subr.mxu0 0.0
        %3108 = vmatpush1.msra.mxu0 0.0
        %3109 = vmatprep.subr.mxu0 0.0
        %3110 = vmatpush1.msra.mxu0 0.0
        %3111 = vmatprep.subr.mxu0 0.0
        %3112 = vmatpush1.msra.mxu0 0.0
        %3113 = vmatprep.subr.mxu0 0.0
        %3114 = vmatpush1.msra.mxu0 0.0
        %3115 = vmatprep.subr.mxu0 0.0
        %3116 = vmatpush1.msra.mxu0 0.0
        %3117 = vmatprep.subr.mxu0 0.0
        %3118 = vmatpush1.msra.mxu0 0.0
        %3119 = vmatprep.subr.mxu0 0.0
        %3120 = vmatpush1.msra.mxu0 0.0
        %3121 = vmatprep.subr.mxu0 0.0
        %3122 = vmatpush1.msra.mxu0 0.0
        %3123 = vmatprep.subr.mxu0 0.0
        %3124 = vmatpush1.msra.mxu0 0.0
        %3125 = vmatprep.subr.mxu0 0.0
        %3126 = vmatpush1.msra.mxu0 0.0
        %3127 = vmatprep.subr.mxu0 0.0
        %3128 = vmatpush1.msra.mxu0 0.0
        %3129 = vmatprep.subr.mxu0 0.0
        %3130 = vmatpush1.msra.mxu0 0.0
        %3131 = vmatprep.subr.mxu0 0.0
        %3132 = vmatpush1.msra.mxu0 0.0
        %3133 = vmatprep.mubr.f32.mxu0 0.0
        %3134 = vmatmul.mubr.f32.gmra.mrb[0].mxu0 %v3067
        %v3135 = vpop.f32.mrb[0].mxu0
        %v3136 = vadd.f32 0.0, %v3135
        %v3137 = vpop.f32.mrb[0].mxu0
        %3138 = vdwg.mxu0
        %v3139 = vadd.f32 %v3048, %v3136
        %v3140 = vld [vmem:[%s6 + $0x60] sm:$0xff]
        %v3141 = vld [vmem:[%s6 + $0x68] sm:$0xff]
        %v3142 = vld [vmem:[%s6 + $0x70] sm:$0xff]
        %v3143 = vld [vmem:[%s6 + $0x78] sm:$0xff]
        %v3144 = vrot.slane %v2107, 3
        %v3145 = vrot.slane %v2212, 2
        %v3146 = vsel %vm2859, %v3145, %v3144
        %v3147 = vrot.slane %v2317, 1
        %v3148 = vsel %vm2862, %v3147, %v3146
        %v3149 = vsel %vm2865, %v2422, %v3148
        %v3150 = vrot.slane %v2527, 7
        %v3151 = vsel %vm2868, %v3150, %v3149
        %v3152 = vrot.slane %v2632, 6
        %v3153 = vsel %vm2871, %v3152, %v3151
        %v3154 = vrot.slane %v2737, 5
        %v3155 = vsel %vm2874, %v3154, %v3153
        %v3156 = vrot.slane %v2842, 4
        %v3157 = vsel %vm2877, %v3156, %v3155
        %v3158 = vsel %vm633, %v3157, 0
        %3160 = vmatprep.subr.mxu0 0.0
        %3161 = vmatpush1.msra.mxu0 %v3140
        %3162 = vmatprep.subr.mxu0 0.0
        %3163 = vmatpush1.msra.mxu0 %v3141
        %3164 = vmatprep.subr.mxu0 0.0
        %3165 = vmatpush1.msra.mxu0 %v3142
        %3166 = vmatprep.subr.mxu0 0.0
        %3167 = vmatpush1.msra.mxu0 %v3143
        %3168 = vmatprep.subr.mxu0 0.0
        %3169 = vmatpush1.msra.mxu0 0.0
        %3170 = vmatprep.subr.mxu0 0.0
        %3171 = vmatpush1.msra.mxu0 0.0
        %3172 = vmatprep.subr.mxu0 0.0
        %3173 = vmatpush1.msra.mxu0 0.0
        %3174 = vmatprep.subr.mxu0 0.0
        %3175 = vmatpush1.msra.mxu0 0.0
        %3176 = vmatprep.subr.mxu0 0.0
        %3177 = vmatpush1.msra.mxu0 0.0
        %3178 = vmatprep.subr.mxu0 0.0
        %3179 = vmatpush1.msra.mxu0 0.0
        %3180 = vmatprep.subr.mxu0 0.0
        %3181 = vmatpush1.msra.mxu0 0.0
        %3182 = vmatprep.subr.mxu0 0.0
        %3183 = vmatpush1.msra.mxu0 0.0
        %3184 = vmatprep.subr.mxu0 0.0
        %3185 = vmatpush1.msra.mxu0 0.0
        %3186 = vmatprep.subr.mxu0 0.0
        %3187 = vmatpush1.msra.mxu0 0.0
        %3188 = vmatprep.subr.mxu0 0.0
        %3189 = vmatpush1.msra.mxu0 0.0
        %3190 = vmatprep.subr.mxu0 0.0
        %3191 = vmatpush1.msra.mxu0 0.0
        %3192 = vmatprep.subr.mxu0 0.0
        %3193 = vmatpush1.msra.mxu0 0.0
        %3194 = vmatprep.subr.mxu0 0.0
        %3195 = vmatpush1.msra.mxu0 0.0
        %3196 = vmatprep.subr.mxu0 0.0
        %3197 = vmatpush1.msra.mxu0 0.0
        %3198 = vmatprep.subr.mxu0 0.0
        %3199 = vmatpush1.msra.mxu0 0.0
        %3200 = vmatprep.subr.mxu0 0.0
        %3201 = vmatpush1.msra.mxu0 0.0
        %3202 = vmatprep.subr.mxu0 0.0
        %3203 = vmatpush1.msra.mxu0 0.0
        %3204 = vmatprep.subr.mxu0 0.0
        %3205 = vmatpush1.msra.mxu0 0.0
        %3206 = vmatprep.subr.mxu0 0.0
        %3207 = vmatpush1.msra.mxu0 0.0
        %3208 = vmatprep.subr.mxu0 0.0
        %3209 = vmatpush1.msra.mxu0 0.0
        %3210 = vmatprep.subr.mxu0 0.0
        %3211 = vmatpush1.msra.mxu0 0.0
        %3212 = vmatprep.subr.mxu0 0.0
        %3213 = vmatpush1.msra.mxu0 0.0
        %3214 = vmatprep.subr.mxu0 0.0
        %3215 = vmatpush1.msra.mxu0 0.0
        %3216 = vmatprep.subr.mxu0 0.0
        %3217 = vmatpush1.msra.mxu0 0.0
        %3218 = vmatprep.subr.mxu0 0.0
        %3219 = vmatpush1.msra.mxu0 0.0
        %3220 = vmatprep.subr.mxu0 0.0
        %3221 = vmatpush1.msra.mxu0 0.0
        %3222 = vmatprep.subr.mxu0 0.0
        %3223 = vmatpush1.msra.mxu0 0.0
        %3224 = vmatprep.mubr.f32.mxu0 0.0
        %3225 = vmatmul.mubr.f32.gmra.mrb[0].mxu0 %v3158
        %v3226 = vpop.f32.mrb[0].mxu0
        %v3227 = vadd.f32 0.0, %v3226
        %v3228 = vpop.f32.mrb[0].mxu0
        %3229 = vdwg.mxu0
        %v3230 = vadd.f32 %v3139, %v3227
        %v3231 = vmax.f32 %v3230, 0.0
        %v3232 = vld [vmem:[%s8] sm:$0xff]
        %v3233 = vld [vmem:[%s8 + $0x8] sm:$0xff]
        %v3234 = vld [vmem:[%s8 + $0x10] sm:$0xff]
        %v3235 = vld [vmem:[%s8 + $0x18] sm:$0xff]
        %v3236 = vld [vmem:[%s9] sm:$0x1]
        %v3238 = vlaneseq
        %v3239 = vshrl.u32 %v3238, 7
        %v3240 = vsub.s32 0, %v3239
        %v3241 = vrot.slane %v3236, %v3240
        %v3244 = vsel %vm633, %v3231, 0
        %3246 = vmatprep.subr.mxu0 0.0
        %3247 = vmatpush1.msra.mxu0 %v3232
        %3248 = vmatprep.subr.mxu0 0.0
        %3249 = vmatpush1.msra.mxu0 %v3233
        %3250 = vmatprep.subr.mxu0 0.0
        %3251 = vmatpush1.msra.mxu0 %v3234
        %3252 = vmatprep.subr.mxu0 0.0
        %3253 = vmatpush1.msra.mxu0 %v3235
        %3254 = vmatprep.subr.mxu0 0.0
        %3255 = vmatpush1.msra.mxu0 0.0
        %3256 = vmatprep.subr.mxu0 0.0
        %3257 = vmatpush1.msra.mxu0 0.0
        %3258 = vmatprep.subr.mxu0 0.0
        %3259 = vmatpush1.msra.mxu0 0.0
        %3260 = vmatprep.subr.mxu0 0.0
        %3261 = vmatpush1.msra.mxu0 0.0
        %3262 = vmatprep.subr.mxu0 0.0
        %3263 = vmatpush1.msra.mxu0 0.0
        %3264 = vmatprep.subr.mxu0 0.0
        %3265 = vmatpush1.msra.mxu0 0.0
        %3266 = vmatprep.subr.mxu0 0.0
        %3267 = vmatpush1.msra.mxu0 0.0
        %3268 = vmatprep.subr.mxu0 0.0
        %3269 = vmatpush1.msra.mxu0 0.0
        %3270 = vmatprep.subr.mxu0 0.0
        %3271 = vmatpush1.msra.mxu0 0.0
        %3272 = vmatprep.subr.mxu0 0.0
        %3273 = vmatpush1.msra.mxu0 0.0
        %3274 = vmatprep.subr.mxu0 0.0
        %3275 = vmatpush1.msra.mxu0 0.0
        %3276 = vmatprep.subr.mxu0 0.0
        %3277 = vmatpush1.msra.mxu0 0.0
        %3278 = vmatprep.subr.mxu0 0.0
        %3279 = vmatpush1.msra.mxu0 0.0
        %3280 = vmatprep.subr.mxu0 0.0
        %3281 = vmatpush1.msra.mxu0 0.0
        %3282 = vmatprep.subr.mxu0 0.0
        %3283 = vmatpush1.msra.mxu0 0.0
        %3284 = vmatprep.subr.mxu0 0.0
        %3285 = vmatpush1.msra.mxu0 0.0
        %3286 = vmatprep.subr.mxu0 0.0
        %3287 = vmatpush1.msra.mxu0 0.0
        %3288 = vmatprep.subr.mxu0 0.0
        %3289 = vmatpush1.msra.mxu0 0.0
        %3290 = vmatprep.subr.mxu0 0.0
        %3291 = vmatpush1.msra.mxu0 0.0
        %3292 = vmatprep.subr.mxu0 0.0
        %3293 = vmatpush1.msra.mxu0 0.0
        %3294 = vmatprep.subr.mxu0 0.0
        %3295 = vmatpush1.msra.mxu0 0.0
        %3296 = vmatprep.subr.mxu0 0.0
        %3297 = vmatpush1.msra.mxu0 0.0
        %3298 = vmatprep.subr.mxu0 0.0
        %3299 = vmatpush1.msra.mxu0 0.0
        %3300 = vmatprep.subr.mxu0 0.0
        %3301 = vmatpush1.msra.mxu0 0.0
        %3302 = vmatprep.subr.mxu0 0.0
        %3303 = vmatpush1.msra.mxu0 0.0
        %3304 = vmatprep.subr.mxu0 0.0
        %3305 = vmatpush1.msra.mxu0 0.0
        %3306 = vmatprep.subr.mxu0 0.0
        %3307 = vmatpush1.msra.mxu0 0.0
        %3308 = vmatprep.subr.mxu0 0.0
        %3309 = vmatpush1.msra.mxu0 0.0
        %3310 = vmatprep.mubr.f32.mxu0 0.0
        %3311 = vmatmul.mubr.f32.gmra.mrb[0].mxu0 %v3244
        %v3312 = vpop.f32.mrb[0].mxu0
        %v3313 = vadd.f32 %v3241, %v3312
        %v3314 = vpop.f32.mrb[0].mxu0
        %3315 = vdwg.mxu0
        %v3316 = vxor.u32 %v3313, 2147483648
        %v3317 = vmul.f32 %v3316, 1.442695
        %v3318 = vpow.pop %v3317
        %v3319 = vadd.f32 %v3318, 1.0
        %v3320 = vrcp.pop %v3319
        %v3321 = vmul.f32 1.0, %v3320
        %vm3322 = vcmask 72704
        %3323 = vst.msk [vmem:[%s371] sm:$0xff] %vm3322, %v3321
        %s3324 = sand.u32 %s252, 1
        %s3325 = scalar_lea.sflag [#allocation3], %s3324
        %s3326 = sand.u32 %s252, 1
        %s3327 = smul.addr %s3326, 8
        %s3328 = scalar_lea.vmem [#allocation2], %s3327
        // Predicated region
        $region61: #{dm3loc_forward.1} parent=59 // pred_check
          %p3329 = pneg %p262
        $region62: #{dm3loc_forward.1} parent=59 // pred_check_branch
          %3331 = sbr.rel (%p3329) target = $region64
        $region63: #{dm3loc_forward.1} parent=59 // pred_region
          %s3333 = ssub.s32 128, 128
          %3334 = vsyncadd %s3325, %s3333
          %s3335 = smul.addr %s24, 128
          %s3336 = scalar_lea.hbm %s10, %s3335
          %s3338 = sshll.u32 %s3328, 4
          %s3339 = int_to_ptr.vmem [resolvable:$true] %s3338
          %3341 = dma.vmem_to_hbm [thread:$0]  %s3339, 128, %s3336, %s3325
        $region64: #{dm3loc_forward.1} parent=59 // pred_fallthru
          _
      $region60: #{dm3loc_forward.1} parent=5 // pred_fallthru
        _
      %p3342 = scmp.le.s32.totalorder 2, %s19
      // Predicated region
      $region65: #{dm3loc_forward.1} parent=5 // pred_check
        %p3343 = pneg %p3342
      $region66: #{dm3loc_forward.1} parent=5 // pred_check_branch
        %3345 = sbr.rel (%p3343) target = $region68
      $region67: #{dm3loc_forward.1} parent=5 // pred_region
        %s3346 = ssub.s32 %s19, 2
        // Predicated region
        $region69: #{dm3loc_forward.1} parent=67 // pred_check
          %p3347 = pneg %p268
        $region70: #{dm3loc_forward.1} parent=67 // pred_check_branch
          %3349 = sbr.rel (%p3347) target = $region72
        $region71: #{dm3loc_forward.1} parent=67 // pred_region
          %s3350 = sand.u32 %s253, 1
          %s3351 = scalar_lea.sflag [#allocation3], %s3350
          %s3352 = sand.u32 %s253, 1
          %s3353 = smul.addr %s3352, 8
          %s3354 = scalar_lea.vmem [#allocation2], %s3353
          %3355 = dma.done %s3351, 128
        $region72: #{dm3loc_forward.1} parent=67 // pred_fallthru
          _
      $region68: #{dm3loc_forward.1} parent=5 // pred_fallthru
        _
    $region6: #{dm3loc_forward.1} parent=1 // loop_footer
      %s23 = sadd.s32 1, %s19
    $region7: #{dm3loc_forward.1} parent=1 // loop_footer_branch
      %18 = sbr.rel target = $region3
    $region8: #{dm3loc_forward.1} parent=1 // loop_exit
      _
    %3356 = vsyncpa [#allocation3], 1
    %s3357 = scalar_lea.sflag [#allocation3], 1
    %3358 = vsyncpa %s3357, 1

</llo_original>
